<compile_context>
chip_gen: v7x
topology: tpu7x:2x2x1
jax: 0.10.0
libtpu: 0.0.40
codegen_flags: <defaults>
</compile_context>

<pallas_src>
import functools

import jax
import jax.numpy as jnp
from jax import lax
from jax.experimental import pallas as pl
from jax.experimental.pallas import tpu as pltpu

IN_DIM = 32
HID = 51
HPAD = 128          # per-gate lane padding -> gate slices are vreg(lane)-aligned
GATES = 3 * HPAD    # fused r|z|n along lanes
OUT_PAD = 128       # lane-dense output slab; column 0 carries the real linear output


def _recur_cell(gi, h, whh_bf16, bhn_b):
    """One GRU step given a precomputed input-side projection gi (biases folded).

    Serial-path matmul runs with bf16 operands / f32 accumulation; all
    elementwise gate math is f32.  PyTorch nn.GRUCell semantics (r, z, n).
    """
    gh = jnp.dot(h.astype(jnp.bfloat16), whh_bf16,
                 preferred_element_type=jnp.float32)            # (B, 3*HPAD)
    r = jax.nn.sigmoid(gi[:, 0:HPAD] + gh[:, 0:HPAD])
    z = jax.nn.sigmoid(gi[:, HPAD:2 * HPAD] + gh[:, HPAD:2 * HPAD])
    n = jnp.tanh(gi[:, 2 * HPAD:GATES] + r * (gh[:, 2 * HPAD:GATES] + bhn_b))
    return (1.0 - z) * n + z * h


def gru_model_kernel(T, B,
                     x_ref,
                     wih1_ref, whh1_ref, bi1_ref, bhn1_ref,
                     wih2_ref, whh2_ref, bi2_ref, bhn2_ref,
                     wlin_ref, blin_ref,
                     o_ref,
                     gi1_ref, h1_all_ref, gi2_ref, h2_all_ref):
    f32 = jnp.float32

    # Batched layer-1 input projection (off the serial chain), biases folded in.
    gi1_ref[...] = (jnp.dot(x_ref[...], wih1_ref[...], preferred_element_type=f32)
                    + bi1_ref[...])

    # Hoist weights & pre-broadcast the per-step hidden-side n-gate bias ONCE
    # (JAX does not CSE broadcast_in_dim across unrolled loop steps).
    whh1 = whh1_ref[...]                                     # (HPAD, 3*HPAD) bf16
    whh2 = whh2_ref[...]                                     # (HPAD, 3*HPAD) bf16
    bhn1 = jnp.broadcast_to(bhn1_ref[...], (B, HPAD))        # (B, HPAD) f32
    bhn2 = jnp.broadcast_to(bhn2_ref[...], (B, HPAD))

    h0 = jnp.zeros((B, HPAD), f32)

    # Pass 1: layer-1 recurrence — exactly one serial MXU op per step.
    def step1(t, h1):
        row = pl.multiple_of(t * B, B)
        gi = gi1_ref[pl.ds(row, B), :]
        h1 = _recur_cell(gi, h1, whh1, bhn1)
        h1_all_ref[pl.ds(row, B), :] = h1
        return h1

    # T=8 -> full unroll; switch to unroll=8 (partial) if T grows to bound
    # instruction count / vreg live ranges.
    lax.fori_loop(0, T, step1, h0, unroll=True)

    # Batched layer-2 input projection (hoists h1 @ Wih2 off the serial chain).
    gi2_ref[...] = (jnp.dot(h1_all_ref[...], wih2_ref[...], preferred_element_type=f32)
                    + bi2_ref[...])

    # Pass 2: layer-2 recurrence — one serial MXU op per step.
    def step2(t, h2):
        row = pl.multiple_of(t * B, B)
        gi = gi2_ref[pl.ds(row, B), :]
        h2 = _recur_cell(gi, h2, whh2, bhn2)
        h2_all_ref[pl.ds(row, B), :] = h2
        return h2

    lax.fori_loop(0, T, step2, h0, unroll=True)

    # One batched linear for all time steps, lane-dense (no masked partial stores).
    o_ref[...] = (jnp.dot(h2_all_ref[...], wlin_ref[...], preferred_element_type=f32)
                  + blin_ref[...])


@jax.jit
def gru_model_forward(x, packed_params):
    """x: (T, B, 32) float32 -> (B, T) float32."""
    T, B, _ = x.shape
    x_flat = x.reshape(T * B, IN_DIM)
    vmem = pl.BlockSpec(memory_space=pltpu.MemorySpace.VMEM)
    out = pl.pallas_call(
        functools.partial(gru_model_kernel, T, B),
        out_shape=jax.ShapeDtypeStruct((T * B, OUT_PAD), jnp.float32),
        in_specs=[vmem] * 11,
        out_specs=vmem,
        scratch_shapes=[
            pltpu.VMEM((T * B, GATES), jnp.float32),   # gi1_all  (~96 KiB)
            pltpu.VMEM((T * B, HPAD), jnp.float32),    # h1_all   (~32 KiB)
            pltpu.VMEM((T * B, GATES), jnp.float32),   # gi2_all  (~96 KiB)
            pltpu.VMEM((T * B, HPAD), jnp.float32),    # h2_all   (~32 KiB)
        ],
    )(x_flat, *packed_params)
    # Row t*B + b, column 0 holds linear(h2_t)[b]; torch output is (B, T).
    return out[:, 0].reshape(T, B).T


# ---------------------------------------------------------------------------
# Parameter handling
# ---------------------------------------------------------------------------

def init_params(key):
    """Deterministic init mimicking PyTorch defaults (uniform(-1/sqrt(H), 1/sqrt(H))).

    Raw layout (used by the pure-JAX reference): gate-stacked, transposed
    (in_features, out_features) weights; gate order r, z, n.
    """
    bound = 1.0 / jnp.sqrt(jnp.float32(HID))
    ks = jax.random.split(key, 10)
    u = lambda k, shape: jax.random.uniform(k, shape, jnp.float32, -bound, bound)
    wih1 = u(ks[0], (3, IN_DIM, HID))
    whh1 = u(ks[1], (3, HID, HID))
    bih1 = u(ks[2], (3, 1, HID))
    bhh1 = u(ks[3], (3, 1, HID))
    wih2 = u(ks[4], (3, HID, HID))
    whh2 = u(ks[5], (3, HID, HID))
    bih2 = u(ks[6], (3, 1, HID))
    bhh2 = u(ks[7], (3, 1, HID))
    wlin = u(ks[8], (HID, 1))
    blin = u(ks[9], (1, 1))
    return (wih1, whh1, bih1, bhh1, wih2, whh2, bih2, bhh2, wlin, blin)


def pack_params(params):
    """Convert raw params to the fused, lane-padded layout the kernel expects."""
    wih1, whh1, bih1, bhh1, wih2, whh2, bih2, bhh2, wlin, blin = params

    def pad_cols(w):       # (3, in, HID) -> (3, in, HPAD)
        return jnp.zeros((3, w.shape[1], HPAD), jnp.float32).at[:, :, :HID].set(w)

    def pad_rows_cols(w):  # (3, HID, HID) -> (3, HPAD, HPAD)
        return jnp.zeros((3, HPAD, HPAD), jnp.float32).at[:, :HID, :HID].set(w)

    def fuse(w3):          # (3, in, HPAD) -> (in, 3*HPAD)  gates r|z|n along lanes
        return jnp.concatenate([w3[0], w3[1], w3[2]], axis=-1)

    def pad_lane(b):       # (1, HID) -> (1, HPAD)
        return jnp.zeros((1, HPAD), jnp.float32).at[:, :HID].set(b)

    def fuse_input_bias(bih, bhh):
        # r and z: fold both bias sides; n: input-side only (bhh_n sits inside r*(...)).
        return jnp.concatenate([pad_lane(bih[0] + bhh[0]),
                                pad_lane(bih[1] + bhh[1]),
                                pad_lane(bih[2])], axis=-1)       # (1, 3*HPAD)

    wih1_p = fuse(pad_cols(wih1))                                 # (IN_DIM, 3*HPAD) f32 (batched)
    wih2_p = fuse(pad_rows_cols(wih2))                            # (HPAD, 3*HPAD)   f32 (batched)
    whh1_p = fuse(pad_rows_cols(whh1)).astype(jnp.bfloat16)       # serial-path -> bf16 MXU operands
    whh2_p = fuse(pad_rows_cols(whh2)).astype(jnp.bfloat16)
    bi1 = fuse_input_bias(bih1, bhh1)
    bi2 = fuse_input_bias(bih2, bhh2)
    bhn1 = pad_lane(bhh1[2])                                      # (1, HPAD) hidden-side n bias
    bhn2 = pad_lane(bhh2[2])
    wlin_p = jnp.zeros((HPAD, OUT_PAD), jnp.float32).at[:HID, 0:1].set(wlin)
    blin_p = jnp.zeros((1, OUT_PAD), jnp.float32).at[:, 0:1].set(blin)
    return (wih1_p, whh1_p, bi1, bhn1, wih2_p, whh2_p, bi2, bhn2, wlin_p, blin_p)


def reference_forward(x, params, bf16_hidden=False):
    """Pure-JAX reference of the PyTorch forward pass (future=0), raw params.

    bf16_hidden=True applies the same bf16 quantization to the hidden-side
    (serial) matmuls as the kernel, for a tight numerical comparison.
    """
    wih1, whh1, bih1, bhh1, wih2, whh2, bih2, bhh2, wlin, blin = params
    T, B, _ = x.shape

    def hdot(h, w):
        if bf16_hidden:
            return jnp.dot(h.astype(jnp.bfloat16), w.astype(jnp.bfloat16),
                           preferred_element_type=jnp.float32)
        return h @ w

    def cell(xt, h, wih, whh, bih, bhh):
        r = jax.nn.sigmoid(xt @ wih[0] + bih[0] + hdot(h, whh[0]) + bhh[0])
        z = jax.nn.sigmoid(xt @ wih[1] + bih[1] + hdot(h, whh[1]) + bhh[1])
        n = jnp.tanh(xt @ wih[2] + bih[2] + r * (hdot(h, whh[2]) + bhh[2]))
        return (1.0 - z) * n + z * h

    h1 = jnp.zeros((B, HID), jnp.float32)
    h2 = jnp.zeros((B, HID), jnp.float32)
    outs = []
    for t in range(T):
        h1 = cell(x[t], h1, wih1, whh1, bih1, bhh1)
        h2 = cell(h1, h2, wih2, whh2, bih2, bhh2)
        outs.append(h2 @ wlin + blin)          # (B, 1)
    return jnp.stack(outs, 1)[:, :, 0]         # (B, T)


if __name__ == "__main__":
    key = jax.random.PRNGKey(0)
    k_x, k_p = jax.random.split(key)

    T, B = 8, 8
    x = jax.random.normal(k_x, (T, B, IN_DIM), jnp.float32)
    params = init_params(k_p)
    packed = pack_params(params)

    y = gru_model_forward(x, packed)
    y = jax.block_until_ready(y)
    assert y.shape == (B, T), y.shape

    # Tight check: reference with the same bf16 quantization on the serial
    # hidden-side matmuls (validates the kernel's gate/bias/packing math).
    y_ref_q = reference_forward(x, params, bf16_hidden=True)
    assert jnp.allclose(y, y_ref_q, rtol=1e-2, atol=1e-2), (
        float(jnp.max(jnp.abs(y - y_ref_q)))
    )

    # Loose sanity check against the full-f32 reference (bf16 only on the
    # serial MXU operands; all elementwise math is f32).
    y_ref = reference_forward(x, params, bf16_hidden=False)
    assert jnp.allclose(y, y_ref, rtol=5e-2, atol=5e-2), (
        float(jnp.max(jnp.abs(y - y_ref)))
    )

    print("KERNEL_OK")
</pallas_src>

<mosaic_0001>
module attributes {stable_mosaic.version = 11 : i64} {
  func.func @gru_model_kernel(%arg0: memref<64x32xf32, #tpu.memory_space<vmem>>, %arg1: memref<32x384xf32, #tpu.memory_space<vmem>>, %arg2: memref<128x384xbf16, #tpu.memory_space<vmem>>, %arg3: memref<1x384xf32, #tpu.memory_space<vmem>>, %arg4: memref<1x128xf32, #tpu.memory_space<vmem>>, %arg5: memref<128x384xf32, #tpu.memory_space<vmem>>, %arg6: memref<128x384xbf16, #tpu.memory_space<vmem>>, %arg7: memref<1x384xf32, #tpu.memory_space<vmem>>, %arg8: memref<1x128xf32, #tpu.memory_space<vmem>>, %arg9: memref<128x128xf32, #tpu.memory_space<vmem>>, %arg10: memref<1x128xf32, #tpu.memory_space<vmem>>, %arg11: memref<64x128xf32, #tpu.memory_space<vmem>>, %arg12: memref<64x384xf32, #tpu.memory_space<vmem>>, %arg13: memref<64x128xf32, #tpu.memory_space<vmem>>, %arg14: memref<64x384xf32, #tpu.memory_space<vmem>>, %arg15: memref<64x128xf32, #tpu.memory_space<vmem>>) attributes {dimension_semantics = [], scalar_prefetch = 0 : i64, scratch_operands = 4 : i64, tpu.core_type = #tpu.core_type<tc>} {
    %c0 = arith.constant 0 : index
    %c0_0 = arith.constant 0 : index
    %0 = vector.load %arg0[%c0, %c0_0] : memref<64x32xf32, #tpu.memory_space<vmem>>, vector<64x32xf32>
    %c0_1 = arith.constant 0 : index
    %c0_2 = arith.constant 0 : index
    %1 = vector.load %arg1[%c0_1, %c0_2] : memref<32x384xf32, #tpu.memory_space<vmem>>, vector<32x384xf32>
    %cst = arith.constant dense<0.000000e+00> : vector<64x384xf32>
    %2 = tpu.matmul %0, %1, %cst {dimension_numbers = #tpu.dot_dimension_numbers<[1], [0], [0], [1], [0, 0, 1, 1], [], []>} : vector<64x32xf32>, vector<32x384xf32>, vector<64x384xf32> -> vector<64x384xf32>
    %c0_3 = arith.constant 0 : index
    %c0_4 = arith.constant 0 : index
    %3 = vector.load %arg3[%c0_3, %c0_4] : memref<1x384xf32, #tpu.memory_space<vmem>>, vector<1x384xf32>
    %4 = vector.broadcast %3 : vector<1x384xf32> to vector<64x384xf32>
    %5 = arith.addf %2, %4 : vector<64x384xf32>
    %c0_5 = arith.constant 0 : index
    %c0_6 = arith.constant 0 : index
    %6 = vector.load %arg12[%c0_5, %c0_6] : memref<64x384xf32, #tpu.memory_space<vmem>>, vector<64x384xf32>
    tpu.vector_store %arg12[%c0_5, %c0_6], %5 {strides = array<i32>} : memref<64x384xf32, #tpu.memory_space<vmem>>, vector<64x384xf32>,
    %c0_7 = arith.constant 0 : index
    %c0_8 = arith.constant 0 : index
    %7 = vector.load %arg2[%c0_7, %c0_8] : memref<128x384xbf16, #tpu.memory_space<vmem>>, vector<128x384xbf16>
    %c0_9 = arith.constant 0 : index
    %c0_10 = arith.constant 0 : index
    %8 = vector.load %arg6[%c0_9, %c0_10] : memref<128x384xbf16, #tpu.memory_space<vmem>>, vector<128x384xbf16>
    %c0_11 = arith.constant 0 : index
    %c0_12 = arith.constant 0 : index
    %9 = vector.load %arg4[%c0_11, %c0_12] : memref<1x128xf32, #tpu.memory_space<vmem>>, vector<1x128xf32>
    %10 = vector.shape_cast %9 : vector<1x128xf32> to vector<1x128xf32>
    %11 = vector.broadcast %10 : vector<1x128xf32> to vector<8x128xf32>
    %c0_13 = arith.constant 0 : index
    %c0_14 = arith.constant 0 : index
    %12 = vector.load %arg8[%c0_13, %c0_14] : memref<1x128xf32, #tpu.memory_space<vmem>>, vector<1x128xf32>
    %13 = vector.shape_cast %12 : vector<1x128xf32> to vector<1x128xf32>
    %14 = vector.broadcast %13 : vector<1x128xf32> to vector<8x128xf32>
    %cst_15 = arith.constant 0.000000e+00 : f32
    %15 = vector.broadcast %cst_15 : f32 to vector<8x128xf32>
    %c0_i32 = arith.constant 0 : i32
    %c8_i32 = arith.constant 8 : i32
    %16 = arith.muli %c0_i32, %c8_i32 : i32
    %17 = tpu.assume_multiple %16, 8 : i32
    %18 = arith.index_cast %17 : i32 to index
    %c0_16 = arith.constant 0 : index
    %19 = vector.load %arg12[%18, %c0_16] : memref<64x384xf32, #tpu.memory_space<vmem>>, vector<8x384xf32>
    %20 = arith.truncf %15 : vector<8x128xf32> to vector<8x128xbf16>
    %cst_17 = arith.constant dense<0.000000e+00> : vector<8x384xf32>
    %21 = tpu.matmul %20, %7, %cst_17 {dimension_numbers = #tpu.dot_dimension_numbers<[1], [0], [0], [1], [0, 0, 1, 1], [], []>} : vector<8x128xbf16>, vector<128x384xbf16>, vector<8x384xf32> -> vector<8x384xf32>
    %22 = vector.extract_strided_slice %19 {offsets = [0, 0], sizes = [8, 128], strides = [1, 1]} : vector<8x384xf32> to vector<8x128xf32>
    %23 = vector.extract_strided_slice %21 {offsets = [0, 0], sizes = [8, 128], strides = [1, 1]} : vector<8x384xf32> to vector<8x128xf32>
    %24 = arith.addf %22, %23 : vector<8x128xf32>
    %25 = arith.negf %24 : vector<8x128xf32>
    %26 = math.exp %25 : vector<8x128xf32>
    %cst_18 = arith.constant 1.000000e+00 : f32
    %27 = vector.broadcast %cst_18 : f32 to vector<8x128xf32>
    %28 = arith.addf %27, %26 : vector<8x128xf32>
    %29 = arith.divf %27, %28 : vector<8x128xf32>
    %30 = vector.extract_strided_slice %19 {offsets = [0, 128], sizes = [8, 128], strides = [1, 1]} : vector<8x384xf32> to vector<8x128xf32>
    %31 = vector.extract_strided_slice %21 {offsets = [0, 128], sizes = [8, 128], strides = [1, 1]} : vector<8x384xf32> to vector<8x128xf32>
    %32 = arith.addf %30, %31 : vector<8x128xf32>
    %33 = arith.negf %32 : vector<8x128xf32>
    %34 = math.exp %33 : vector<8x128xf32>
    %cst_19 = arith.constant 1.000000e+00 : f32
    %35 = vector.broadcast %cst_19 : f32 to vector<8x128xf32>
    %36 = arith.addf %35, %34 : vector<8x128xf32>
    %37 = arith.divf %35, %36 : vector<8x128xf32>
    %38 = vector.extract_strided_slice %19 {offsets = [0, 256], sizes = [8, 128], strides = [1, 1]} : vector<8x384xf32> to vector<8x128xf32>
    %39 = vector.extract_strided_slice %21 {offsets = [0, 256], sizes = [8, 128], strides = [1, 1]} : vector<8x384xf32> to vector<8x128xf32>
    %40 = arith.addf %39, %11 : vector<8x128xf32>
    %41 = arith.mulf %29, %40 : vector<8x128xf32>
    %42 = arith.addf %38, %41 : vector<8x128xf32>
    %43 = math.tanh %42 : vector<8x128xf32>
    %cst_20 = arith.constant 1.000000e+00 : f32
    %44 = vector.broadcast %cst_20 : f32 to vector<8x128xf32>
    %45 = arith.subf %44, %37 : vector<8x128xf32>
    %46 = arith.mulf %45, %43 : vector<8x128xf32>
    %47 = arith.mulf %37, %15 : vector<8x128xf32>
    %48 = arith.addf %46, %47 : vector<8x128xf32>
    %49 = arith.index_cast %17 : i32 to index
    %c0_21 = arith.constant 0 : index
    %50 = vector.load %arg13[%49, %c0_21] : memref<64x128xf32, #tpu.memory_space<vmem>>, vector<8x128xf32>
    tpu.vector_store %arg13[%49, %c0_21], %48 {strides = array<i32>} : memref<64x128xf32, #tpu.memory_space<vmem>>, vector<8x128xf32>,
    %c1_i32 = arith.constant 1 : i32
    %c8_i32_22 = arith.constant 8 : i32
    %51 = arith.muli %c1_i32, %c8_i32_22 : i32
    %52 = tpu.assume_multiple %51, 8 : i32
    %53 = arith.index_cast %52 : i32 to index
    %c0_23 = arith.constant 0 : index
    %54 = vector.load %arg12[%53, %c0_23] : memref<64x384xf32, #tpu.memory_space<vmem>>, vector<8x384xf32>
    %55 = arith.truncf %48 : vector<8x128xf32> to vector<8x128xbf16>
    %cst_24 = arith.constant dense<0.000000e+00> : vector<8x384xf32>
    %56 = tpu.matmul %55, %7, %cst_24 {dimension_numbers = #tpu.dot_dimension_numbers<[1], [0], [0], [1], [0, 0, 1, 1], [], []>} : vector<8x128xbf16>, vector<128x384xbf16>, vector<8x384xf32> -> vector<8x384xf32>
    %57 = vector.extract_strided_slice %54 {offsets = [0, 0], sizes = [8, 128], strides = [1, 1]} : vector<8x384xf32> to vector<8x128xf32>
    %58 = vector.extract_strided_slice %56 {offsets = [0, 0], sizes = [8, 128], strides = [1, 1]} : vector<8x384xf32> to vector<8x128xf32>
    %59 = arith.addf %57, %58 : vector<8x128xf32>
    %60 = arith.negf %59 : vector<8x128xf32>
    %61 = math.exp %60 : vector<8x128xf32>
    %cst_25 = arith.constant 1.000000e+00 : f32
    %62 = vector.broadcast %cst_25 : f32 to vector<8x128xf32>
    %63 = arith.addf %62, %61 : vector<8x128xf32>
    %64 = arith.divf %62, %63 : vector<8x128xf32>
    %65 = vector.extract_strided_slice %54 {offsets = [0, 128], sizes = [8, 128], strides = [1, 1]} : vector<8x384xf32> to vector<8x128xf32>
    %66 = vector.extract_strided_slice %56 {offsets = [0, 128], sizes = [8, 128], strides = [1, 1]} : vector<8x384xf32> to vector<8x128xf32>
    %67 = arith.addf %65, %66 : vector<8x128xf32>
    %68 = arith.negf %67 : vector<8x128xf32>
    %69 = math.exp %68 : vector<8x128xf32>
    %cst_26 = arith.constant 1.000000e+00 : f32
    %70 = vector.broadcast %cst_26 : f32 to vector<8x128xf32>
    %71 = arith.addf %70, %69 : vector<8x128xf32>
    %72 = arith.divf %70, %71 : vector<8x128xf32>
    %73 = vector.extract_strided_slice %54 {offsets = [0, 256], sizes = [8, 128], strides = [1, 1]} : vector<8x384xf32> to vector<8x128xf32>
    %74 = vector.extract_strided_slice %56 {offsets = [0, 256], sizes = [8, 128], strides = [1, 1]} : vector<8x384xf32> to vector<8x128xf32>
    %75 = arith.addf %74, %11 : vector<8x128xf32>
    %76 = arith.mulf %64, %75 : vector<8x128xf32>
    %77 = arith.addf %73, %76 : vector<8x128xf32>
    %78 = math.tanh %77 : vector<8x128xf32>
    %cst_27 = arith.constant 1.000000e+00 : f32
    %79 = vector.broadcast %cst_27 : f32 to vector<8x128xf32>
    %80 = arith.subf %79, %72 : vector<8x128xf32>
    %81 = arith.mulf %80, %78 : vector<8x128xf32>
    %82 = arith.mulf %72, %48 : vector<8x128xf32>
    %83 = arith.addf %81, %82 : vector<8x128xf32>
    %84 = arith.index_cast %52 : i32 to index
    %c0_28 = arith.constant 0 : index
    %85 = vector.load %arg13[%84, %c0_28] : memref<64x128xf32, #tpu.memory_space<vmem>>, vector<8x128xf32>
    tpu.vector_store %arg13[%84, %c0_28], %83 {strides = array<i32>} : memref<64x128xf32, #tpu.memory_space<vmem>>, vector<8x128xf32>,
    %c2_i32 = arith.constant 2 : i32
    %c8_i32_29 = arith.constant 8 : i32
    %86 = arith.muli %c2_i32, %c8_i32_29 : i32
    %87 = tpu.assume_multiple %86, 8 : i32
    %88 = arith.index_cast %87 : i32 to index
    %c0_30 = arith.constant 0 : index
    %89 = vector.load %arg12[%88, %c0_30] : memref<64x384xf32, #tpu.memory_space<vmem>>, vector<8x384xf32>
    %90 = arith.truncf %83 : vector<8x128xf32> to vector<8x128xbf16>
    %cst_31 = arith.constant dense<0.000000e+00> : vector<8x384xf32>
    %91 = tpu.matmul %90, %7, %cst_31 {dimension_numbers = #tpu.dot_dimension_numbers<[1], [0], [0], [1], [0, 0, 1, 1], [], []>} : vector<8x128xbf16>, vector<128x384xbf16>, vector<8x384xf32> -> vector<8x384xf32>
    %92 = vector.extract_strided_slice %89 {offsets = [0, 0], sizes = [8, 128], strides = [1, 1]} : vector<8x384xf32> to vector<8x128xf32>
    %93 = vector.extract_strided_slice %91 {offsets = [0, 0], sizes = [8, 128], strides = [1, 1]} : vector<8x384xf32> to vector<8x128xf32>
    %94 = arith.addf %92, %93 : vector<8x128xf32>
    %95 = arith.negf %94 : vector<8x128xf32>
    %96 = math.exp %95 : vector<8x128xf32>
    %cst_32 = arith.constant 1.000000e+00 : f32
    %97 = vector.broadcast %cst_32 : f32 to vector<8x128xf32>
    %98 = arith.addf %97, %96 : vector<8x128xf32>
    %99 = arith.divf %97, %98 : vector<8x128xf32>
    %100 = vector.extract_strided_slice %89 {offsets = [0, 128], sizes = [8, 128], strides = [1, 1]} : vector<8x384xf32> to vector<8x128xf32>
    %101 = vector.extract_strided_slice %91 {offsets = [0, 128], sizes = [8, 128], strides = [1, 1]} : vector<8x384xf32> to vector<8x128xf32>
    %102 = arith.addf %100, %101 : vector<8x128xf32>
    %103 = arith.negf %102 : vector<8x128xf32>
    %104 = math.exp %103 : vector<8x128xf32>
    %cst_33 = arith.constant 1.000000e+00 : f32
    %105 = vector.broadcast %cst_33 : f32 to vector<8x128xf32>
    %106 = arith.addf %105, %104 : vector<8x128xf32>
    %107 = arith.divf %105, %106 : vector<8x128xf32>
    %108 = vector.extract_strided_slice %89 {offsets = [0, 256], sizes = [8, 128], strides = [1, 1]} : vector<8x384xf32> to vector<8x128xf32>
    %109 = vector.extract_strided_slice %91 {offsets = [0, 256], sizes = [8, 128], strides = [1, 1]} : vector<8x384xf32> to vector<8x128xf32>
    %110 = arith.addf %109, %11 : vector<8x128xf32>
    %111 = arith.mulf %99, %110 : vector<8x128xf32>
    %112 = arith.addf %108, %111 : vector<8x128xf32>
    %113 = math.tanh %112 : vector<8x128xf32>
    %cst_34 = arith.constant 1.000000e+00 : f32
    %114 = vector.broadcast %cst_34 : f32 to vector<8x128xf32>
    %115 = arith.subf %114, %107 : vector<8x128xf32>
    %116 = arith.mulf %115, %113 : vector<8x128xf32>
    %117 = arith.mulf %107, %83 : vector<8x128xf32>
    %118 = arith.addf %116, %117 : vector<8x128xf32>
    %119 = arith.index_cast %87 : i32 to index
    %c0_35 = arith.constant 0 : index
    %120 = vector.load %arg13[%119, %c0_35] : memref<64x128xf32, #tpu.memory_space<vmem>>, vector<8x128xf32>
    tpu.vector_store %arg13[%119, %c0_35], %118 {strides = array<i32>} : memref<64x128xf32, #tpu.memory_space<vmem>>, vector<8x128xf32>,
    %c3_i32 = arith.constant 3 : i32
    %c8_i32_36 = arith.constant 8 : i32
    %121 = arith.muli %c3_i32, %c8_i32_36 : i32
    %122 = tpu.assume_multiple %121, 8 : i32
    %123 = arith.index_cast %122 : i32 to index
    %c0_37 = arith.constant 0 : index
    %124 = vector.load %arg12[%123, %c0_37] : memref<64x384xf32, #tpu.memory_space<vmem>>, vector<8x384xf32>
    %125 = arith.truncf %118 : vector<8x128xf32> to vector<8x128xbf16>
    %cst_38 = arith.constant dense<0.000000e+00> : vector<8x384xf32>
    %126 = tpu.matmul %125, %7, %cst_38 {dimension_numbers = #tpu.dot_dimension_numbers<[1], [0], [0], [1], [0, 0, 1, 1], [], []>} : vector<8x128xbf16>, vector<128x384xbf16>, vector<8x384xf32> -> vector<8x384xf32>
    %127 = vector.extract_strided_slice %124 {offsets = [0, 0], sizes = [8, 128], strides = [1, 1]} : vector<8x384xf32> to vector<8x128xf32>
    %128 = vector.extract_strided_slice %126 {offsets = [0, 0], sizes = [8, 128], strides = [1, 1]} : vector<8x384xf32> to vector<8x128xf32>
    %129 = arith.addf %127, %128 : vector<8x128xf32>
    %130 = arith.negf %129 : vector<8x128xf32>
    %131 = math.exp %130 : vector<8x128xf32>
    %cst_39 = arith.constant 1.000000e+00 : f32
    %132 = vector.broadcast %cst_39 : f32 to vector<8x128xf32>
    %133 = arith.addf %132, %131 : vector<8x128xf32>
    %134 = arith.divf %132, %133 : vector<8x128xf32>
    %135 = vector.extract_strided_slice %124 {offsets = [0, 128], sizes = [8, 128], strides = [1, 1]} : vector<8x384xf32> to vector<8x128xf32>
    %136 = vector.extract_strided_slice %126 {offsets = [0, 128], sizes = [8, 128], strides = [1, 1]} : vector<8x384xf32> to vector<8x128xf32>
    %137 = arith.addf %135, %136 : vector<8x128xf32>
    %138 = arith.negf %137 : vector<8x128xf32>
    %139 = math.exp %138 : vector<8x128xf32>
    %cst_40 = arith.constant 1.000000e+00 : f32
    %140 = vector.broadcast %cst_40 : f32 to vector<8x128xf32>
    %141 = arith.addf %140, %139 : vector<8x128xf32>
    %142 = arith.divf %140, %141 : vector<8x128xf32>
    %143 = vector.extract_strided_slice %124 {offsets = [0, 256], sizes = [8, 128], strides = [1, 1]} : vector<8x384xf32> to vector<8x128xf32>
    %144 = vector.extract_strided_slice %126 {offsets = [0, 256], sizes = [8, 128], strides = [1, 1]} : vector<8x384xf32> to vector<8x128xf32>
    %145 = arith.addf %144, %11 : vector<8x128xf32>
    %146 = arith.mulf %134, %145 : vector<8x128xf32>
    %147 = arith.addf %143, %146 : vector<8x128xf32>
    %148 = math.tanh %147 : vector<8x128xf32>
    %cst_41 = arith.constant 1.000000e+00 : f32
    %149 = vector.broadcast %cst_41 : f32 to vector<8x128xf32>
    %150 = arith.subf %149, %142 : vector<8x128xf32>
    %151 = arith.mulf %150, %148 : vector<8x128xf32>
    %152 = arith.mulf %142, %118 : vector<8x128xf32>
    %153 = arith.addf %151, %152 : vector<8x128xf32>
    %154 = arith.index_cast %122 : i32 to index
    %c0_42 = arith.constant 0 : index
    %155 = vector.load %arg13[%154, %c0_42] : memref<64x128xf32, #tpu.memory_space<vmem>>, vector<8x128xf32>
    tpu.vector_store %arg13[%154, %c0_42], %153 {strides = array<i32>} : memref<64x128xf32, #tpu.memory_space<vmem>>, vector<8x128xf32>,
    %c4_i32 = arith.constant 4 : i32
    %c8_i32_43 = arith.constant 8 : i32
    %156 = arith.muli %c4_i32, %c8_i32_43 : i32
    %157 = tpu.assume_multiple %156, 8 : i32
    %158 = arith.index_cast %157 : i32 to index
    %c0_44 = arith.constant 0 : index
    %159 = vector.load %arg12[%158, %c0_44] : memref<64x384xf32, #tpu.memory_space<vmem>>, vector<8x384xf32>
    %160 = arith.truncf %153 : vector<8x128xf32> to vector<8x128xbf16>
    %cst_45 = arith.constant dense<0.000000e+00> : vector<8x384xf32>
    %161 = tpu.matmul %160, %7, %cst_45 {dimension_numbers = #tpu.dot_dimension_numbers<[1], [0], [0], [1], [0, 0, 1, 1], [], []>} : vector<8x128xbf16>, vector<128x384xbf16>, vector<8x384xf32> -> vector<8x384xf32>
    %162 = vector.extract_strided_slice %159 {offsets = [0, 0], sizes = [8, 128], strides = [1, 1]} : vector<8x384xf32> to vector<8x128xf32>
    %163 = vector.extract_strided_slice %161 {offsets = [0, 0], sizes = [8, 128], strides = [1, 1]} : vector<8x384xf32> to vector<8x128xf32>
    %164 = arith.addf %162, %163 : vector<8x128xf32>
    %165 = arith.negf %164 : vector<8x128xf32>
    %166 = math.exp %165 : vector<8x128xf32>
    %cst_46 = arith.constant 1.000000e+00 : f32
    %167 = vector.broadcast %cst_46 : f32 to vector<8x128xf32>
    %168 = arith.addf %167, %166 : vector<8x128xf32>
    %169 = arith.divf %167, %168 : vector<8x128xf32>
    %170 = vector.extract_strided_slice %159 {offsets = [0, 128], sizes = [8, 128], strides = [1, 1]} : vector<8x384xf32> to vector<8x128xf32>
    %171 = vector.extract_strided_slice %161 {offsets = [0, 128], sizes = [8, 128], strides = [1, 1]} : vector<8x384xf32> to vector<8x128xf32>
    %172 = arith.addf %170, %171 : vector<8x128xf32>
    %173 = arith.negf %172 : vector<8x128xf32>
    %174 = math.exp %173 : vector<8x128xf32>
    %cst_47 = arith.constant 1.000000e+00 : f32
    %175 = vector.broadcast %cst_47 : f32 to vector<8x128xf32>
    %176 = arith.addf %175, %174 : vector<8x128xf32>
    %177 = arith.divf %175, %176 : vector<8x128xf32>
    %178 = vector.extract_strided_slice %159 {offsets = [0, 256], sizes = [8, 128], strides = [1, 1]} : vector<8x384xf32> to vector<8x128xf32>
    %179 = vector.extract_strided_slice %161 {offsets = [0, 256], sizes = [8, 128], strides = [1, 1]} : vector<8x384xf32> to vector<8x128xf32>
    %180 = arith.addf %179, %11 : vector<8x128xf32>
    %181 = arith.mulf %169, %180 : vector<8x128xf32>
    %182 = arith.addf %178, %181 : vector<8x128xf32>
    %183 = math.tanh %182 : vector<8x128xf32>
    %cst_48 = arith.constant 1.000000e+00 : f32
    %184 = vector.broadcast %cst_48 : f32 to vector<8x128xf32>
    %185 = arith.subf %184, %177 : vector<8x128xf32>
    %186 = arith.mulf %185, %183 : vector<8x128xf32>
    %187 = arith.mulf %177, %153 : vector<8x128xf32>
    %188 = arith.addf %186, %187 : vector<8x128xf32>
    %189 = arith.index_cast %157 : i32 to index
    %c0_49 = arith.constant 0 : index
    %190 = vector.load %arg13[%189, %c0_49] : memref<64x128xf32, #tpu.memory_space<vmem>>, vector<8x128xf32>
    tpu.vector_store %arg13[%189, %c0_49], %188 {strides = array<i32>} : memref<64x128xf32, #tpu.memory_space<vmem>>, vector<8x128xf32>,
    %c5_i32 = arith.constant 5 : i32
    %c8_i32_50 = arith.constant 8 : i32
    %191 = arith.muli %c5_i32, %c8_i32_50 : i32
    %192 = tpu.assume_multiple %191, 8 : i32
    %193 = arith.index_cast %192 : i32 to index
    %c0_51 = arith.constant 0 : index
    %194 = vector.load %arg12[%193, %c0_51] : memref<64x384xf32, #tpu.memory_space<vmem>>, vector<8x384xf32>
    %195 = arith.truncf %188 : vector<8x128xf32> to vector<8x128xbf16>
    %cst_52 = arith.constant dense<0.000000e+00> : vector<8x384xf32>
    %196 = tpu.matmul %195, %7, %cst_52 {dimension_numbers = #tpu.dot_dimension_numbers<[1], [0], [0], [1], [0, 0, 1, 1], [], []>} : vector<8x128xbf16>, vector<128x384xbf16>, vector<8x384xf32> -> vector<8x384xf32>
    %197 = vector.extract_strided_slice %194 {offsets = [0, 0], sizes = [8, 128], strides = [1, 1]} : vector<8x384xf32> to vector<8x128xf32>
    %198 = vector.extract_strided_slice %196 {offsets = [0, 0], sizes = [8, 128], strides = [1, 1]} : vector<8x384xf32> to vector<8x128xf32>
    %199 = arith.addf %197, %198 : vector<8x128xf32>
    %200 = arith.negf %199 : vector<8x128xf32>
    %201 = math.exp %200 : vector<8x128xf32>
    %cst_53 = arith.constant 1.000000e+00 : f32
    %202 = vector.broadcast %cst_53 : f32 to vector<8x128xf32>
    %203 = arith.addf %202, %201 : vector<8x128xf32>
    %204 = arith.divf %202, %203 : vector<8x128xf32>
    %205 = vector.extract_strided_slice %194 {offsets = [0, 128], sizes = [8, 128], strides = [1, 1]} : vector<8x384xf32> to vector<8x128xf32>
    %206 = vector.extract_strided_slice %196 {offsets = [0, 128], sizes = [8, 128], strides = [1, 1]} : vector<8x384xf32> to vector<8x128xf32>
    %207 = arith.addf %205, %206 : vector<8x128xf32>
    %208 = arith.negf %207 : vector<8x128xf32>
    %209 = math.exp %208 : vector<8x128xf32>
    %cst_54 = arith.constant 1.000000e+00 : f32
    %210 = vector.broadcast %cst_54 : f32 to vector<8x128xf32>
    %211 = arith.addf %210, %209 : vector<8x128xf32>
    %212 = arith.divf %210, %211 : vector<8x128xf32>
    %213 = vector.extract_strided_slice %194 {offsets = [0, 256], sizes = [8, 128], strides = [1, 1]} : vector<8x384xf32> to vector<8x128xf32>
    %214 = vector.extract_strided_slice %196 {offsets = [0, 256], sizes = [8, 128], strides = [1, 1]} : vector<8x384xf32> to vector<8x128xf32>
    %215 = arith.addf %214, %11 : vector<8x128xf32>
    %216 = arith.mulf %204, %215 : vector<8x128xf32>
    %217 = arith.addf %213, %216 : vector<8x128xf32>
    %218 = math.tanh %217 : vector<8x128xf32>
    %cst_55 = arith.constant 1.000000e+00 : f32
    %219 = vector.broadcast %cst_55 : f32 to vector<8x128xf32>
    %220 = arith.subf %219, %212 : vector<8x128xf32>
    %221 = arith.mulf %220, %218 : vector<8x128xf32>
    %222 = arith.mulf %212, %188 : vector<8x128xf32>
    %223 = arith.addf %221, %222 : vector<8x128xf32>
    %224 = arith.index_cast %192 : i32 to index
    %c0_56 = arith.constant 0 : index
    %225 = vector.load %arg13[%224, %c0_56] : memref<64x128xf32, #tpu.memory_space<vmem>>, vector<8x128xf32>
    tpu.vector_store %arg13[%224, %c0_56], %223 {strides = array<i32>} : memref<64x128xf32, #tpu.memory_space<vmem>>, vector<8x128xf32>,
    %c6_i32 = arith.constant 6 : i32
    %c8_i32_57 = arith.constant 8 : i32
    %226 = arith.muli %c6_i32, %c8_i32_57 : i32
    %227 = tpu.assume_multiple %226, 8 : i32
    %228 = arith.index_cast %227 : i32 to index
    %c0_58 = arith.constant 0 : index
    %229 = vector.load %arg12[%228, %c0_58] : memref<64x384xf32, #tpu.memory_space<vmem>>, vector<8x384xf32>
    %230 = arith.truncf %223 : vector<8x128xf32> to vector<8x128xbf16>
    %cst_59 = arith.constant dense<0.000000e+00> : vector<8x384xf32>
    %231 = tpu.matmul %230, %7, %cst_59 {dimension_numbers = #tpu.dot_dimension_numbers<[1], [0], [0], [1], [0, 0, 1, 1], [], []>} : vector<8x128xbf16>, vector<128x384xbf16>, vector<8x384xf32> -> vector<8x384xf32>
    %232 = vector.extract_strided_slice %229 {offsets = [0, 0], sizes = [8, 128], strides = [1, 1]} : vector<8x384xf32> to vector<8x128xf32>
    %233 = vector.extract_strided_slice %231 {offsets = [0, 0], sizes = [8, 128], strides = [1, 1]} : vector<8x384xf32> to vector<8x128xf32>
    %234 = arith.addf %232, %233 : vector<8x128xf32>
    %235 = arith.negf %234 : vector<8x128xf32>
    %236 = math.exp %235 : vector<8x128xf32>
    %cst_60 = arith.constant 1.000000e+00 : f32
    %237 = vector.broadcast %cst_60 : f32 to vector<8x128xf32>
    %238 = arith.addf %237, %236 : vector<8x128xf32>
    %239 = arith.divf %237, %238 : vector<8x128xf32>
    %240 = vector.extract_strided_slice %229 {offsets = [0, 128], sizes = [8, 128], strides = [1, 1]} : vector<8x384xf32> to vector<8x128xf32>
    %241 = vector.extract_strided_slice %231 {offsets = [0, 128], sizes = [8, 128], strides = [1, 1]} : vector<8x384xf32> to vector<8x128xf32>
    %242 = arith.addf %240, %241 : vector<8x128xf32>
    %243 = arith.negf %242 : vector<8x128xf32>
    %244 = math.exp %243 : vector<8x128xf32>
    %cst_61 = arith.constant 1.000000e+00 : f32
    %245 = vector.broadcast %cst_61 : f32 to vector<8x128xf32>
    %246 = arith.addf %245, %244 : vector<8x128xf32>
    %247 = arith.divf %245, %246 : vector<8x128xf32>
    %248 = vector.extract_strided_slice %229 {offsets = [0, 256], sizes = [8, 128], strides = [1, 1]} : vector<8x384xf32> to vector<8x128xf32>
    %249 = vector.extract_strided_slice %231 {offsets = [0, 256], sizes = [8, 128], strides = [1, 1]} : vector<8x384xf32> to vector<8x128xf32>
    %250 = arith.addf %249, %11 : vector<8x128xf32>
    %251 = arith.mulf %239, %250 : vector<8x128xf32>
    %252 = arith.addf %248, %251 : vector<8x128xf32>
    %253 = math.tanh %252 : vector<8x128xf32>
    %cst_62 = arith.constant 1.000000e+00 : f32
    %254 = vector.broadcast %cst_62 : f32 to vector<8x128xf32>
    %255 = arith.subf %254, %247 : vector<8x128xf32>
    %256 = arith.mulf %255, %253 : vector<8x128xf32>
    %257 = arith.mulf %247, %223 : vector<8x128xf32>
    %258 = arith.addf %256, %257 : vector<8x128xf32>
    %259 = arith.index_cast %227 : i32 to index
    %c0_63 = arith.constant 0 : index
    %260 = vector.load %arg13[%259, %c0_63] : memref<64x128xf32, #tpu.memory_space<vmem>>, vector<8x128xf32>
    tpu.vector_store %arg13[%259, %c0_63], %258 {strides = array<i32>} : memref<64x128xf32, #tpu.memory_space<vmem>>, vector<8x128xf32>,
    %c7_i32 = arith.constant 7 : i32
    %c8_i32_64 = arith.constant 8 : i32
    %261 = arith.muli %c7_i32, %c8_i32_64 : i32
    %262 = tpu.assume_multiple %261, 8 : i32
    %263 = arith.index_cast %262 : i32 to index
    %c0_65 = arith.constant 0 : index
    %264 = vector.load %arg12[%263, %c0_65] : memref<64x384xf32, #tpu.memory_space<vmem>>, vector<8x384xf32>
    %265 = arith.truncf %258 : vector<8x128xf32> to vector<8x128xbf16>
    %cst_66 = arith.constant dense<0.000000e+00> : vector<8x384xf32>
    %266 = tpu.matmul %265, %7, %cst_66 {dimension_numbers = #tpu.dot_dimension_numbers<[1], [0], [0], [1], [0, 0, 1, 1], [], []>} : vector<8x128xbf16>, vector<128x384xbf16>, vector<8x384xf32> -> vector<8x384xf32>
    %267 = vector.extract_strided_slice %264 {offsets = [0, 0], sizes = [8, 128], strides = [1, 1]} : vector<8x384xf32> to vector<8x128xf32>
    %268 = vector.extract_strided_slice %266 {offsets = [0, 0], sizes = [8, 128], strides = [1, 1]} : vector<8x384xf32> to vector<8x128xf32>
    %269 = arith.addf %267, %268 : vector<8x128xf32>
    %270 = arith.negf %269 : vector<8x128xf32>
    %271 = math.exp %270 : vector<8x128xf32>
    %cst_67 = arith.constant 1.000000e+00 : f32
    %272 = vector.broadcast %cst_67 : f32 to vector<8x128xf32>
    %273 = arith.addf %272, %271 : vector<8x128xf32>
    %274 = arith.divf %272, %273 : vector<8x128xf32>
    %275 = vector.extract_strided_slice %264 {offsets = [0, 128], sizes = [8, 128], strides = [1, 1]} : vector<8x384xf32> to vector<8x128xf32>
    %276 = vector.extract_strided_slice %266 {offsets = [0, 128], sizes = [8, 128], strides = [1, 1]} : vector<8x384xf32> to vector<8x128xf32>
    %277 = arith.addf %275, %276 : vector<8x128xf32>
    %278 = arith.negf %277 : vector<8x128xf32>
    %279 = math.exp %278 : vector<8x128xf32>
    %cst_68 = arith.constant 1.000000e+00 : f32
    %280 = vector.broadcast %cst_68 : f32 to vector<8x128xf32>
    %281 = arith.addf %280, %279 : vector<8x128xf32>
    %282 = arith.divf %280, %281 : vector<8x128xf32>
    %283 = vector.extract_strided_slice %264 {offsets = [0, 256], sizes = [8, 128], strides = [1, 1]} : vector<8x384xf32> to vector<8x128xf32>
    %284 = vector.extract_strided_slice %266 {offsets = [0, 256], sizes = [8, 128], strides = [1, 1]} : vector<8x384xf32> to vector<8x128xf32>
    %285 = arith.addf %284, %11 : vector<8x128xf32>
    %286 = arith.mulf %274, %285 : vector<8x128xf32>
    %287 = arith.addf %283, %286 : vector<8x128xf32>
    %288 = math.tanh %287 : vector<8x128xf32>
    %cst_69 = arith.constant 1.000000e+00 : f32
    %289 = vector.broadcast %cst_69 : f32 to vector<8x128xf32>
    %290 = arith.subf %289, %282 : vector<8x128xf32>
    %291 = arith.mulf %290, %288 : vector<8x128xf32>
    %292 = arith.mulf %282, %258 : vector<8x128xf32>
    %293 = arith.addf %291, %292 : vector<8x128xf32>
    %294 = arith.index_cast %262 : i32 to index
    %c0_70 = arith.constant 0 : index
    %295 = vector.load %arg13[%294, %c0_70] : memref<64x128xf32, #tpu.memory_space<vmem>>, vector<8x128xf32>
    tpu.vector_store %arg13[%294, %c0_70], %293 {strides = array<i32>} : memref<64x128xf32, #tpu.memory_space<vmem>>, vector<8x128xf32>,
    %c8_i32_71 = arith.constant 8 : i32
    %c0_72 = arith.constant 0 : index
    %c0_73 = arith.constant 0 : index
    %296 = vector.load %arg13[%c0_72, %c0_73] : memref<64x128xf32, #tpu.memory_space<vmem>>, vector<64x128xf32>
    %c0_74 = arith.constant 0 : index
    %c0_75 = arith.constant 0 : index
    %297 = vector.load %arg5[%c0_74, %c0_75] : memref<128x384xf32, #tpu.memory_space<vmem>>, vector<128x384xf32>
    %cst_76 = arith.constant dense<0.000000e+00> : vector<64x384xf32>
    %298 = tpu.matmul %296, %297, %cst_76 {dimension_numbers = #tpu.dot_dimension_numbers<[1], [0], [0], [1], [0, 0, 1, 1], [], []>} : vector<64x128xf32>, vector<128x384xf32>, vector<64x384xf32> -> vector<64x384xf32>
    %c0_77 = arith.constant 0 : index
    %c0_78 = arith.constant 0 : index
    %299 = vector.load %arg7[%c0_77, %c0_78] : memref<1x384xf32, #tpu.memory_space<vmem>>, vector<1x384xf32>
    %300 = vector.broadcast %299 : vector<1x384xf32> to vector<64x384xf32>
    %301 = arith.addf %298, %300 : vector<64x384xf32>
    %c0_79 = arith.constant 0 : index
    %c0_80 = arith.constant 0 : index
    %302 = vector.load %arg14[%c0_79, %c0_80] : memref<64x384xf32, #tpu.memory_space<vmem>>, vector<64x384xf32>
    tpu.vector_store %arg14[%c0_79, %c0_80], %301 {strides = array<i32>} : memref<64x384xf32, #tpu.memory_space<vmem>>, vector<64x384xf32>,
    %c0_i32_81 = arith.constant 0 : i32
    %c8_i32_82 = arith.constant 8 : i32
    %303 = arith.muli %c0_i32_81, %c8_i32_82 : i32
    %304 = tpu.assume_multiple %303, 8 : i32
    %305 = arith.index_cast %304 : i32 to index
    %c0_83 = arith.constant 0 : index
    %306 = vector.load %arg14[%305, %c0_83] : memref<64x384xf32, #tpu.memory_space<vmem>>, vector<8x384xf32>
    %307 = arith.truncf %15 : vector<8x128xf32> to vector<8x128xbf16>
    %cst_84 = arith.constant dense<0.000000e+00> : vector<8x384xf32>
    %308 = tpu.matmul %307, %8, %cst_84 {dimension_numbers = #tpu.dot_dimension_numbers<[1], [0], [0], [1], [0, 0, 1, 1], [], []>} : vector<8x128xbf16>, vector<128x384xbf16>, vector<8x384xf32> -> vector<8x384xf32>
    %309 = vector.extract_strided_slice %306 {offsets = [0, 0], sizes = [8, 128], strides = [1, 1]} : vector<8x384xf32> to vector<8x128xf32>
    %310 = vector.extract_strided_slice %308 {offsets = [0, 0], sizes = [8, 128], strides = [1, 1]} : vector<8x384xf32> to vector<8x128xf32>
    %311 = arith.addf %309, %310 : vector<8x128xf32>
    %312 = arith.negf %311 : vector<8x128xf32>
    %313 = math.exp %312 : vector<8x128xf32>
    %cst_85 = arith.constant 1.000000e+00 : f32
    %314 = vector.broadcast %cst_85 : f32 to vector<8x128xf32>
    %315 = arith.addf %314, %313 : vector<8x128xf32>
    %316 = arith.divf %314, %315 : vector<8x128xf32>
    %317 = vector.extract_strided_slice %306 {offsets = [0, 128], sizes = [8, 128], strides = [1, 1]} : vector<8x384xf32> to vector<8x128xf32>
    %318 = vector.extract_strided_slice %308 {offsets = [0, 128], sizes = [8, 128], strides = [1, 1]} : vector<8x384xf32> to vector<8x128xf32>
    %319 = arith.addf %317, %318 : vector<8x128xf32>
    %320 = arith.negf %319 : vector<8x128xf32>
    %321 = math.exp %320 : vector<8x128xf32>
    %cst_86 = arith.constant 1.000000e+00 : f32
    %322 = vector.broadcast %cst_86 : f32 to vector<8x128xf32>
    %323 = arith.addf %322, %321 : vector<8x128xf32>
    %324 = arith.divf %322, %323 : vector<8x128xf32>
    %325 = vector.extract_strided_slice %306 {offsets = [0, 256], sizes = [8, 128], strides = [1, 1]} : vector<8x384xf32> to vector<8x128xf32>
    %326 = vector.extract_strided_slice %308 {offsets = [0, 256], sizes = [8, 128], strides = [1, 1]} : vector<8x384xf32> to vector<8x128xf32>
    %327 = arith.addf %326, %14 : vector<8x128xf32>
    %328 = arith.mulf %316, %327 : vector<8x128xf32>
    %329 = arith.addf %325, %328 : vector<8x128xf32>
    %330 = math.tanh %329 : vector<8x128xf32>
    %cst_87 = arith.constant 1.000000e+00 : f32
    %331 = vector.broadcast %cst_87 : f32 to vector<8x128xf32>
    %332 = arith.subf %331, %324 : vector<8x128xf32>
    %333 = arith.mulf %332, %330 : vector<8x128xf32>
    %334 = arith.mulf %324, %15 : vector<8x128xf32>
    %335 = arith.addf %333, %334 : vector<8x128xf32>
    %336 = arith.index_cast %304 : i32 to index
    %c0_88 = arith.constant 0 : index
    %337 = vector.load %arg15[%336, %c0_88] : memref<64x128xf32, #tpu.memory_space<vmem>>, vector<8x128xf32>
    tpu.vector_store %arg15[%336, %c0_88], %335 {strides = array<i32>} : memref<64x128xf32, #tpu.memory_space<vmem>>, vector<8x128xf32>,
    %c1_i32_89 = arith.constant 1 : i32
    %c8_i32_90 = arith.constant 8 : i32
    %338 = arith.muli %c1_i32_89, %c8_i32_90 : i32
    %339 = tpu.assume_multiple %338, 8 : i32
    %340 = arith.index_cast %339 : i32 to index
    %c0_91 = arith.constant 0 : index
    %341 = vector.load %arg14[%340, %c0_91] : memref<64x384xf32, #tpu.memory_space<vmem>>, vector<8x384xf32>
    %342 = arith.truncf %335 : vector<8x128xf32> to vector<8x128xbf16>
    %cst_92 = arith.constant dense<0.000000e+00> : vector<8x384xf32>
    %343 = tpu.matmul %342, %8, %cst_92 {dimension_numbers = #tpu.dot_dimension_numbers<[1], [0], [0], [1], [0, 0, 1, 1], [], []>} : vector<8x128xbf16>, vector<128x384xbf16>, vector<8x384xf32> -> vector<8x384xf32>
    %344 = vector.extract_strided_slice %341 {offsets = [0, 0], sizes = [8, 128], strides = [1, 1]} : vector<8x384xf32> to vector<8x128xf32>
    %345 = vector.extract_strided_slice %343 {offsets = [0, 0], sizes = [8, 128], strides = [1, 1]} : vector<8x384xf32> to vector<8x128xf32>
    %346 = arith.addf %344, %345 : vector<8x128xf32>
    %347 = arith.negf %346 : vector<8x128xf32>
    %348 = math.exp %347 : vector<8x128xf32>
    %cst_93 = arith.constant 1.000000e+00 : f32
    %349 = vector.broadcast %cst_93 : f32 to vector<8x128xf32>
    %350 = arith.addf %349, %348 : vector<8x128xf32>
    %351 = arith.divf %349, %350 : vector<8x128xf32>
    %352 = vector.extract_strided_slice %341 {offsets = [0, 128], sizes = [8, 128], strides = [1, 1]} : vector<8x384xf32> to vector<8x128xf32>
    %353 = vector.extract_strided_slice %343 {offsets = [0, 128], sizes = [8, 128], strides = [1, 1]} : vector<8x384xf32> to vector<8x128xf32>
    %354 = arith.addf %352, %353 : vector<8x128xf32>
    %355 = arith.negf %354 : vector<8x128xf32>
    %356 = math.exp %355 : vector<8x128xf32>
    %cst_94 = arith.constant 1.000000e+00 : f32
    %357 = vector.broadcast %cst_94 : f32 to vector<8x128xf32>
    %358 = arith.addf %357, %356 : vector<8x128xf32>
    %359 = arith.divf %357, %358 : vector<8x128xf32>
    %360 = vector.extract_strided_slice %341 {offsets = [0, 256], sizes = [8, 128], strides = [1, 1]} : vector<8x384xf32> to vector<8x128xf32>
    %361 = vector.extract_strided_slice %343 {offsets = [0, 256], sizes = [8, 128], strides = [1, 1]} : vector<8x384xf32> to vector<8x128xf32>
    %362 = arith.addf %361, %14 : vector<8x128xf32>
    %363 = arith.mulf %351, %362 : vector<8x128xf32>
    %364 = arith.addf %360, %363 : vector<8x128xf32>
    %365 = math.tanh %364 : vector<8x128xf32>
    %cst_95 = arith.constant 1.000000e+00 : f32
    %366 = vector.broadcast %cst_95 : f32 to vector<8x128xf32>
    %367 = arith.subf %366, %359 : vector<8x128xf32>
    %368 = arith.mulf %367, %365 : vector<8x128xf32>
    %369 = arith.mulf %359, %335 : vector<8x128xf32>
    %370 = arith.addf %368, %369 : vector<8x128xf32>
    %371 = arith.index_cast %339 : i32 to index
    %c0_96 = arith.constant 0 : index
    %372 = vector.load %arg15[%371, %c0_96] : memref<64x128xf32, #tpu.memory_space<vmem>>, vector<8x128xf32>
    tpu.vector_store %arg15[%371, %c0_96], %370 {strides = array<i32>} : memref<64x128xf32, #tpu.memory_space<vmem>>, vector<8x128xf32>,
    %c2_i32_97 = arith.constant 2 : i32
    %c8_i32_98 = arith.constant 8 : i32
    %373 = arith.muli %c2_i32_97, %c8_i32_98 : i32
    %374 = tpu.assume_multiple %373, 8 : i32
    %375 = arith.index_cast %374 : i32 to index
    %c0_99 = arith.constant 0 : index
    %376 = vector.load %arg14[%375, %c0_99] : memref<64x384xf32, #tpu.memory_space<vmem>>, vector<8x384xf32>
    %377 = arith.truncf %370 : vector<8x128xf32> to vector<8x128xbf16>
    %cst_100 = arith.constant dense<0.000000e+00> : vector<8x384xf32>
    %378 = tpu.matmul %377, %8, %cst_100 {dimension_numbers = #tpu.dot_dimension_numbers<[1], [0], [0], [1], [0, 0, 1, 1], [], []>} : vector<8x128xbf16>, vector<128x384xbf16>, vector<8x384xf32> -> vector<8x384xf32>
    %379 = vector.extract_strided_slice %376 {offsets = [0, 0], sizes = [8, 128], strides = [1, 1]} : vector<8x384xf32> to vector<8x128xf32>
    %380 = vector.extract_strided_slice %378 {offsets = [0, 0], sizes = [8, 128], strides = [1, 1]} : vector<8x384xf32> to vector<8x128xf32>
    %381 = arith.addf %379, %380 : vector<8x128xf32>
    %382 = arith.negf %381 : vector<8x128xf32>
    %383 = math.exp %382 : vector<8x128xf32>
    %cst_101 = arith.constant 1.000000e+00 : f32
    %384 = vector.broadcast %cst_101 : f32 to vector<8x128xf32>
    %385 = arith.addf %384, %383 : vector<8x128xf32>
    %386 = arith.divf %384, %385 : vector<8x128xf32>
    %387 = vector.extract_strided_slice %376 {offsets = [0, 128], sizes = [8, 128], strides = [1, 1]} : vector<8x384xf32> to vector<8x128xf32>
    %388 = vector.extract_strided_slice %378 {offsets = [0, 128], sizes = [8, 128], strides = [1, 1]} : vector<8x384xf32> to vector<8x128xf32>
    %389 = arith.addf %387, %388 : vector<8x128xf32>
    %390 = arith.negf %389 : vector<8x128xf32>
    %391 = math.exp %390 : vector<8x128xf32>
    %cst_102 = arith.constant 1.000000e+00 : f32
    %392 = vector.broadcast %cst_102 : f32 to vector<8x128xf32>
    %393 = arith.addf %392, %391 : vector<8x128xf32>
    %394 = arith.divf %392, %393 : vector<8x128xf32>
    %395 = vector.extract_strided_slice %376 {offsets = [0, 256], sizes = [8, 128], strides = [1, 1]} : vector<8x384xf32> to vector<8x128xf32>
    %396 = vector.extract_strided_slice %378 {offsets = [0, 256], sizes = [8, 128], strides = [1, 1]} : vector<8x384xf32> to vector<8x128xf32>
    %397 = arith.addf %396, %14 : vector<8x128xf32>
    %398 = arith.mulf %386, %397 : vector<8x128xf32>
    %399 = arith.addf %395, %398 : vector<8x128xf32>
    %400 = math.tanh %399 : vector<8x128xf32>
    %cst_103 = arith.constant 1.000000e+00 : f32
    %401 = vector.broadcast %cst_103 : f32 to vector<8x128xf32>
    %402 = arith.subf %401, %394 : vector<8x128xf32>
    %403 = arith.mulf %402, %400 : vector<8x128xf32>
    %404 = arith.mulf %394, %370 : vector<8x128xf32>
    %405 = arith.addf %403, %404 : vector<8x128xf32>
    %406 = arith.index_cast %374 : i32 to index
    %c0_104 = arith.constant 0 : index
    %407 = vector.load %arg15[%406, %c0_104] : memref<64x128xf32, #tpu.memory_space<vmem>>, vector<8x128xf32>
    tpu.vector_store %arg15[%406, %c0_104], %405 {strides = array<i32>} : memref<64x128xf32, #tpu.memory_space<vmem>>, vector<8x128xf32>,
    %c3_i32_105 = arith.constant 3 : i32
    %c8_i32_106 = arith.constant 8 : i32
    %408 = arith.muli %c3_i32_105, %c8_i32_106 : i32
    %409 = tpu.assume_multiple %408, 8 : i32
    %410 = arith.index_cast %409 : i32 to index
    %c0_107 = arith.constant 0 : index
    %411 = vector.load %arg14[%410, %c0_107] : memref<64x384xf32, #tpu.memory_space<vmem>>, vector<8x384xf32>
    %412 = arith.truncf %405 : vector<8x128xf32> to vector<8x128xbf16>
    %cst_108 = arith.constant dense<0.000000e+00> : vector<8x384xf32>
    %413 = tpu.matmul %412, %8, %cst_108 {dimension_numbers = #tpu.dot_dimension_numbers<[1], [0], [0], [1], [0, 0, 1, 1], [], []>} : vector<8x128xbf16>, vector<128x384xbf16>, vector<8x384xf32> -> vector<8x384xf32>
    %414 = vector.extract_strided_slice %411 {offsets = [0, 0], sizes = [8, 128], strides = [1, 1]} : vector<8x384xf32> to vector<8x128xf32>
    %415 = vector.extract_strided_slice %413 {offsets = [0, 0], sizes = [8, 128], strides = [1, 1]} : vector<8x384xf32> to vector<8x128xf32>
    %416 = arith.addf %414, %415 : vector<8x128xf32>
    %417 = arith.negf %416 : vector<8x128xf32>
    %418 = math.exp %417 : vector<8x128xf32>
    %cst_109 = arith.constant 1.000000e+00 : f32
    %419 = vector.broadcast %cst_109 : f32 to vector<8x128xf32>
    %420 = arith.addf %419, %418 : vector<8x128xf32>
    %421 = arith.divf %419, %420 : vector<8x128xf32>
    %422 = vector.extract_strided_slice %411 {offsets = [0, 128], sizes = [8, 128], strides = [1, 1]} : vector<8x384xf32> to vector<8x128xf32>
    %423 = vector.extract_strided_slice %413 {offsets = [0, 128], sizes = [8, 128], strides = [1, 1]} : vector<8x384xf32> to vector<8x128xf32>
    %424 = arith.addf %422, %423 : vector<8x128xf32>
    %425 = arith.negf %424 : vector<8x128xf32>
    %426 = math.exp %425 : vector<8x128xf32>
    %cst_110 = arith.constant 1.000000e+00 : f32
    %427 = vector.broadcast %cst_110 : f32 to vector<8x128xf32>
    %428 = arith.addf %427, %426 : vector<8x128xf32>
    %429 = arith.divf %427, %428 : vector<8x128xf32>
    %430 = vector.extract_strided_slice %411 {offsets = [0, 256], sizes = [8, 128], strides = [1, 1]} : vector<8x384xf32> to vector<8x128xf32>
    %431 = vector.extract_strided_slice %413 {offsets = [0, 256], sizes = [8, 128], strides = [1, 1]} : vector<8x384xf32> to vector<8x128xf32>
    %432 = arith.addf %431, %14 : vector<8x128xf32>
    %433 = arith.mulf %421, %432 : vector<8x128xf32>
    %434 = arith.addf %430, %433 : vector<8x128xf32>
    %435 = math.tanh %434 : vector<8x128xf32>
    %cst_111 = arith.constant 1.000000e+00 : f32
    %436 = vector.broadcast %cst_111 : f32 to vector<8x128xf32>
    %437 = arith.subf %436, %429 : vector<8x128xf32>
    %438 = arith.mulf %437, %435 : vector<8x128xf32>
    %439 = arith.mulf %429, %405 : vector<8x128xf32>
    %440 = arith.addf %438, %439 : vector<8x128xf32>
    %441 = arith.index_cast %409 : i32 to index
    %c0_112 = arith.constant 0 : index
    %442 = vector.load %arg15[%441, %c0_112] : memref<64x128xf32, #tpu.memory_space<vmem>>, vector<8x128xf32>
    tpu.vector_store %arg15[%441, %c0_112], %440 {strides = array<i32>} : memref<64x128xf32, #tpu.memory_space<vmem>>, vector<8x128xf32>,
    %c4_i32_113 = arith.constant 4 : i32
    %c8_i32_114 = arith.constant 8 : i32
    %443 = arith.muli %c4_i32_113, %c8_i32_114 : i32
    %444 = tpu.assume_multiple %443, 8 : i32
    %445 = arith.index_cast %444 : i32 to index
    %c0_115 = arith.constant 0 : index
    %446 = vector.load %arg14[%445, %c0_115] : memref<64x384xf32, #tpu.memory_space<vmem>>, vector<8x384xf32>
    %447 = arith.truncf %440 : vector<8x128xf32> to vector<8x128xbf16>
    %cst_116 = arith.constant dense<0.000000e+00> : vector<8x384xf32>
    %448 = tpu.matmul %447, %8, %cst_116 {dimension_numbers = #tpu.dot_dimension_numbers<[1], [0], [0], [1], [0, 0, 1, 1], [], []>} : vector<8x128xbf16>, vector<128x384xbf16>, vector<8x384xf32> -> vector<8x384xf32>
    %449 = vector.extract_strided_slice %446 {offsets = [0, 0], sizes = [8, 128], strides = [1, 1]} : vector<8x384xf32> to vector<8x128xf32>
    %450 = vector.extract_strided_slice %448 {offsets = [0, 0], sizes = [8, 128], strides = [1, 1]} : vector<8x384xf32> to vector<8x128xf32>
    %451 = arith.addf %449, %450 : vector<8x128xf32>
    %452 = arith.negf %451 : vector<8x128xf32>
    %453 = math.exp %452 : vector<8x128xf32>
    %cst_117 = arith.constant 1.000000e+00 : f32
    %454 = vector.broadcast %cst_117 : f32 to vector<8x128xf32>
    %455 = arith.addf %454, %453 : vector<8x128xf32>
    %456 = arith.divf %454, %455 : vector<8x128xf32>
    %457 = vector.extract_strided_slice %446 {offsets = [0, 128], sizes = [8, 128], strides = [1, 1]} : vector<8x384xf32> to vector<8x128xf32>
    %458 = vector.extract_strided_slice %448 {offsets = [0, 128], sizes = [8, 128], strides = [1, 1]} : vector<8x384xf32> to vector<8x128xf32>
    %459 = arith.addf %457, %458 : vector<8x128xf32>
    %460 = arith.negf %459 : vector<8x128xf32>
    %461 = math.exp %460 : vector<8x128xf32>
    %cst_118 = arith.constant 1.000000e+00 : f32
    %462 = vector.broadcast %cst_118 : f32 to vector<8x128xf32>
    %463 = arith.addf %462, %461 : vector<8x128xf32>
    %464 = arith.divf %462, %463 : vector<8x128xf32>
    %465 = vector.extract_strided_slice %446 {offsets = [0, 256], sizes = [8, 128], strides = [1, 1]} : vector<8x384xf32> to vector<8x128xf32>
    %466 = vector.extract_strided_slice %448 {offsets = [0, 256], sizes = [8, 128], strides = [1, 1]} : vector<8x384xf32> to vector<8x128xf32>
    %467 = arith.addf %466, %14 : vector<8x128xf32>
    %468 = arith.mulf %456, %467 : vector<8x128xf32>
    %469 = arith.addf %465, %468 : vector<8x128xf32>
    %470 = math.tanh %469 : vector<8x128xf32>
    %cst_119 = arith.constant 1.000000e+00 : f32
    %471 = vector.broadcast %cst_119 : f32 to vector<8x128xf32>
    %472 = arith.subf %471, %464 : vector<8x128xf32>
    %473 = arith.mulf %472, %470 : vector<8x128xf32>
    %474 = arith.mulf %464, %440 : vector<8x128xf32>
    %475 = arith.addf %473, %474 : vector<8x128xf32>
    %476 = arith.index_cast %444 : i32 to index
    %c0_120 = arith.constant 0 : index
    %477 = vector.load %arg15[%476, %c0_120] : memref<64x128xf32, #tpu.memory_space<vmem>>, vector<8x128xf32>
    tpu.vector_store %arg15[%476, %c0_120], %475 {strides = array<i32>} : memref<64x128xf32, #tpu.memory_space<vmem>>, vector<8x128xf32>,
    %c5_i32_121 = arith.constant 5 : i32
    %c8_i32_122 = arith.constant 8 : i32
    %478 = arith.muli %c5_i32_121, %c8_i32_122 : i32
    %479 = tpu.assume_multiple %478, 8 : i32
    %480 = arith.index_cast %479 : i32 to index
    %c0_123 = arith.constant 0 : index
    %481 = vector.load %arg14[%480, %c0_123] : memref<64x384xf32, #tpu.memory_space<vmem>>, vector<8x384xf32>
    %482 = arith.truncf %475 : vector<8x128xf32> to vector<8x128xbf16>
    %cst_124 = arith.constant dense<0.000000e+00> : vector<8x384xf32>
    %483 = tpu.matmul %482, %8, %cst_124 {dimension_numbers = #tpu.dot_dimension_numbers<[1], [0], [0], [1], [0, 0, 1, 1], [], []>} : vector<8x128xbf16>, vector<128x384xbf16>, vector<8x384xf32> -> vector<8x384xf32>
    %484 = vector.extract_strided_slice %481 {offsets = [0, 0], sizes = [8, 128], strides = [1, 1]} : vector<8x384xf32> to vector<8x128xf32>
    %485 = vector.extract_strided_slice %483 {offsets = [0, 0], sizes = [8, 128], strides = [1, 1]} : vector<8x384xf32> to vector<8x128xf32>
    %486 = arith.addf %484, %485 : vector<8x128xf32>
    %487 = arith.negf %486 : vector<8x128xf32>
    %488 = math.exp %487 : vector<8x128xf32>
    %cst_125 = arith.constant 1.000000e+00 : f32
    %489 = vector.broadcast %cst_125 : f32 to vector<8x128xf32>
    %490 = arith.addf %489, %488 : vector<8x128xf32>
    %491 = arith.divf %489, %490 : vector<8x128xf32>
    %492 = vector.extract_strided_slice %481 {offsets = [0, 128], sizes = [8, 128], strides = [1, 1]} : vector<8x384xf32> to vector<8x128xf32>
    %493 = vector.extract_strided_slice %483 {offsets = [0, 128], sizes = [8, 128], strides = [1, 1]} : vector<8x384xf32> to vector<8x128xf32>
    %494 = arith.addf %492, %493 : vector<8x128xf32>
    %495 = arith.negf %494 : vector<8x128xf32>
    %496 = math.exp %495 : vector<8x128xf32>
    %cst_126 = arith.constant 1.000000e+00 : f32
    %497 = vector.broadcast %cst_126 : f32 to vector<8x128xf32>
    %498 = arith.addf %497, %496 : vector<8x128xf32>
    %499 = arith.divf %497, %498 : vector<8x128xf32>
    %500 = vector.extract_strided_slice %481 {offsets = [0, 256], sizes = [8, 128], strides = [1, 1]} : vector<8x384xf32> to vector<8x128xf32>
    %501 = vector.extract_strided_slice %483 {offsets = [0, 256], sizes = [8, 128], strides = [1, 1]} : vector<8x384xf32> to vector<8x128xf32>
    %502 = arith.addf %501, %14 : vector<8x128xf32>
    %503 = arith.mulf %491, %502 : vector<8x128xf32>
    %504 = arith.addf %500, %503 : vector<8x128xf32>
    %505 = math.tanh %504 : vector<8x128xf32>
    %cst_127 = arith.constant 1.000000e+00 : f32
    %506 = vector.broadcast %cst_127 : f32 to vector<8x128xf32>
    %507 = arith.subf %506, %499 : vector<8x128xf32>
    %508 = arith.mulf %507, %505 : vector<8x128xf32>
    %509 = arith.mulf %499, %475 : vector<8x128xf32>
    %510 = arith.addf %508, %509 : vector<8x128xf32>
    %511 = arith.index_cast %479 : i32 to index
    %c0_128 = arith.constant 0 : index
    %512 = vector.load %arg15[%511, %c0_128] : memref<64x128xf32, #tpu.memory_space<vmem>>, vector<8x128xf32>
    tpu.vector_store %arg15[%511, %c0_128], %510 {strides = array<i32>} : memref<64x128xf32, #tpu.memory_space<vmem>>, vector<8x128xf32>,
    %c6_i32_129 = arith.constant 6 : i32
    %c8_i32_130 = arith.constant 8 : i32
    %513 = arith.muli %c6_i32_129, %c8_i32_130 : i32
    %514 = tpu.assume_multiple %513, 8 : i32
    %515 = arith.index_cast %514 : i32 to index
    %c0_131 = arith.constant 0 : index
    %516 = vector.load %arg14[%515, %c0_131] : memref<64x384xf32, #tpu.memory_space<vmem>>, vector<8x384xf32>
    %517 = arith.truncf %510 : vector<8x128xf32> to vector<8x128xbf16>
    %cst_132 = arith.constant dense<0.000000e+00> : vector<8x384xf32>
    %518 = tpu.matmul %517, %8, %cst_132 {dimension_numbers = #tpu.dot_dimension_numbers<[1], [0], [0], [1], [0, 0, 1, 1], [], []>} : vector<8x128xbf16>, vector<128x384xbf16>, vector<8x384xf32> -> vector<8x384xf32>
    %519 = vector.extract_strided_slice %516 {offsets = [0, 0], sizes = [8, 128], strides = [1, 1]} : vector<8x384xf32> to vector<8x128xf32>
    %520 = vector.extract_strided_slice %518 {offsets = [0, 0], sizes = [8, 128], strides = [1, 1]} : vector<8x384xf32> to vector<8x128xf32>
    %521 = arith.addf %519, %520 : vector<8x128xf32>
    %522 = arith.negf %521 : vector<8x128xf32>
    %523 = math.exp %522 : vector<8x128xf32>
    %cst_133 = arith.constant 1.000000e+00 : f32
    %524 = vector.broadcast %cst_133 : f32 to vector<8x128xf32>
    %525 = arith.addf %524, %523 : vector<8x128xf32>
    %526 = arith.divf %524, %525 : vector<8x128xf32>
    %527 = vector.extract_strided_slice %516 {offsets = [0, 128], sizes = [8, 128], strides = [1, 1]} : vector<8x384xf32> to vector<8x128xf32>
    %528 = vector.extract_strided_slice %518 {offsets = [0, 128], sizes = [8, 128], strides = [1, 1]} : vector<8x384xf32> to vector<8x128xf32>
    %529 = arith.addf %527, %528 : vector<8x128xf32>
    %530 = arith.negf %529 : vector<8x128xf32>
    %531 = math.exp %530 : vector<8x128xf32>
    %cst_134 = arith.constant 1.000000e+00 : f32
    %532 = vector.broadcast %cst_134 : f32 to vector<8x128xf32>
    %533 = arith.addf %532, %531 : vector<8x128xf32>
    %534 = arith.divf %532, %533 : vector<8x128xf32>
    %535 = vector.extract_strided_slice %516 {offsets = [0, 256], sizes = [8, 128], strides = [1, 1]} : vector<8x384xf32> to vector<8x128xf32>
    %536 = vector.extract_strided_slice %518 {offsets = [0, 256], sizes = [8, 128], strides = [1, 1]} : vector<8x384xf32> to vector<8x128xf32>
    %537 = arith.addf %536, %14 : vector<8x128xf32>
    %538 = arith.mulf %526, %537 : vector<8x128xf32>
    %539 = arith.addf %535, %538 : vector<8x128xf32>
    %540 = math.tanh %539 : vector<8x128xf32>
    %cst_135 = arith.constant 1.000000e+00 : f32
    %541 = vector.broadcast %cst_135 : f32 to vector<8x128xf32>
    %542 = arith.subf %541, %534 : vector<8x128xf32>
    %543 = arith.mulf %542, %540 : vector<8x128xf32>
    %544 = arith.mulf %534, %510 : vector<8x128xf32>
    %545 = arith.addf %543, %544 : vector<8x128xf32>
    %546 = arith.index_cast %514 : i32 to index
    %c0_136 = arith.constant 0 : index
    %547 = vector.load %arg15[%546, %c0_136] : memref<64x128xf32, #tpu.memory_space<vmem>>, vector<8x128xf32>
    tpu.vector_store %arg15[%546, %c0_136], %545 {strides = array<i32>} : memref<64x128xf32, #tpu.memory_space<vmem>>, vector<8x128xf32>,
    %c7_i32_137 = arith.constant 7 : i32
    %c8_i32_138 = arith.constant 8 : i32
    %548 = arith.muli %c7_i32_137, %c8_i32_138 : i32
    %549 = tpu.assume_multiple %548, 8 : i32
    %550 = arith.index_cast %549 : i32 to index
    %c0_139 = arith.constant 0 : index
    %551 = vector.load %arg14[%550, %c0_139] : memref<64x384xf32, #tpu.memory_space<vmem>>, vector<8x384xf32>
    %552 = arith.truncf %545 : vector<8x128xf32> to vector<8x128xbf16>
    %cst_140 = arith.constant dense<0.000000e+00> : vector<8x384xf32>
    %553 = tpu.matmul %552, %8, %cst_140 {dimension_numbers = #tpu.dot_dimension_numbers<[1], [0], [0], [1], [0, 0, 1, 1], [], []>} : vector<8x128xbf16>, vector<128x384xbf16>, vector<8x384xf32> -> vector<8x384xf32>
    %554 = vector.extract_strided_slice %551 {offsets = [0, 0], sizes = [8, 128], strides = [1, 1]} : vector<8x384xf32> to vector<8x128xf32>
    %555 = vector.extract_strided_slice %553 {offsets = [0, 0], sizes = [8, 128], strides = [1, 1]} : vector<8x384xf32> to vector<8x128xf32>
    %556 = arith.addf %554, %555 : vector<8x128xf32>
    %557 = arith.negf %556 : vector<8x128xf32>
    %558 = math.exp %557 : vector<8x128xf32>
    %cst_141 = arith.constant 1.000000e+00 : f32
    %559 = vector.broadcast %cst_141 : f32 to vector<8x128xf32>
    %560 = arith.addf %559, %558 : vector<8x128xf32>
    %561 = arith.divf %559, %560 : vector<8x128xf32>
    %562 = vector.extract_strided_slice %551 {offsets = [0, 128], sizes = [8, 128], strides = [1, 1]} : vector<8x384xf32> to vector<8x128xf32>
    %563 = vector.extract_strided_slice %553 {offsets = [0, 128], sizes = [8, 128], strides = [1, 1]} : vector<8x384xf32> to vector<8x128xf32>
    %564 = arith.addf %562, %563 : vector<8x128xf32>
    %565 = arith.negf %564 : vector<8x128xf32>
    %566 = math.exp %565 : vector<8x128xf32>
    %cst_142 = arith.constant 1.000000e+00 : f32
    %567 = vector.broadcast %cst_142 : f32 to vector<8x128xf32>
    %568 = arith.addf %567, %566 : vector<8x128xf32>
    %569 = arith.divf %567, %568 : vector<8x128xf32>
    %570 = vector.extract_strided_slice %551 {offsets = [0, 256], sizes = [8, 128], strides = [1, 1]} : vector<8x384xf32> to vector<8x128xf32>
    %571 = vector.extract_strided_slice %553 {offsets = [0, 256], sizes = [8, 128], strides = [1, 1]} : vector<8x384xf32> to vector<8x128xf32>
    %572 = arith.addf %571, %14 : vector<8x128xf32>
    %573 = arith.mulf %561, %572 : vector<8x128xf32>
    %574 = arith.addf %570, %573 : vector<8x128xf32>
    %575 = math.tanh %574 : vector<8x128xf32>
    %cst_143 = arith.constant 1.000000e+00 : f32
    %576 = vector.broadcast %cst_143 : f32 to vector<8x128xf32>
    %577 = arith.subf %576, %569 : vector<8x128xf32>
    %578 = arith.mulf %577, %575 : vector<8x128xf32>
    %579 = arith.mulf %569, %545 : vector<8x128xf32>
    %580 = arith.addf %578, %579 : vector<8x128xf32>
    %581 = arith.index_cast %549 : i32 to index
    %c0_144 = arith.constant 0 : index
    %582 = vector.load %arg15[%581, %c0_144] : memref<64x128xf32, #tpu.memory_space<vmem>>, vector<8x128xf32>
    tpu.vector_store %arg15[%581, %c0_144], %580 {strides = array<i32>} : memref<64x128xf32, #tpu.memory_space<vmem>>, vector<8x128xf32>,
    %c8_i32_145 = arith.constant 8 : i32
    %c0_146 = arith.constant 0 : index
    %c0_147 = arith.constant 0 : index
    %583 = vector.load %arg15[%c0_146, %c0_147] : memref<64x128xf32, #tpu.memory_space<vmem>>, vector<64x128xf32>
    %c0_148 = arith.constant 0 : index
    %c0_149 = arith.constant 0 : index
    %584 = vector.load %arg9[%c0_148, %c0_149] : memref<128x128xf32, #tpu.memory_space<vmem>>, vector<128x128xf32>
    %cst_150 = arith.constant dense<0.000000e+00> : vector<64x128xf32>
    %585 = tpu.matmul %583, %584, %cst_150 {dimension_numbers = #tpu.dot_dimension_numbers<[1], [0], [0], [1], [0, 0, 1, 1], [], []>} : vector<64x128xf32>, vector<128x128xf32>, vector<64x128xf32> -> vector<64x128xf32>
    %c0_151 = arith.constant 0 : index
    %c0_152 = arith.constant 0 : index
    %586 = vector.load %arg10[%c0_151, %c0_152] : memref<1x128xf32, #tpu.memory_space<vmem>>, vector<1x128xf32>
    %587 = vector.broadcast %586 : vector<1x128xf32> to vector<64x128xf32>
    %588 = arith.addf %585, %587 : vector<64x128xf32>
    %c0_153 = arith.constant 0 : index
    %c0_154 = arith.constant 0 : index
    %589 = vector.load %arg11[%c0_153, %c0_154] : memref<64x128xf32, #tpu.memory_space<vmem>>, vector<64x128xf32>
    tpu.vector_store %arg11[%c0_153, %c0_154], %588 {strides = array<i32>} : memref<64x128xf32, #tpu.memory_space<vmem>>, vector<64x128xf32>,
    return
  }
}

</mosaic_0001>

<llo_original>
// kernel: squeeze.1
$region0: #{squeeze.1}
  %s0 = inlined_call_operand.vmem [shape: f32[64], index: 0, kind: input, shape index: {}]
  %s1 = inlined_call_operand.vmem [shape: f32[8,8], index: 1, kind: output, shape index: {}]
  $region1: #{squeeze.1} parent=0
    #allocation0 [shape = 'u8[4096]{0}', space=vmem, size = 0x1000, scoped, tag = 'scoped mem for input reshape']
    %s3 = sshllo.u32 0, 1
    %v4 = vld [vmem:[%s0] sm:%s3]
    %5 = vst [vmem:[#allocation0] sm:%s3] %v4
    %v6 = vld [vmem:[#allocation0] sm:$0x1]
    %vm7 = vcmask 64512
    %8 = vst.msk [vmem:[%s1] sm:$0x1] %vm7, %v6
    %v9 = vld [vmem:[#allocation0] sm:$0x1]
    %10 = vrot.lane.b32.xlu0 %v9, 120
    %v11 = vpop.permute.xlu0 %10
    %vm12 = vcmask 64512
    %s13 = scalar_lea.vmem %s1, 1
    %14 = vst.msk [vmem:[%s13] sm:$0x1] %vm12, %v11
    %v15 = vld [vmem:[#allocation0] sm:$0x1]
    %16 = vrot.lane.b32.xlu0 %v15, 112
    %v17 = vpop.permute.xlu0 %16
    %vm18 = vcmask 64512
    %s19 = scalar_lea.vmem %s1, 2
    %20 = vst.msk [vmem:[%s19] sm:$0x1] %vm18, %v17
    %v21 = vld [vmem:[#allocation0] sm:$0x1]
    %22 = vrot.lane.b32.xlu0 %v21, 104
    %v23 = vpop.permute.xlu0 %22
    %vm24 = vcmask 64512
    %s25 = scalar_lea.vmem %s1, 3
    %26 = vst.msk [vmem:[%s25] sm:$0x1] %vm24, %v23
    %v27 = vld [vmem:[#allocation0] sm:$0x1]
    %28 = vrot.lane.b32.xlu0 %v27, 96
    %v29 = vpop.permute.xlu0 %28
    %vm30 = vcmask 64512
    %s31 = scalar_lea.vmem %s1, 4
    %32 = vst.msk [vmem:[%s31] sm:$0x1] %vm30, %v29
    %v33 = vld [vmem:[#allocation0] sm:$0x1]
    %34 = vrot.lane.b32.xlu0 %v33, 88
    %v35 = vpop.permute.xlu0 %34
    %vm36 = vcmask 64512
    %s37 = scalar_lea.vmem %s1, 5
    %38 = vst.msk [vmem:[%s37] sm:$0x1] %vm36, %v35
    %v39 = vld [vmem:[#allocation0] sm:$0x1]
    %40 = vrot.lane.b32.xlu0 %v39, 80
    %v41 = vpop.permute.xlu0 %40
    %vm42 = vcmask 64512
    %s43 = scalar_lea.vmem %s1, 6
    %44 = vst.msk [vmem:[%s43] sm:$0x1] %vm42, %v41
    %v45 = vld [vmem:[#allocation0] sm:$0x1]
    %46 = vrot.lane.b32.xlu0 %v45, 72
    %v47 = vpop.permute.xlu0 %46
    %vm48 = vcmask 64512
    %s49 = scalar_lea.vmem %s1, 7
    %50 = vst.msk [vmem:[%s49] sm:$0x1] %vm48, %v47

// kernel: gru_model_forward.1
$region0: #{gru_model_forward.1}
  #allocation0 [shape = 'u32[]', space=smem, size = 0x4, offset = 0x4, fixed_abs, tag = 'smem constant byte address 0x4 - core index']
  #allocation1 [shape = 'u32[144,128]{1,0:T(1,128)}', space=vmem, size = 0x12000, scoped, tag = 'internal scratch']
  #allocation2 [shape = 'f32[64,384]{1,0:T(8,128)}', space=vmem, size = 0x18000, scoped, tag = 'scratch operand']
  #allocation3 [shape = 'f32[64,128]{1,0:T(8,128)}', space=vmem, size = 0x8000, scoped, tag = 'scratch operand']
  #allocation4 [shape = 'f32[64,384]{1,0:T(8,128)}', space=vmem, size = 0x18000, scoped, tag = 'scratch operand']
  #allocation5 [shape = 'f32[64,128]{1,0:T(8,128)}', space=vmem, size = 0x8000, scoped, tag = 'scratch operand']
  %s0 = inlined_call_operand.hbm [shape: f32[64,32], index: 0, kind: input, shape index: {}]
  %s1 = inlined_call_operand.hbm [shape: f32[32,384], index: 1, kind: input, shape index: {}]
  %s2 = inlined_call_operand.hbm [shape: bf16[128,384], index: 2, kind: input, shape index: {}]
  %s3 = inlined_call_operand.vmem [shape: f32[1,384], index: 3, kind: input, shape index: {}]
  %s4 = inlined_call_operand.vmem [shape: f32[1,128], index: 4, kind: input, shape index: {}]
  %s5 = inlined_call_operand.hbm [shape: f32[128,384], index: 5, kind: input, shape index: {}]
  %s6 = inlined_call_operand.hbm [shape: bf16[128,384], index: 6, kind: input, shape index: {}]
  %s7 = inlined_call_operand.vmem [shape: f32[1,384], index: 7, kind: input, shape index: {}]
  %s8 = inlined_call_operand.vmem [shape: f32[1,128], index: 8, kind: input, shape index: {}]
  %s9 = inlined_call_operand.hbm [shape: f32[128,128], index: 9, kind: input, shape index: {}]
  %s10 = inlined_call_operand.vmem [shape: f32[1,128], index: 10, kind: input, shape index: {}]
  %s11 = inlined_call_operand.vmem [shape: f32[64,128], index: 11, kind: output, shape index: {}]
  %s12 = sld [smem:[#allocation0]]
  $region78: #{gru_model_forward.1} parent=0
    _
  %s14 = ssub.s32 1, %s12
  %s15 = scalar_select 0, %s14, %s12
  $region1: #{gru_model_forward.1} parent=0
    #allocation6 [shape = 'u8[32768]{0}', space=vmem, size = 0x8000, scoped, tag = 'input window, operand 0, single buffered']
    #allocation7 [shape = 's32[1]{0}', space=sflag, size = 0x4, scoped, tag = 'scoped memory for gru_model_forward.1']
    #allocation8 [shape = 'u8[49152]{0}', space=vmem, size = 0xc000, scoped, tag = 'input window, operand 1, single buffered']
    #allocation9 [shape = 's32[1]{0}', space=sflag, size = 0x4, scoped, tag = 'scoped memory for gru_model_forward.1']
    #allocation10 [shape = 'u8[98304]{0}', space=vmem, size = 0x18000, scoped, tag = 'input window, operand 2, single buffered']
    #allocation11 [shape = 'u8[196608]{0}', space=vmem, size = 0x30000, scoped, tag = 'input window, operand 5, single buffered']
    #allocation12 [shape = 's32[1]{0}', space=sflag, size = 0x4, scoped, tag = 'scoped memory for gru_model_forward.1']
    #allocation13 [shape = 'u8[98304]{0}', space=vmem, size = 0x18000, scoped, tag = 'input window, operand 6, single buffered']
    #allocation14 [shape = 'u8[65536]{0}', space=vmem, size = 0x10000, scoped, tag = 'input window, operand 9, single buffered']
    #allocation15 [shape = 's32[1]{0}', space=sflag, size = 0x4, scoped, tag = 'scoped memory for gru_model_forward.1']
    %16 = vsyncpa [#allocation7], 0
    %17 = vsyncpa [#allocation9], 0
    %18 = vsyncpa [#allocation12], 0
    %19 = vsyncpa [#allocation15], 0
    // Predicated region
    $region2: #{gru_model_forward.1} parent=1 // pred_check
      _
    $region3: #{gru_model_forward.1} parent=1 // pred_check_branch
      %21 = sbr.rel (0) target = $region5
    $region4: #{gru_model_forward.1} parent=1 // pred_region
      %s23 = ssub.s32 1024, 1024
      %24 = vsyncadd [#allocation7], %s23
      %s25 = sshll.u32 [#allocation6], 4
      %s26 = int_to_ptr.vmem [resolvable:$true] %s25
      %31 = dma.hbm_to_vmem [thread:$0]  %s0, 1024, %s26, [#allocation7], 128, 128, 8
    $region5: #{gru_model_forward.1} parent=1 // pred_fallthru
      _
    // Predicated region
    $region6: #{gru_model_forward.1} parent=1 // pred_check
      _
    $region7: #{gru_model_forward.1} parent=1 // pred_check_branch
      %33 = sbr.rel (0) target = $region9
    $region8: #{gru_model_forward.1} parent=1 // pred_region
      %s35 = ssub.s32 1536, 1536
      %36 = vsyncadd [#allocation9], %s35
      %s37 = sshll.u32 [#allocation8], 4
      %s38 = int_to_ptr.vmem [resolvable:$true] %s37
      %43 = dma.hbm_to_vmem [thread:$0]  %s1, 1536, %s38, [#allocation9], 384, 384, 24
    $region9: #{gru_model_forward.1} parent=1 // pred_fallthru
      _
    // Predicated region
    $region10: #{gru_model_forward.1} parent=1 // pred_check
      _
    $region11: #{gru_model_forward.1} parent=1 // pred_check_branch
      %45 = sbr.rel (0) target = $region13
    $region12: #{gru_model_forward.1} parent=1 // pred_region
      %s47 = ssub.s32 3072, 3072
      %48 = vsyncadd [#allocation9], %s47
      %s49 = sshll.u32 [#allocation10], 4
      %s50 = int_to_ptr.vmem [resolvable:$true] %s49
      %55 = dma.hbm_to_vmem [thread:$0]  %s2, 3072, %s50, [#allocation9], 192, 192, 12
    $region13: #{gru_model_forward.1} parent=1 // pred_fallthru
      _
    // Predicated region
    $region14: #{gru_model_forward.1} parent=1 // pred_check
      _
    $region15: #{gru_model_forward.1} parent=1 // pred_check_branch
      %57 = sbr.rel (0) target = $region17
    $region16: #{gru_model_forward.1} parent=1 // pred_region
      _
    $region17: #{gru_model_forward.1} parent=1 // pred_fallthru
      _
    // Predicated region
    $region18: #{gru_model_forward.1} parent=1 // pred_check
      _
    $region19: #{gru_model_forward.1} parent=1 // pred_check_branch
      %59 = sbr.rel (0) target = $region21
    $region20: #{gru_model_forward.1} parent=1 // pred_region
      _
    $region21: #{gru_model_forward.1} parent=1 // pred_fallthru
      _
    // Predicated region
    $region22: #{gru_model_forward.1} parent=1 // pred_check
      _
    $region23: #{gru_model_forward.1} parent=1 // pred_check_branch
      %61 = sbr.rel (0) target = $region25
    $region24: #{gru_model_forward.1} parent=1 // pred_region
      %s63 = ssub.s32 6144, 6144
      %64 = vsyncadd [#allocation12], %s63
      %s65 = sshll.u32 [#allocation11], 4
      %s66 = int_to_ptr.vmem [resolvable:$true] %s65
      %71 = dma.hbm_to_vmem [thread:$0]  %s5, 6144, %s66, [#allocation12], 384, 384, 24
    $region25: #{gru_model_forward.1} parent=1 // pred_fallthru
      _
    // Predicated region
    $region26: #{gru_model_forward.1} parent=1 // pred_check
      _
    $region27: #{gru_model_forward.1} parent=1 // pred_check_branch
      %73 = sbr.rel (0) target = $region29
    $region28: #{gru_model_forward.1} parent=1 // pred_region
      %s75 = ssub.s32 3072, 3072
      %76 = vsyncadd [#allocation12], %s75
      %s77 = sshll.u32 [#allocation13], 4
      %s78 = int_to_ptr.vmem [resolvable:$true] %s77
      %83 = dma.hbm_to_vmem [thread:$0]  %s6, 3072, %s78, [#allocation12], 192, 192, 12
    $region29: #{gru_model_forward.1} parent=1 // pred_fallthru
      _
    // Predicated region
    $region30: #{gru_model_forward.1} parent=1 // pred_check
      _
    $region31: #{gru_model_forward.1} parent=1 // pred_check_branch
      %85 = sbr.rel (0) target = $region33
    $region32: #{gru_model_forward.1} parent=1 // pred_region
      _
    $region33: #{gru_model_forward.1} parent=1 // pred_fallthru
      _
    // Predicated region
    $region34: #{gru_model_forward.1} parent=1 // pred_check
      _
    $region35: #{gru_model_forward.1} parent=1 // pred_check_branch
      %87 = sbr.rel (0) target = $region37
    $region36: #{gru_model_forward.1} parent=1 // pred_region
      _
    $region37: #{gru_model_forward.1} parent=1 // pred_fallthru
      _
    // Predicated region
    $region38: #{gru_model_forward.1} parent=1 // pred_check
      _
    $region39: #{gru_model_forward.1} parent=1 // pred_check_branch
      %89 = sbr.rel (0) target = $region41
    $region40: #{gru_model_forward.1} parent=1 // pred_region
      %s91 = ssub.s32 2048, 2048
      %92 = vsyncadd [#allocation15], %s91
      %s93 = sshll.u32 [#allocation14], 4
      %s94 = int_to_ptr.vmem [resolvable:$true] %s93
      %99 = dma.hbm_to_vmem [thread:$0]  %s9, 2048, %s94, [#allocation15], 128, 128, 8
    $region41: #{gru_model_forward.1} parent=1 // pred_fallthru
      _
    // Predicated region
    $region42: #{gru_model_forward.1} parent=1 // pred_check
      _
    $region43: #{gru_model_forward.1} parent=1 // pred_check_branch
      %101 = sbr.rel (0) target = $region45
    $region44: #{gru_model_forward.1} parent=1 // pred_region
      _
    $region45: #{gru_model_forward.1} parent=1 // pred_fallthru
      _
    // Predicated region
    $region46: #{gru_model_forward.1} parent=1 // pred_check
      _
    $region47: #{gru_model_forward.1} parent=1 // pred_check_branch
      %103 = sbr.rel (0) target = $region49
    $region48: #{gru_model_forward.1} parent=1 // pred_region
      %104 = dma.done [#allocation7], 1024
    $region49: #{gru_model_forward.1} parent=1 // pred_fallthru
      _
    // Predicated region
    $region50: #{gru_model_forward.1} parent=1 // pred_check
      _
    $region51: #{gru_model_forward.1} parent=1 // pred_check_branch
      %106 = sbr.rel (0) target = $region53
    $region52: #{gru_model_forward.1} parent=1 // pred_region
      %107 = dma.done [#allocation9], 1536
    $region53: #{gru_model_forward.1} parent=1 // pred_fallthru
      _
    // Predicated region
    $region54: #{gru_model_forward.1} parent=1 // pred_check
      _
    $region55: #{gru_model_forward.1} parent=1 // pred_check_branch
      %109 = sbr.rel (0) target = $region57
    $region56: #{gru_model_forward.1} parent=1 // pred_region
      %110 = dma.done [#allocation9], 3072
    $region57: #{gru_model_forward.1} parent=1 // pred_fallthru
      _
    // Predicated region
    $region58: #{gru_model_forward.1} parent=1 // pred_check
      _
    $region59: #{gru_model_forward.1} parent=1 // pred_check_branch
      %112 = sbr.rel (0) target = $region61
    $region60: #{gru_model_forward.1} parent=1 // pred_region
      %113 = dma.done [#allocation12], 6144
    $region61: #{gru_model_forward.1} parent=1 // pred_fallthru
      _
    // Predicated region
    $region62: #{gru_model_forward.1} parent=1 // pred_check
      _
    $region63: #{gru_model_forward.1} parent=1 // pred_check_branch
      %115 = sbr.rel (0) target = $region65
    $region64: #{gru_model_forward.1} parent=1 // pred_region
      %116 = dma.done [#allocation12], 3072
    $region65: #{gru_model_forward.1} parent=1 // pred_fallthru
      _
    // Predicated region
    $region66: #{gru_model_forward.1} parent=1 // pred_check
      _
    $region67: #{gru_model_forward.1} parent=1 // pred_check_branch
      %118 = sbr.rel (0) target = $region69
    $region68: #{gru_model_forward.1} parent=1 // pred_region
      %119 = dma.done [#allocation15], 2048
    $region69: #{gru_model_forward.1} parent=1 // pred_fallthru
      _
    %v121 = vld [vmem:[#allocation6] sm:$0xff]
    %v122 = vld [vmem:[#allocation6 + $0x8] sm:$0xff]
    %v123 = vld [vmem:[#allocation6 + $0x10] sm:$0xff]
    %v124 = vld [vmem:[#allocation6 + $0x18] sm:$0xff]
    %v125 = vld [vmem:[#allocation6 + $0x20] sm:$0xff]
    %v126 = vld [vmem:[#allocation6 + $0x28] sm:$0xff]
    %v127 = vld [vmem:[#allocation6 + $0x30] sm:$0xff]
    %v128 = vld [vmem:[#allocation6 + $0x38] sm:$0xff]
    %v129 = vld [vmem:[#allocation8] sm:$0xff]
    %v130 = vld [vmem:[#allocation8 + $0x8] sm:$0xff]
    %v131 = vld [vmem:[#allocation8 + $0x10] sm:$0xff]
    %v132 = vld [vmem:[#allocation8 + $0x18] sm:$0xff]
    %v133 = vld [vmem:[#allocation8 + $0x20] sm:$0xff]
    %v134 = vld [vmem:[#allocation8 + $0x28] sm:$0xff]
    %v135 = vld [vmem:[#allocation8 + $0x30] sm:$0xff]
    %v136 = vld [vmem:[#allocation8 + $0x38] sm:$0xff]
    %v137 = vld [vmem:[#allocation8 + $0x40] sm:$0xff]
    %v138 = vld [vmem:[#allocation8 + $0x48] sm:$0xff]
    %v139 = vld [vmem:[#allocation8 + $0x50] sm:$0xff]
    %v140 = vld [vmem:[#allocation8 + $0x58] sm:$0xff]
    %v141 = vld [vmem:[%s3] sm:$0x7]
    %v143 = vlaneseq
    %v144 = vshrl.u32 %v143, 7
    %v145 = vsub.s32 0, %v144
    %v146 = vrot.slane %v141, %v145
    %v147 = vlaneseq
    %v148 = vshrl.u32 %v147, 7
    %v149 = vsub.s32 1, %v148
    %v150 = vrot.slane %v141, %v149
    %v151 = vlaneseq
    %v152 = vshrl.u32 %v151, 7
    %v153 = vsub.s32 2, %v152
    %v154 = vrot.slane %v141, %v153
    %vm158 = vcmask 261120
    %v160 = vsel %vm158, %v121, 0
    %v163 = vsel %vm158, %v122, 0
    %v166 = vsel %vm158, %v123, 0
    %v169 = vsel %vm158, %v124, 0
    %v172 = vsel %vm158, %v125, 0
    %v175 = vsel %vm158, %v126, 0
    %v178 = vsel %vm158, %v127, 0
    %v181 = vsel %vm158, %v128, 0
    %183 = vmatprep.subr.mxu0 %v130
    %184 = vmatpush1.msra.mxu0 %v129
    %185 = vmatprep.subr.mxu0 %v133
    %186 = vmatpush1.msra.mxu0 %v132
    %187 = vmatprep.subr.mxu0 %v136
    %188 = vmatpush1.msra.mxu0 %v135
    %189 = vmatprep.subr.mxu0 %v139
    %190 = vmatpush1.msra.mxu0 %v138
    %191 = vmatprep.subr.mxu0 0.0
    %192 = vmatpush1.msra.mxu0 0.0
    %193 = vmatprep.subr.mxu0 0.0
    %194 = vmatpush1.msra.mxu0 0.0
    %195 = vmatprep.subr.mxu0 0.0
    %196 = vmatpush1.msra.mxu0 0.0
    %197 = vmatprep.subr.mxu0 0.0
    %198 = vmatpush1.msra.mxu0 0.0
    %199 = vmatprep.subr.mxu0 0.0
    %200 = vmatpush1.msra.mxu0 0.0
    %201 = vmatprep.subr.mxu0 0.0
    %202 = vmatpush1.msra.mxu0 0.0
    %203 = vmatprep.subr.mxu0 0.0
    %204 = vmatpush1.msra.mxu0 0.0
    %205 = vmatprep.subr.mxu0 0.0
    %206 = vmatpush1.msra.mxu0 0.0
    %207 = vmatprep.subr.mxu0 0.0
    %208 = vmatpush1.msra.mxu0 0.0
    %209 = vmatprep.subr.mxu0 0.0
    %210 = vmatpush1.msra.mxu0 0.0
    %211 = vmatprep.subr.mxu0 0.0
    %212 = vmatpush1.msra.mxu0 0.0
    %213 = vmatprep.subr.mxu0 0.0
    %214 = vmatpush1.msra.mxu0 0.0
    %215 = vmatprep.subr.mxu0 0.0
    %216 = vmatpush1.msra.mxu0 0.0
    %217 = vmatprep.subr.mxu0 0.0
    %218 = vmatpush1.msra.mxu0 0.0
    %219 = vmatprep.subr.mxu0 0.0
    %220 = vmatpush1.msra.mxu0 0.0
    %221 = vmatprep.subr.mxu0 0.0
    %222 = vmatpush1.msra.mxu0 0.0
    %223 = vmatprep.subr.mxu0 0.0
    %224 = vmatpush1.msra.mxu0 0.0
    %225 = vmatprep.subr.mxu0 0.0
    %226 = vmatpush1.msra.mxu0 0.0
    %227 = vmatprep.subr.mxu0 0.0
    %228 = vmatpush1.msra.mxu0 0.0
    %229 = vmatprep.subr.mxu0 0.0
    %230 = vmatpush1.msra.mxu0 0.0
    %231 = vmatprep.subr.mxu0 0.0
    %232 = vmatpush1.msra.mxu0 0.0
    %233 = vmatprep.subr.mxu0 0.0
    %234 = vmatpush1.msra.mxu0 0.0
    %235 = vmatprep.subr.mxu0 0.0
    %236 = vmatpush1.msra.mxu0 0.0
    %237 = vmatprep.subr.mxu0 0.0
    %238 = vmatpush1.msra.mxu0 0.0
    %239 = vmatprep.subr.mxu0 0.0
    %240 = vmatpush1.msra.mxu0 0.0
    %241 = vmatprep.subr.mxu0 0.0
    %242 = vmatpush1.msra.mxu0 0.0
    %243 = vmatprep.subr.mxu0 0.0
    %244 = vmatpush1.msra.mxu0 0.0
    %245 = vmatprep.subr.mxu0 0.0
    %246 = vmatpush1.msra.mxu0 0.0
    %247 = vmatprep.mubr.f32.mxu0 0.0
    %248 = vmatmul.mubr.f32.gmra.mrb[0].mxu0 %v160
    %v249 = vpop.f32.mrb[0].mxu0
    %v250 = vadd.f32 %v146, %v249
    %v251 = vpop.f32.mrb[0].mxu0
    %v252 = vadd.f32 %v150, %v251
    %253 = vmatprep.mubr.f32.mxu0 0.0
    %254 = vmatmul.mubr.f32.gmra.mrb[0].mxu0 %v163
    %v255 = vpop.f32.mrb[0].mxu0
    %v256 = vadd.f32 %v146, %v255
    %v257 = vpop.f32.mrb[0].mxu0
    %v258 = vadd.f32 %v150, %v257
    %259 = vmatprep.mubr.f32.mxu0 0.0
    %260 = vmatmul.mubr.f32.gmra.mrb[0].mxu0 %v166
    %v261 = vpop.f32.mrb[0].mxu0
    %v262 = vadd.f32 %v146, %v261
    %v263 = vpop.f32.mrb[0].mxu0
    %v264 = vadd.f32 %v150, %v263
    %265 = vmatprep.mubr.f32.mxu0 0.0
    %266 = vmatmul.mubr.f32.gmra.mrb[0].mxu0 %v169
    %v267 = vpop.f32.mrb[0].mxu0
    %v268 = vadd.f32 %v146, %v267
    %v269 = vpop.f32.mrb[0].mxu0
    %v270 = vadd.f32 %v150, %v269
    %271 = vmatprep.mubr.f32.mxu0 0.0
    %272 = vmatmul.mubr.f32.gmra.mrb[0].mxu0 %v172
    %v273 = vpop.f32.mrb[0].mxu0
    %v274 = vadd.f32 %v146, %v273
    %v275 = vpop.f32.mrb[0].mxu0
    %v276 = vadd.f32 %v150, %v275
    %277 = vmatprep.mubr.f32.mxu0 0.0
    %278 = vmatmul.mubr.f32.gmra.mrb[0].mxu0 %v175
    %v279 = vpop.f32.mrb[0].mxu0
    %v280 = vadd.f32 %v146, %v279
    %v281 = vpop.f32.mrb[0].mxu0
    %v282 = vadd.f32 %v150, %v281
    %283 = vmatprep.mubr.f32.mxu0 0.0
    %284 = vmatmul.mubr.f32.gmra.mrb[0].mxu0 %v178
    %v285 = vpop.f32.mrb[0].mxu0
    %v286 = vadd.f32 %v146, %v285
    %v287 = vpop.f32.mrb[0].mxu0
    %v288 = vadd.f32 %v150, %v287
    %289 = vmatprep.mubr.f32.mxu0 0.0
    %290 = vmatmul.mubr.f32.gmra.mrb[0].mxu0 %v181
    %v291 = vpop.f32.mrb[0].mxu0
    %v292 = vadd.f32 %v146, %v291
    %v293 = vpop.f32.mrb[0].mxu0
    %v294 = vadd.f32 %v150, %v293
    %295 = vdwg.mxu0
    %296 = vmatprep.subr.mxu0 0.0
    %297 = vmatpush1.msra.mxu0 %v131
    %298 = vmatprep.subr.mxu0 0.0
    %299 = vmatpush1.msra.mxu0 %v134
    %300 = vmatprep.subr.mxu0 0.0
    %301 = vmatpush1.msra.mxu0 %v137
    %302 = vmatprep.subr.mxu0 0.0
    %303 = vmatpush1.msra.mxu0 %v140
    %304 = vmatprep.subr.mxu0 0.0
    %305 = vmatpush1.msra.mxu0 0.0
    %306 = vmatprep.subr.mxu0 0.0
    %307 = vmatpush1.msra.mxu0 0.0
    %308 = vmatprep.subr.mxu0 0.0
    %309 = vmatpush1.msra.mxu0 0.0
    %310 = vmatprep.subr.mxu0 0.0
    %311 = vmatpush1.msra.mxu0 0.0
    %312 = vmatprep.subr.mxu0 0.0
    %313 = vmatpush1.msra.mxu0 0.0
    %314 = vmatprep.subr.mxu0 0.0
    %315 = vmatpush1.msra.mxu0 0.0
    %316 = vmatprep.subr.mxu0 0.0
    %317 = vmatpush1.msra.mxu0 0.0
    %318 = vmatprep.subr.mxu0 0.0
    %319 = vmatpush1.msra.mxu0 0.0
    %320 = vmatprep.subr.mxu0 0.0
    %321 = vmatpush1.msra.mxu0 0.0
    %322 = vmatprep.subr.mxu0 0.0
    %323 = vmatpush1.msra.mxu0 0.0
    %324 = vmatprep.subr.mxu0 0.0
    %325 = vmatpush1.msra.mxu0 0.0
    %326 = vmatprep.subr.mxu0 0.0
    %327 = vmatpush1.msra.mxu0 0.0
    %328 = vmatprep.subr.mxu0 0.0
    %329 = vmatpush1.msra.mxu0 0.0
    %330 = vmatprep.subr.mxu0 0.0
    %331 = vmatpush1.msra.mxu0 0.0
    %332 = vmatprep.subr.mxu0 0.0
    %333 = vmatpush1.msra.mxu0 0.0
    %334 = vmatprep.subr.mxu0 0.0
    %335 = vmatpush1.msra.mxu0 0.0
    %336 = vmatprep.subr.mxu0 0.0
    %337 = vmatpush1.msra.mxu0 0.0
    %338 = vmatprep.subr.mxu0 0.0
    %339 = vmatpush1.msra.mxu0 0.0
    %340 = vmatprep.subr.mxu0 0.0
    %341 = vmatpush1.msra.mxu0 0.0
    %342 = vmatprep.subr.mxu0 0.0
    %343 = vmatpush1.msra.mxu0 0.0
    %344 = vmatprep.subr.mxu0 0.0
    %345 = vmatpush1.msra.mxu0 0.0
    %346 = vmatprep.subr.mxu0 0.0
    %347 = vmatpush1.msra.mxu0 0.0
    %348 = vmatprep.subr.mxu0 0.0
    %349 = vmatpush1.msra.mxu0 0.0
    %350 = vmatprep.subr.mxu0 0.0
    %351 = vmatpush1.msra.mxu0 0.0
    %352 = vmatprep.subr.mxu0 0.0
    %353 = vmatpush1.msra.mxu0 0.0
    %354 = vmatprep.subr.mxu0 0.0
    %355 = vmatpush1.msra.mxu0 0.0
    %356 = vmatprep.subr.mxu0 0.0
    %357 = vmatpush1.msra.mxu0 0.0
    %358 = vmatprep.subr.mxu0 0.0
    %359 = vmatpush1.msra.mxu0 0.0
    %360 = vmatprep.mubr.f32.mxu0 0.0
    %361 = vmatmul.mubr.f32.gmra.mrb[0].mxu0 %v160
    %v362 = vpop.f32.mrb[0].mxu0
    %v363 = vadd.f32 %v154, %v362
    %v364 = vpop.f32.mrb[0].mxu0
    %365 = vmatprep.mubr.f32.mxu0 0.0
    %366 = vmatmul.mubr.f32.gmra.mrb[0].mxu0 %v163
    %v367 = vpop.f32.mrb[0].mxu0
    %v368 = vadd.f32 %v154, %v367
    %v369 = vpop.f32.mrb[0].mxu0
    %370 = vmatprep.mubr.f32.mxu0 0.0
    %371 = vmatmul.mubr.f32.gmra.mrb[0].mxu0 %v166
    %v372 = vpop.f32.mrb[0].mxu0
    %v373 = vadd.f32 %v154, %v372
    %v374 = vpop.f32.mrb[0].mxu0
    %375 = vmatprep.mubr.f32.mxu0 0.0
    %376 = vmatmul.mubr.f32.gmra.mrb[0].mxu0 %v169
    %v377 = vpop.f32.mrb[0].mxu0
    %v378 = vadd.f32 %v154, %v377
    %v379 = vpop.f32.mrb[0].mxu0
    %380 = vmatprep.mubr.f32.mxu0 0.0
    %381 = vmatmul.mubr.f32.gmra.mrb[0].mxu0 %v172
    %v382 = vpop.f32.mrb[0].mxu0
    %v383 = vadd.f32 %v154, %v382
    %v384 = vpop.f32.mrb[0].mxu0
    %385 = vmatprep.mubr.f32.mxu0 0.0
    %386 = vmatmul.mubr.f32.gmra.mrb[0].mxu0 %v175
    %v387 = vpop.f32.mrb[0].mxu0
    %v388 = vadd.f32 %v154, %v387
    %v389 = vpop.f32.mrb[0].mxu0
    %390 = vmatprep.mubr.f32.mxu0 0.0
    %391 = vmatmul.mubr.f32.gmra.mrb[0].mxu0 %v178
    %v392 = vpop.f32.mrb[0].mxu0
    %v393 = vadd.f32 %v154, %v392
    %v394 = vpop.f32.mrb[0].mxu0
    %395 = vmatprep.mubr.f32.mxu0 0.0
    %396 = vmatmul.mubr.f32.gmra.mrb[0].mxu0 %v181
    %v397 = vpop.f32.mrb[0].mxu0
    %v398 = vadd.f32 %v154, %v397
    %v399 = vpop.f32.mrb[0].mxu0
    %400 = vdwg.mxu0
    %401 = vst [vmem:[#allocation2] sm:$0xff] %v250
    %402 = vst [vmem:[#allocation2 + $0x8] sm:$0xff] %v252
    %403 = vst [vmem:[#allocation2 + $0x10] sm:$0xff] %v363
    %404 = vst [vmem:[#allocation2 + $0x18] sm:$0xff] %v256
    %405 = vst [vmem:[#allocation2 + $0x20] sm:$0xff] %v258
    %406 = vst [vmem:[#allocation2 + $0x28] sm:$0xff] %v368
    %407 = vst [vmem:[#allocation2 + $0x30] sm:$0xff] %v262
    %408 = vst [vmem:[#allocation2 + $0x38] sm:$0xff] %v264
    %409 = vst [vmem:[#allocation2 + $0x40] sm:$0xff] %v373
    %410 = vst [vmem:[#allocation2 + $0x48] sm:$0xff] %v268
    %411 = vst [vmem:[#allocation2 + $0x50] sm:$0xff] %v270
    %412 = vst [vmem:[#allocation2 + $0x58] sm:$0xff] %v378
    %413 = vst [vmem:[#allocation2 + $0x60] sm:$0xff] %v274
    %414 = vst [vmem:[#allocation2 + $0x68] sm:$0xff] %v276
    %415 = vst [vmem:[#allocation2 + $0x70] sm:$0xff] %v383
    %416 = vst [vmem:[#allocation2 + $0x78] sm:$0xff] %v280
    %417 = vst [vmem:[#allocation2 + $0x80] sm:$0xff] %v282
    %418 = vst [vmem:[#allocation2 + $0x88] sm:$0xff] %v388
    %419 = vst [vmem:[#allocation2 + $0x90] sm:$0xff] %v286
    %420 = vst [vmem:[#allocation2 + $0x98] sm:$0xff] %v288
    %421 = vst [vmem:[#allocation2 + $0xa0] sm:$0xff] %v393
    %422 = vst [vmem:[#allocation2 + $0xa8] sm:$0xff] %v292
    %423 = vst [vmem:[#allocation2 + $0xb0] sm:$0xff] %v294
    %424 = vst [vmem:[#allocation2 + $0xb8] sm:$0xff] %v398
    %v425 = vld [vmem:[#allocation10] sm:$0xff]
    %v426 = vld [vmem:[#allocation10 + $0x8] sm:$0xf]
    %v427 = vld [vmem:[#allocation10 + $0xc] sm:$0xff]
    %v428 = vld [vmem:[#allocation10 + $0x14] sm:$0xf]
    %v429 = vld [vmem:[#allocation10 + $0x18] sm:$0xff]
    %v430 = vld [vmem:[#allocation10 + $0x20] sm:$0xf]
    %v431 = vld [vmem:[#allocation10 + $0x24] sm:$0xff]
    %v432 = vld [vmem:[#allocation10 + $0x2c] sm:$0xf]
    %v433 = vld [vmem:[#allocation10 + $0x30] sm:$0xff]
    %v434 = vld [vmem:[#allocation10 + $0x38] sm:$0xf]
    %v435 = vld [vmem:[#allocation10 + $0x3c] sm:$0xff]
    %v436 = vld [vmem:[#allocation10 + $0x44] sm:$0xf]
    %v437 = vld [vmem:[#allocation10 + $0x48] sm:$0xff]
    %v438 = vld [vmem:[#allocation10 + $0x50] sm:$0xf]
    %v439 = vld [vmem:[#allocation10 + $0x54] sm:$0xff]
    %v440 = vld [vmem:[#allocation10 + $0x5c] sm:$0xf]
    %v441 = vld [vmem:[#allocation10 + $0x60] sm:$0xff]
    %v442 = vld [vmem:[#allocation10 + $0x68] sm:$0xf]
    %v443 = vld [vmem:[#allocation10 + $0x6c] sm:$0xff]
    %v444 = vld [vmem:[#allocation10 + $0x74] sm:$0xf]
    %v445 = vld [vmem:[#allocation10 + $0x78] sm:$0xff]
    %v446 = vld [vmem:[#allocation10 + $0x80] sm:$0xf]
    %v447 = vld [vmem:[#allocation10 + $0x84] sm:$0xff]
    %v448 = vld [vmem:[#allocation10 + $0x8c] sm:$0xf]
    %v449 = vld [vmem:[#allocation10 + $0x90] sm:$0xff]
    %v450 = vld [vmem:[#allocation10 + $0x98] sm:$0xf]
    %v451 = vld [vmem:[#allocation10 + $0x9c] sm:$0xff]
    %v452 = vld [vmem:[#allocation10 + $0xa4] sm:$0xf]
    %v453 = vld [vmem:[#allocation10 + $0xa8] sm:$0xff]
    %v454 = vld [vmem:[#allocation10 + $0xb0] sm:$0xf]
    %v455 = vld [vmem:[#allocation10 + $0xb4] sm:$0xff]
    %v456 = vld [vmem:[#allocation10 + $0xbc] sm:$0xf]
    %v457 = vld [vmem:[#allocation13] sm:$0xff]
    %v458 = vld [vmem:[#allocation13 + $0x8] sm:$0xf]
    %v459 = vld [vmem:[#allocation13 + $0xc] sm:$0xff]
    %v460 = vld [vmem:[#allocation13 + $0x14] sm:$0xf]
    %v461 = vld [vmem:[#allocation13 + $0x18] sm:$0xff]
    %v462 = vld [vmem:[#allocation13 + $0x20] sm:$0xf]
    %v463 = vld [vmem:[#allocation13 + $0x24] sm:$0xff]
    %v464 = vld [vmem:[#allocation13 + $0x2c] sm:$0xf]
    %v465 = vld [vmem:[#allocation13 + $0x30] sm:$0xff]
    %v466 = vld [vmem:[#allocation13 + $0x38] sm:$0xf]
    %v467 = vld [vmem:[#allocation13 + $0x3c] sm:$0xff]
    %v468 = vld [vmem:[#allocation13 + $0x44] sm:$0xf]
    %v469 = vld [vmem:[#allocation13 + $0x48] sm:$0xff]
    %v470 = vld [vmem:[#allocation13 + $0x50] sm:$0xf]
    %v471 = vld [vmem:[#allocation13 + $0x54] sm:$0xff]
    %v472 = vld [vmem:[#allocation13 + $0x5c] sm:$0xf]
    %v473 = vld [vmem:[#allocation13 + $0x60] sm:$0xff]
    %v474 = vld [vmem:[#allocation13 + $0x68] sm:$0xf]
    %v475 = vld [vmem:[#allocation13 + $0x6c] sm:$0xff]
    %v476 = vld [vmem:[#allocation13 + $0x74] sm:$0xf]
    %v477 = vld [vmem:[#allocation13 + $0x78] sm:$0xff]
    %v478 = vld [vmem:[#allocation13 + $0x80] sm:$0xf]
    %v479 = vld [vmem:[#allocation13 + $0x84] sm:$0xff]
    %v480 = vld [vmem:[#allocation13 + $0x8c] sm:$0xf]
    %v481 = vld [vmem:[#allocation13 + $0x90] sm:$0xff]
    %v482 = vld [vmem:[#allocation13 + $0x98] sm:$0xf]
    %v483 = vld [vmem:[#allocation13 + $0x9c] sm:$0xff]
    %v484 = vld [vmem:[#allocation13 + $0xa4] sm:$0xf]
    %v485 = vld [vmem:[#allocation13 + $0xa8] sm:$0xff]
    %v486 = vld [vmem:[#allocation13 + $0xb0] sm:$0xf]
    %v487 = vld [vmem:[#allocation13 + $0xb4] sm:$0xff]
    %v488 = vld [vmem:[#allocation13 + $0xbc] sm:$0xf]
    %v489 = vld [vmem:[%s4] sm:$0x1]
    %v491 = vlaneseq
    %v492 = vshrl.u32 %v491, 7
    %v493 = vsub.s32 0, %v492
    %v494 = vrot.slane %v489, %v493
    %v496 = vld [vmem:[%s8] sm:$0x1]
    %v498 = vlaneseq
    %v499 = vshrl.u32 %v498, 7
    %v500 = vsub.s32 0, %v499
    %v501 = vrot.slane %v496, %v500
    %s503 = smul.u32 0, 3
    %s504 = smul.addr %s503, 8
    %s505 = scalar_lea.vmem [#allocation2], %s504
    %v506 = vld [vmem:[%s505] sm:$0xff]
    %v507 = vld [vmem:[%s505 + $0x8] sm:$0xff]
    %v508 = vld [vmem:[%s505 + $0x10] sm:$0xff]
    %v541 = vunpack.c.l.b16 %v425
    %v542 = vunpack.c.h.b16 %v425
    %v543 = vunpack.c.l.b16 %v426
    %v544 = vunpack.c.l.b16 %v427
    %v545 = vunpack.c.h.b16 %v427
    %v546 = vunpack.c.l.b16 %v428
    %v547 = vunpack.c.l.b16 %v429
    %v548 = vunpack.c.h.b16 %v429
    %v549 = vunpack.c.l.b16 %v430
    %v550 = vunpack.c.l.b16 %v431
    %v551 = vunpack.c.h.b16 %v431
    %v552 = vunpack.c.l.b16 %v432
    %v553 = vunpack.c.l.b16 %v433
    %v554 = vunpack.c.h.b16 %v433
    %v555 = vunpack.c.l.b16 %v434
    %v556 = vunpack.c.l.b16 %v435
    %v557 = vunpack.c.h.b16 %v435
    %v558 = vunpack.c.l.b16 %v436
    %v559 = vunpack.c.l.b16 %v437
    %v560 = vunpack.c.h.b16 %v437
    %v561 = vunpack.c.l.b16 %v438
    %v562 = vunpack.c.l.b16 %v439
    %v563 = vunpack.c.h.b16 %v439
    %v564 = vunpack.c.l.b16 %v440
    %v565 = vunpack.c.l.b16 %v441
    %v566 = vunpack.c.h.b16 %v441
    %v567 = vunpack.c.l.b16 %v442
    %v568 = vunpack.c.l.b16 %v443
    %v569 = vunpack.c.h.b16 %v443
    %v570 = vunpack.c.l.b16 %v444
    %v571 = vunpack.c.l.b16 %v445
    %v572 = vunpack.c.h.b16 %v445
    %v573 = vunpack.c.l.b16 %v446
    %v574 = vunpack.c.l.b16 %v447
    %v575 = vunpack.c.h.b16 %v447
    %v576 = vunpack.c.l.b16 %v448
    %v577 = vunpack.c.l.b16 %v449
    %v578 = vunpack.c.h.b16 %v449
    %v579 = vunpack.c.l.b16 %v450
    %v580 = vunpack.c.l.b16 %v451
    %v581 = vunpack.c.h.b16 %v451
    %v582 = vunpack.c.l.b16 %v452
    %v583 = vunpack.c.l.b16 %v453
    %v584 = vunpack.c.h.b16 %v453
    %v585 = vunpack.c.l.b16 %v454
    %v586 = vunpack.c.l.b16 %v455
    %v587 = vunpack.c.h.b16 %v455
    %v588 = vunpack.c.l.b16 %v456
    %v589 = vpack.c.b16 %v544, %v541
    %v590 = vpack.c.b16 %v545, %v542
    %v591 = vpack.c.b16 %v546, %v543
    %v592 = vpack.c.b16 %v550, %v547
    %v593 = vpack.c.b16 %v551, %v548
    %v594 = vpack.c.b16 %v552, %v549
    %v595 = vpack.c.b16 %v556, %v553
    %v596 = vpack.c.b16 %v557, %v554
    %v597 = vpack.c.b16 %v558, %v555
    %v598 = vpack.c.b16 %v562, %v559
    %v599 = vpack.c.b16 %v563, %v560
    %v600 = vpack.c.b16 %v564, %v561
    %v601 = vpack.c.b16 %v568, %v565
    %v602 = vpack.c.b16 %v569, %v566
    %v603 = vpack.c.b16 %v570, %v567
    %v604 = vpack.c.b16 %v574, %v571
    %v605 = vpack.c.b16 %v575, %v572
    %v606 = vpack.c.b16 %v576, %v573
    %v607 = vpack.c.b16 %v580, %v577
    %v608 = vpack.c.b16 %v581, %v578
    %v609 = vpack.c.b16 %v582, %v579
    %v610 = vpack.c.b16 %v586, %v583
    %v611 = vpack.c.b16 %v587, %v584
    %v612 = vpack.c.b16 %v588, %v585
    %637 = vmatprep.subr.bf16.mxu0 %v590
    %638 = vmatpush1.bf16.msra.mxu0 %v589
    %639 = vmatprep.subr.bf16.mxu0 %v593
    %640 = vmatpush1.bf16.msra.mxu0 %v592
    %641 = vmatprep.subr.bf16.mxu0 %v596
    %642 = vmatpush1.bf16.msra.mxu0 %v595
    %643 = vmatprep.subr.bf16.mxu0 %v599
    %644 = vmatpush1.bf16.msra.mxu0 %v598
    %645 = vmatprep.subr.bf16.mxu0 %v602
    %646 = vmatpush1.bf16.msra.mxu0 %v601
    %647 = vmatprep.subr.bf16.mxu0 %v605
    %648 = vmatpush1.bf16.msra.mxu0 %v604
    %649 = vmatprep.subr.bf16.mxu0 %v608
    %650 = vmatpush1.bf16.msra.mxu0 %v607
    %651 = vmatprep.subr.bf16.mxu0 %v611
    %652 = vmatpush1.bf16.msra.mxu0 %v610
    %653 = vmatprep.subr.bf16.mxu0 0
    %654 = vmatpush1.bf16.msra.mxu0 0
    %655 = vmatprep.subr.bf16.mxu0 0
    %656 = vmatpush1.bf16.msra.mxu0 0
    %657 = vmatprep.subr.bf16.mxu0 0
    %658 = vmatpush1.bf16.msra.mxu0 0
    %659 = vmatprep.subr.bf16.mxu0 0
    %660 = vmatpush1.bf16.msra.mxu0 0
    %661 = vmatprep.subr.bf16.mxu0 0
    %662 = vmatpush1.bf16.msra.mxu0 0
    %663 = vmatprep.subr.bf16.mxu0 0
    %664 = vmatpush1.bf16.msra.mxu0 0
    %665 = vmatprep.subr.bf16.mxu0 0
    %666 = vmatpush1.bf16.msra.mxu0 0
    %667 = vmatprep.subr.bf16.mxu0 0
    %668 = vmatpush1.bf16.msra.mxu0 0
    %669 = vmatprep.mubr.bf16.mxu0 0
    %670 = vmatmul.mubr.bf16.gmra.mrb[0].mxu0 0
    %v671 = vpop.f32.mrb[0].mxu0
    %v672 = vadd.f32 0.0, %v671
    %v673 = vpop.f32.mrb[0].mxu0
    %v674 = vadd.f32 0.0, %v673
    %v675 = vpop.f32.mrb[0].mxu0
    %v676 = vpop.f32.mrb[0].mxu0
    %677 = vdwg.mxu0
    %678 = vmatprep.subr.bf16.mxu0 0
    %679 = vmatpush1.bf16.msra.mxu0 %v591
    %680 = vmatprep.subr.bf16.mxu0 0
    %681 = vmatpush1.bf16.msra.mxu0 %v594
    %682 = vmatprep.subr.bf16.mxu0 0
    %683 = vmatpush1.bf16.msra.mxu0 %v597
    %684 = vmatprep.subr.bf16.mxu0 0
    %685 = vmatpush1.bf16.msra.mxu0 %v600
    %686 = vmatprep.subr.bf16.mxu0 0
    %687 = vmatpush1.bf16.msra.mxu0 %v603
    %688 = vmatprep.subr.bf16.mxu0 0
    %689 = vmatpush1.bf16.msra.mxu0 %v606
    %690 = vmatprep.subr.bf16.mxu0 0
    %691 = vmatpush1.bf16.msra.mxu0 %v609
    %692 = vmatprep.subr.bf16.mxu0 0
    %693 = vmatpush1.bf16.msra.mxu0 %v612
    %694 = vmatprep.subr.bf16.mxu0 0
    %695 = vmatpush1.bf16.msra.mxu0 0
    %696 = vmatprep.subr.bf16.mxu0 0
    %697 = vmatpush1.bf16.msra.mxu0 0
    %698 = vmatprep.subr.bf16.mxu0 0
    %699 = vmatpush1.bf16.msra.mxu0 0
    %700 = vmatprep.subr.bf16.mxu0 0
    %701 = vmatpush1.bf16.msra.mxu0 0
    %702 = vmatprep.subr.bf16.mxu0 0
    %703 = vmatpush1.bf16.msra.mxu0 0
    %704 = vmatprep.subr.bf16.mxu0 0
    %705 = vmatpush1.bf16.msra.mxu0 0
    %706 = vmatprep.subr.bf16.mxu0 0
    %707 = vmatpush1.bf16.msra.mxu0 0
    %708 = vmatprep.subr.bf16.mxu0 0
    %709 = vmatpush1.bf16.msra.mxu0 0
    %710 = vmatprep.mubr.bf16.mxu0 0
    %711 = vmatmul.mubr.bf16.gmra.mrb[0].mxu0 0
    %v712 = vpop.f32.mrb[0].mxu0
    %v713 = vadd.f32 0.0, %v712
    %v714 = vpop.f32.mrb[0].mxu0
    %v715 = vpop.f32.mrb[0].mxu0
    %v716 = vpop.f32.mrb[0].mxu0
    %717 = vdwg.mxu0
    %v718 = vadd.f32 %v506, %v672
    %v719 = vxor.u32 %v718, 2147483648
    %v720 = vmul.f32 %v719, 1.442695
    %v721 = vpow.pop %v720
    %v722 = vadd.f32 %v721, 1.0
    %v723 = vrcp.pop %v722
    %v724 = vmul.f32 1.0, %v723
    %v725 = vadd.f32 %v507, %v674
    %v726 = vxor.u32 %v725, 2147483648
    %v727 = vmul.f32 %v726, 1.442695
    %v728 = vpow.pop %v727
    %v729 = vadd.f32 %v728, 1.0
    %v730 = vrcp.pop %v729
    %v731 = vmul.f32 1.0, %v730
    %v732 = vadd.f32 %v713, %v494
    %v733 = vmul.f32 %v724, %v732
    %v734 = vadd.f32 %v508, %v733
    %v735 = vtanh.pop %v734
    %v736 = vsub.f32 1.0, %v731
    %v737 = vmul.f32 %v736, %v735
    %v738 = vmul.f32 %v731, 0.0
    %v739 = vadd.f32 %v737, %v738
    %740 = vst [vmem:[#allocation3] sm:$0xff] %v739
    %s741 = smul.u32 1, 3
    %s742 = smul.addr %s741, 8
    %s743 = scalar_lea.vmem [#allocation2], %s742
    %v744 = vld [vmem:[%s743] sm:$0xff]
    %v745 = vld [vmem:[%s743 + $0x8] sm:$0xff]
    %v746 = vld [vmem:[%s743 + $0x10] sm:$0xff]
    %v747 = vpack.c.bf16 %v739, %v739
    %748 = vmatprep.subr.bf16.mxu0 %v590
    %749 = vmatpush1.bf16.msra.mxu0 %v589
    %750 = vmatprep.subr.bf16.mxu0 %v593
    %751 = vmatpush1.bf16.msra.mxu0 %v592
    %752 = vmatprep.subr.bf16.mxu0 %v596
    %753 = vmatpush1.bf16.msra.mxu0 %v595
    %754 = vmatprep.subr.bf16.mxu0 %v599
    %755 = vmatpush1.bf16.msra.mxu0 %v598
    %756 = vmatprep.subr.bf16.mxu0 %v602
    %757 = vmatpush1.bf16.msra.mxu0 %v601
    %758 = vmatprep.subr.bf16.mxu0 %v605
    %759 = vmatpush1.bf16.msra.mxu0 %v604
    %760 = vmatprep.subr.bf16.mxu0 %v608
    %761 = vmatpush1.bf16.msra.mxu0 %v607
    %762 = vmatprep.subr.bf16.mxu0 %v611
    %763 = vmatpush1.bf16.msra.mxu0 %v610
    %764 = vmatprep.subr.bf16.mxu0 0
    %765 = vmatpush1.bf16.msra.mxu0 0
    %766 = vmatprep.subr.bf16.mxu0 0
    %767 = vmatpush1.bf16.msra.mxu0 0
    %768 = vmatprep.subr.bf16.mxu0 0
    %769 = vmatpush1.bf16.msra.mxu0 0
    %770 = vmatprep.subr.bf16.mxu0 0
    %771 = vmatpush1.bf16.msra.mxu0 0
    %772 = vmatprep.subr.bf16.mxu0 0
    %773 = vmatpush1.bf16.msra.mxu0 0
    %774 = vmatprep.subr.bf16.mxu0 0
    %775 = vmatpush1.bf16.msra.mxu0 0
    %776 = vmatprep.subr.bf16.mxu0 0
    %777 = vmatpush1.bf16.msra.mxu0 0
    %778 = vmatprep.subr.bf16.mxu0 0
    %779 = vmatpush1.bf16.msra.mxu0 0
    %780 = vmatprep.mubr.bf16.mxu0 0
    %781 = vmatmul.mubr.bf16.gmra.mrb[0].mxu0 %v747
    %v782 = vpop.f32.mrb[0].mxu0
    %v783 = vadd.f32 0.0, %v782
    %v784 = vpop.f32.mrb[0].mxu0
    %v785 = vadd.f32 0.0, %v784
    %v786 = vpop.f32.mrb[0].mxu0
    %v787 = vpop.f32.mrb[0].mxu0
    %788 = vdwg.mxu0
    %789 = vmatprep.subr.bf16.mxu0 0
    %790 = vmatpush1.bf16.msra.mxu0 %v591
    %791 = vmatprep.subr.bf16.mxu0 0
    %792 = vmatpush1.bf16.msra.mxu0 %v594
    %793 = vmatprep.subr.bf16.mxu0 0
    %794 = vmatpush1.bf16.msra.mxu0 %v597
    %795 = vmatprep.subr.bf16.mxu0 0
    %796 = vmatpush1.bf16.msra.mxu0 %v600
    %797 = vmatprep.subr.bf16.mxu0 0
    %798 = vmatpush1.bf16.msra.mxu0 %v603
    %799 = vmatprep.subr.bf16.mxu0 0
    %800 = vmatpush1.bf16.msra.mxu0 %v606
    %801 = vmatprep.subr.bf16.mxu0 0
    %802 = vmatpush1.bf16.msra.mxu0 %v609
    %803 = vmatprep.subr.bf16.mxu0 0
    %804 = vmatpush1.bf16.msra.mxu0 %v612
    %805 = vmatprep.subr.bf16.mxu0 0
    %806 = vmatpush1.bf16.msra.mxu0 0
    %807 = vmatprep.subr.bf16.mxu0 0
    %808 = vmatpush1.bf16.msra.mxu0 0
    %809 = vmatprep.subr.bf16.mxu0 0
    %810 = vmatpush1.bf16.msra.mxu0 0
    %811 = vmatprep.subr.bf16.mxu0 0
    %812 = vmatpush1.bf16.msra.mxu0 0
    %813 = vmatprep.subr.bf16.mxu0 0
    %814 = vmatpush1.bf16.msra.mxu0 0
    %815 = vmatprep.subr.bf16.mxu0 0
    %816 = vmatpush1.bf16.msra.mxu0 0
    %817 = vmatprep.subr.bf16.mxu0 0
    %818 = vmatpush1.bf16.msra.mxu0 0
    %819 = vmatprep.subr.bf16.mxu0 0
    %820 = vmatpush1.bf16.msra.mxu0 0
    %821 = vmatprep.mubr.bf16.mxu0 0
    %822 = vmatmul.mubr.bf16.gmra.mrb[0].mxu0 %v747
    %v823 = vpop.f32.mrb[0].mxu0
    %v824 = vadd.f32 0.0, %v823
    %v825 = vpop.f32.mrb[0].mxu0
    %v826 = vpop.f32.mrb[0].mxu0
    %v827 = vpop.f32.mrb[0].mxu0
    %828 = vdwg.mxu0
    %v829 = vadd.f32 %v744, %v783
    %v830 = vxor.u32 %v829, 2147483648
    %v831 = vmul.f32 %v830, 1.442695
    %v832 = vpow.pop %v831
    %v833 = vadd.f32 %v832, 1.0
    %v834 = vrcp.pop %v833
    %v835 = vmul.f32 1.0, %v834
    %v836 = vadd.f32 %v745, %v785
    %v837 = vxor.u32 %v836, 2147483648
    %v838 = vmul.f32 %v837, 1.442695
    %v839 = vpow.pop %v838
    %v840 = vadd.f32 %v839, 1.0
    %v841 = vrcp.pop %v840
    %v842 = vmul.f32 1.0, %v841
    %v843 = vadd.f32 %v824, %v494
    %v844 = vmul.f32 %v835, %v843
    %v845 = vadd.f32 %v746, %v844
    %v846 = vtanh.pop %v845
    %v847 = vsub.f32 1.0, %v842
    %v848 = vmul.f32 %v847, %v846
    %v849 = vmul.f32 %v842, %v739
    %v850 = vadd.f32 %v848, %v849
    %s851 = scalar_lea.vmem [#allocation3], 8
    %852 = vst [vmem:[%s851] sm:$0xff] %v850
    %s853 = smul.u32 2, 3
    %s854 = smul.addr %s853, 8
    %s855 = scalar_lea.vmem [#allocation2], %s854
    %v856 = vld [vmem:[%s855] sm:$0xff]
    %v857 = vld [vmem:[%s855 + $0x8] sm:$0xff]
    %v858 = vld [vmem:[%s855 + $0x10] sm:$0xff]
    %v859 = vpack.c.bf16 %v850, %v850
    %860 = vmatprep.subr.bf16.mxu0 %v590
    %861 = vmatpush1.bf16.msra.mxu0 %v589
    %862 = vmatprep.subr.bf16.mxu0 %v593
    %863 = vmatpush1.bf16.msra.mxu0 %v592
    %864 = vmatprep.subr.bf16.mxu0 %v596
    %865 = vmatpush1.bf16.msra.mxu0 %v595
    %866 = vmatprep.subr.bf16.mxu0 %v599
    %867 = vmatpush1.bf16.msra.mxu0 %v598
    %868 = vmatprep.subr.bf16.mxu0 %v602
    %869 = vmatpush1.bf16.msra.mxu0 %v601
    %870 = vmatprep.subr.bf16.mxu0 %v605
    %871 = vmatpush1.bf16.msra.mxu0 %v604
    %872 = vmatprep.subr.bf16.mxu0 %v608
    %873 = vmatpush1.bf16.msra.mxu0 %v607
    %874 = vmatprep.subr.bf16.mxu0 %v611
    %875 = vmatpush1.bf16.msra.mxu0 %v610
    %876 = vmatprep.subr.bf16.mxu0 0
    %877 = vmatpush1.bf16.msra.mxu0 0
    %878 = vmatprep.subr.bf16.mxu0 0
    %879 = vmatpush1.bf16.msra.mxu0 0
    %880 = vmatprep.subr.bf16.mxu0 0
    %881 = vmatpush1.bf16.msra.mxu0 0
    %882 = vmatprep.subr.bf16.mxu0 0
    %883 = vmatpush1.bf16.msra.mxu0 0
    %884 = vmatprep.subr.bf16.mxu0 0
    %885 = vmatpush1.bf16.msra.mxu0 0
    %886 = vmatprep.subr.bf16.mxu0 0
    %887 = vmatpush1.bf16.msra.mxu0 0
    %888 = vmatprep.subr.bf16.mxu0 0
    %889 = vmatpush1.bf16.msra.mxu0 0
    %890 = vmatprep.subr.bf16.mxu0 0
    %891 = vmatpush1.bf16.msra.mxu0 0
    %892 = vmatprep.mubr.bf16.mxu0 0
    %893 = vmatmul.mubr.bf16.gmra.mrb[0].mxu0 %v859
    %v894 = vpop.f32.mrb[0].mxu0
    %v895 = vadd.f32 0.0, %v894
    %v896 = vpop.f32.mrb[0].mxu0
    %v897 = vadd.f32 0.0, %v896
    %v898 = vpop.f32.mrb[0].mxu0
    %v899 = vpop.f32.mrb[0].mxu0
    %900 = vdwg.mxu0
    %901 = vmatprep.subr.bf16.mxu0 0
    %902 = vmatpush1.bf16.msra.mxu0 %v591
    %903 = vmatprep.subr.bf16.mxu0 0
    %904 = vmatpush1.bf16.msra.mxu0 %v594
    %905 = vmatprep.subr.bf16.mxu0 0
    %906 = vmatpush1.bf16.msra.mxu0 %v597
    %907 = vmatprep.subr.bf16.mxu0 0
    %908 = vmatpush1.bf16.msra.mxu0 %v600
    %909 = vmatprep.subr.bf16.mxu0 0
    %910 = vmatpush1.bf16.msra.mxu0 %v603
    %911 = vmatprep.subr.bf16.mxu0 0
    %912 = vmatpush1.bf16.msra.mxu0 %v606
    %913 = vmatprep.subr.bf16.mxu0 0
    %914 = vmatpush1.bf16.msra.mxu0 %v609
    %915 = vmatprep.subr.bf16.mxu0 0
    %916 = vmatpush1.bf16.msra.mxu0 %v612
    %917 = vmatprep.subr.bf16.mxu0 0
    %918 = vmatpush1.bf16.msra.mxu0 0
    %919 = vmatprep.subr.bf16.mxu0 0
    %920 = vmatpush1.bf16.msra.mxu0 0
    %921 = vmatprep.subr.bf16.mxu0 0
    %922 = vmatpush1.bf16.msra.mxu0 0
    %923 = vmatprep.subr.bf16.mxu0 0
    %924 = vmatpush1.bf16.msra.mxu0 0
    %925 = vmatprep.subr.bf16.mxu0 0
    %926 = vmatpush1.bf16.msra.mxu0 0
    %927 = vmatprep.subr.bf16.mxu0 0
    %928 = vmatpush1.bf16.msra.mxu0 0
    %929 = vmatprep.subr.bf16.mxu0 0
    %930 = vmatpush1.bf16.msra.mxu0 0
    %931 = vmatprep.subr.bf16.mxu0 0
    %932 = vmatpush1.bf16.msra.mxu0 0
    %933 = vmatprep.mubr.bf16.mxu0 0
    %934 = vmatmul.mubr.bf16.gmra.mrb[0].mxu0 %v859
    %v935 = vpop.f32.mrb[0].mxu0
    %v936 = vadd.f32 0.0, %v935
    %v937 = vpop.f32.mrb[0].mxu0
    %v938 = vpop.f32.mrb[0].mxu0
    %v939 = vpop.f32.mrb[0].mxu0
    %940 = vdwg.mxu0
    %v941 = vadd.f32 %v856, %v895
    %v942 = vxor.u32 %v941, 2147483648
    %v943 = vmul.f32 %v942, 1.442695
    %v944 = vpow.pop %v943
    %v945 = vadd.f32 %v944, 1.0
    %v946 = vrcp.pop %v945
    %v947 = vmul.f32 1.0, %v946
    %v948 = vadd.f32 %v857, %v897
    %v949 = vxor.u32 %v948, 2147483648
    %v950 = vmul.f32 %v949, 1.442695
    %v951 = vpow.pop %v950
    %v952 = vadd.f32 %v951, 1.0
    %v953 = vrcp.pop %v952
    %v954 = vmul.f32 1.0, %v953
    %v955 = vadd.f32 %v936, %v494
    %v956 = vmul.f32 %v947, %v955
    %v957 = vadd.f32 %v858, %v956
    %v958 = vtanh.pop %v957
    %v959 = vsub.f32 1.0, %v954
    %v960 = vmul.f32 %v959, %v958
    %v961 = vmul.f32 %v954, %v850
    %v962 = vadd.f32 %v960, %v961
    %s963 = scalar_lea.vmem [#allocation3], 16
    %964 = vst [vmem:[%s963] sm:$0xff] %v962
    %s965 = smul.u32 3, 3
    %s966 = smul.addr %s965, 8
    %s967 = scalar_lea.vmem [#allocation2], %s966
    %v968 = vld [vmem:[%s967] sm:$0xff]
    %v969 = vld [vmem:[%s967 + $0x8] sm:$0xff]
    %v970 = vld [vmem:[%s967 + $0x10] sm:$0xff]
    %v971 = vpack.c.bf16 %v962, %v962
    %972 = vmatprep.subr.bf16.mxu0 %v590
    %973 = vmatpush1.bf16.msra.mxu0 %v589
    %974 = vmatprep.subr.bf16.mxu0 %v593
    %975 = vmatpush1.bf16.msra.mxu0 %v592
    %976 = vmatprep.subr.bf16.mxu0 %v596
    %977 = vmatpush1.bf16.msra.mxu0 %v595
    %978 = vmatprep.subr.bf16.mxu0 %v599
    %979 = vmatpush1.bf16.msra.mxu0 %v598
    %980 = vmatprep.subr.bf16.mxu0 %v602
    %981 = vmatpush1.bf16.msra.mxu0 %v601
    %982 = vmatprep.subr.bf16.mxu0 %v605
    %983 = vmatpush1.bf16.msra.mxu0 %v604
    %984 = vmatprep.subr.bf16.mxu0 %v608
    %985 = vmatpush1.bf16.msra.mxu0 %v607
    %986 = vmatprep.subr.bf16.mxu0 %v611
    %987 = vmatpush1.bf16.msra.mxu0 %v610
    %988 = vmatprep.subr.bf16.mxu0 0
    %989 = vmatpush1.bf16.msra.mxu0 0
    %990 = vmatprep.subr.bf16.mxu0 0
    %991 = vmatpush1.bf16.msra.mxu0 0
    %992 = vmatprep.subr.bf16.mxu0 0
    %993 = vmatpush1.bf16.msra.mxu0 0
    %994 = vmatprep.subr.bf16.mxu0 0
    %995 = vmatpush1.bf16.msra.mxu0 0
    %996 = vmatprep.subr.bf16.mxu0 0
    %997 = vmatpush1.bf16.msra.mxu0 0
    %998 = vmatprep.subr.bf16.mxu0 0
    %999 = vmatpush1.bf16.msra.mxu0 0
    %1000 = vmatprep.subr.bf16.mxu0 0
    %1001 = vmatpush1.bf16.msra.mxu0 0
    %1002 = vmatprep.subr.bf16.mxu0 0
    %1003 = vmatpush1.bf16.msra.mxu0 0
    %1004 = vmatprep.mubr.bf16.mxu0 0
    %1005 = vmatmul.mubr.bf16.gmra.mrb[0].mxu0 %v971
    %v1006 = vpop.f32.mrb[0].mxu0
    %v1007 = vadd.f32 0.0, %v1006
    %v1008 = vpop.f32.mrb[0].mxu0
    %v1009 = vadd.f32 0.0, %v1008
    %v1010 = vpop.f32.mrb[0].mxu0
    %v1011 = vpop.f32.mrb[0].mxu0
    %1012 = vdwg.mxu0
    %1013 = vmatprep.subr.bf16.mxu0 0
    %1014 = vmatpush1.bf16.msra.mxu0 %v591
    %1015 = vmatprep.subr.bf16.mxu0 0
    %1016 = vmatpush1.bf16.msra.mxu0 %v594
    %1017 = vmatprep.subr.bf16.mxu0 0
    %1018 = vmatpush1.bf16.msra.mxu0 %v597
    %1019 = vmatprep.subr.bf16.mxu0 0
    %1020 = vmatpush1.bf16.msra.mxu0 %v600
    %1021 = vmatprep.subr.bf16.mxu0 0
    %1022 = vmatpush1.bf16.msra.mxu0 %v603
    %1023 = vmatprep.subr.bf16.mxu0 0
    %1024 = vmatpush1.bf16.msra.mxu0 %v606
    %1025 = vmatprep.subr.bf16.mxu0 0
    %1026 = vmatpush1.bf16.msra.mxu0 %v609
    %1027 = vmatprep.subr.bf16.mxu0 0
    %1028 = vmatpush1.bf16.msra.mxu0 %v612
    %1029 = vmatprep.subr.bf16.mxu0 0
    %1030 = vmatpush1.bf16.msra.mxu0 0
    %1031 = vmatprep.subr.bf16.mxu0 0
    %1032 = vmatpush1.bf16.msra.mxu0 0
    %1033 = vmatprep.subr.bf16.mxu0 0
    %1034 = vmatpush1.bf16.msra.mxu0 0
    %1035 = vmatprep.subr.bf16.mxu0 0
    %1036 = vmatpush1.bf16.msra.mxu0 0
    %1037 = vmatprep.subr.bf16.mxu0 0
    %1038 = vmatpush1.bf16.msra.mxu0 0
    %1039 = vmatprep.subr.bf16.mxu0 0
    %1040 = vmatpush1.bf16.msra.mxu0 0
    %1041 = vmatprep.subr.bf16.mxu0 0
    %1042 = vmatpush1.bf16.msra.mxu0 0
    %1043 = vmatprep.subr.bf16.mxu0 0
    %1044 = vmatpush1.bf16.msra.mxu0 0
    %1045 = vmatprep.mubr.bf16.mxu0 0
    %1046 = vmatmul.mubr.bf16.gmra.mrb[0].mxu0 %v971
    %v1047 = vpop.f32.mrb[0].mxu0
    %v1048 = vadd.f32 0.0, %v1047
    %v1049 = vpop.f32.mrb[0].mxu0
    %v1050 = vpop.f32.mrb[0].mxu0
    %v1051 = vpop.f32.mrb[0].mxu0
    %1052 = vdwg.mxu0
    %v1053 = vadd.f32 %v968, %v1007
    %v1054 = vxor.u32 %v1053, 2147483648
    %v1055 = vmul.f32 %v1054, 1.442695
    %v1056 = vpow.pop %v1055
    %v1057 = vadd.f32 %v1056, 1.0
    %v1058 = vrcp.pop %v1057
    %v1059 = vmul.f32 1.0, %v1058
    %v1060 = vadd.f32 %v969, %v1009
    %v1061 = vxor.u32 %v1060, 2147483648
    %v1062 = vmul.f32 %v1061, 1.442695
    %v1063 = vpow.pop %v1062
    %v1064 = vadd.f32 %v1063, 1.0
    %v1065 = vrcp.pop %v1064
    %v1066 = vmul.f32 1.0, %v1065
    %v1067 = vadd.f32 %v1048, %v494
    %v1068 = vmul.f32 %v1059, %v1067
    %v1069 = vadd.f32 %v970, %v1068
    %v1070 = vtanh.pop %v1069
    %v1071 = vsub.f32 1.0, %v1066
    %v1072 = vmul.f32 %v1071, %v1070
    %v1073 = vmul.f32 %v1066, %v962
    %v1074 = vadd.f32 %v1072, %v1073
    %s1075 = scalar_lea.vmem [#allocation3], 24
    %1076 = vst [vmem:[%s1075] sm:$0xff] %v1074
    %s1077 = smul.u32 4, 3
    %s1078 = smul.addr %s1077, 8
    %s1079 = scalar_lea.vmem [#allocation2], %s1078
    %v1080 = vld [vmem:[%s1079] sm:$0xff]
    %v1081 = vld [vmem:[%s1079 + $0x8] sm:$0xff]
    %v1082 = vld [vmem:[%s1079 + $0x10] sm:$0xff]
    %v1083 = vpack.c.bf16 %v1074, %v1074
    %1084 = vmatprep.subr.bf16.mxu0 %v590
    %1085 = vmatpush1.bf16.msra.mxu0 %v589
    %1086 = vmatprep.subr.bf16.mxu0 %v593
    %1087 = vmatpush1.bf16.msra.mxu0 %v592
    %1088 = vmatprep.subr.bf16.mxu0 %v596
    %1089 = vmatpush1.bf16.msra.mxu0 %v595
    %1090 = vmatprep.subr.bf16.mxu0 %v599
    %1091 = vmatpush1.bf16.msra.mxu0 %v598
    %1092 = vmatprep.subr.bf16.mxu0 %v602
    %1093 = vmatpush1.bf16.msra.mxu0 %v601
    %1094 = vmatprep.subr.bf16.mxu0 %v605
    %1095 = vmatpush1.bf16.msra.mxu0 %v604
    %1096 = vmatprep.subr.bf16.mxu0 %v608
    %1097 = vmatpush1.bf16.msra.mxu0 %v607
    %1098 = vmatprep.subr.bf16.mxu0 %v611
    %1099 = vmatpush1.bf16.msra.mxu0 %v610
    %1100 = vmatprep.subr.bf16.mxu0 0
    %1101 = vmatpush1.bf16.msra.mxu0 0
    %1102 = vmatprep.subr.bf16.mxu0 0
    %1103 = vmatpush1.bf16.msra.mxu0 0
    %1104 = vmatprep.subr.bf16.mxu0 0
    %1105 = vmatpush1.bf16.msra.mxu0 0
    %1106 = vmatprep.subr.bf16.mxu0 0
    %1107 = vmatpush1.bf16.msra.mxu0 0
    %1108 = vmatprep.subr.bf16.mxu0 0
    %1109 = vmatpush1.bf16.msra.mxu0 0
    %1110 = vmatprep.subr.bf16.mxu0 0
    %1111 = vmatpush1.bf16.msra.mxu0 0
    %1112 = vmatprep.subr.bf16.mxu0 0
    %1113 = vmatpush1.bf16.msra.mxu0 0
    %1114 = vmatprep.subr.bf16.mxu0 0
    %1115 = vmatpush1.bf16.msra.mxu0 0
    %1116 = vmatprep.mubr.bf16.mxu0 0
    %1117 = vmatmul.mubr.bf16.gmra.mrb[0].mxu0 %v1083
    %v1118 = vpop.f32.mrb[0].mxu0
    %v1119 = vadd.f32 0.0, %v1118
    %v1120 = vpop.f32.mrb[0].mxu0
    %v1121 = vadd.f32 0.0, %v1120
    %v1122 = vpop.f32.mrb[0].mxu0
    %v1123 = vpop.f32.mrb[0].mxu0
    %1124 = vdwg.mxu0
    %1125 = vmatprep.subr.bf16.mxu0 0
    %1126 = vmatpush1.bf16.msra.mxu0 %v591
    %1127 = vmatprep.subr.bf16.mxu0 0
    %1128 = vmatpush1.bf16.msra.mxu0 %v594
    %1129 = vmatprep.subr.bf16.mxu0 0
    %1130 = vmatpush1.bf16.msra.mxu0 %v597
    %1131 = vmatprep.subr.bf16.mxu0 0
    %1132 = vmatpush1.bf16.msra.mxu0 %v600
    %1133 = vmatprep.subr.bf16.mxu0 0
    %1134 = vmatpush1.bf16.msra.mxu0 %v603
    %1135 = vmatprep.subr.bf16.mxu0 0
    %1136 = vmatpush1.bf16.msra.mxu0 %v606
    %1137 = vmatprep.subr.bf16.mxu0 0
    %1138 = vmatpush1.bf16.msra.mxu0 %v609
    %1139 = vmatprep.subr.bf16.mxu0 0
    %1140 = vmatpush1.bf16.msra.mxu0 %v612
    %1141 = vmatprep.subr.bf16.mxu0 0
    %1142 = vmatpush1.bf16.msra.mxu0 0
    %1143 = vmatprep.subr.bf16.mxu0 0
    %1144 = vmatpush1.bf16.msra.mxu0 0
    %1145 = vmatprep.subr.bf16.mxu0 0
    %1146 = vmatpush1.bf16.msra.mxu0 0
    %1147 = vmatprep.subr.bf16.mxu0 0
    %1148 = vmatpush1.bf16.msra.mxu0 0
    %1149 = vmatprep.subr.bf16.mxu0 0
    %1150 = vmatpush1.bf16.msra.mxu0 0
    %1151 = vmatprep.subr.bf16.mxu0 0
    %1152 = vmatpush1.bf16.msra.mxu0 0
    %1153 = vmatprep.subr.bf16.mxu0 0
    %1154 = vmatpush1.bf16.msra.mxu0 0
    %1155 = vmatprep.subr.bf16.mxu0 0
    %1156 = vmatpush1.bf16.msra.mxu0 0
    %1157 = vmatprep.mubr.bf16.mxu0 0
    %1158 = vmatmul.mubr.bf16.gmra.mrb[0].mxu0 %v1083
    %v1159 = vpop.f32.mrb[0].mxu0
    %v1160 = vadd.f32 0.0, %v1159
    %v1161 = vpop.f32.mrb[0].mxu0
    %v1162 = vpop.f32.mrb[0].mxu0
    %v1163 = vpop.f32.mrb[0].mxu0
    %1164 = vdwg.mxu0
    %v1165 = vadd.f32 %v1080, %v1119
    %v1166 = vxor.u32 %v1165, 2147483648
    %v1167 = vmul.f32 %v1166, 1.442695
    %v1168 = vpow.pop %v1167
    %v1169 = vadd.f32 %v1168, 1.0
    %v1170 = vrcp.pop %v1169
    %v1171 = vmul.f32 1.0, %v1170
    %v1172 = vadd.f32 %v1081, %v1121
    %v1173 = vxor.u32 %v1172, 2147483648
    %v1174 = vmul.f32 %v1173, 1.442695
    %v1175 = vpow.pop %v1174
    %v1176 = vadd.f32 %v1175, 1.0
    %v1177 = vrcp.pop %v1176
    %v1178 = vmul.f32 1.0, %v1177
    %v1179 = vadd.f32 %v1160, %v494
    %v1180 = vmul.f32 %v1171, %v1179
    %v1181 = vadd.f32 %v1082, %v1180
    %v1182 = vtanh.pop %v1181
    %v1183 = vsub.f32 1.0, %v1178
    %v1184 = vmul.f32 %v1183, %v1182
    %v1185 = vmul.f32 %v1178, %v1074
    %v1186 = vadd.f32 %v1184, %v1185
    %s1187 = scalar_lea.vmem [#allocation3], 32
    %1188 = vst [vmem:[%s1187] sm:$0xff] %v1186
    %s1189 = smul.u32 5, 3
    %s1190 = smul.addr %s1189, 8
    %s1191 = scalar_lea.vmem [#allocation2], %s1190
    %v1192 = vld [vmem:[%s1191] sm:$0xff]
    %v1193 = vld [vmem:[%s1191 + $0x8] sm:$0xff]
    %v1194 = vld [vmem:[%s1191 + $0x10] sm:$0xff]
    %v1195 = vpack.c.bf16 %v1186, %v1186
    %1196 = vmatprep.subr.bf16.mxu0 %v590
    %1197 = vmatpush1.bf16.msra.mxu0 %v589
    %1198 = vmatprep.subr.bf16.mxu0 %v593
    %1199 = vmatpush1.bf16.msra.mxu0 %v592
    %1200 = vmatprep.subr.bf16.mxu0 %v596
    %1201 = vmatpush1.bf16.msra.mxu0 %v595
    %1202 = vmatprep.subr.bf16.mxu0 %v599
    %1203 = vmatpush1.bf16.msra.mxu0 %v598
    %1204 = vmatprep.subr.bf16.mxu0 %v602
    %1205 = vmatpush1.bf16.msra.mxu0 %v601
    %1206 = vmatprep.subr.bf16.mxu0 %v605
    %1207 = vmatpush1.bf16.msra.mxu0 %v604
    %1208 = vmatprep.subr.bf16.mxu0 %v608
    %1209 = vmatpush1.bf16.msra.mxu0 %v607
    %1210 = vmatprep.subr.bf16.mxu0 %v611
    %1211 = vmatpush1.bf16.msra.mxu0 %v610
    %1212 = vmatprep.subr.bf16.mxu0 0
    %1213 = vmatpush1.bf16.msra.mxu0 0
    %1214 = vmatprep.subr.bf16.mxu0 0
    %1215 = vmatpush1.bf16.msra.mxu0 0
    %1216 = vmatprep.subr.bf16.mxu0 0
    %1217 = vmatpush1.bf16.msra.mxu0 0
    %1218 = vmatprep.subr.bf16.mxu0 0
    %1219 = vmatpush1.bf16.msra.mxu0 0
    %1220 = vmatprep.subr.bf16.mxu0 0
    %1221 = vmatpush1.bf16.msra.mxu0 0
    %1222 = vmatprep.subr.bf16.mxu0 0
    %1223 = vmatpush1.bf16.msra.mxu0 0
    %1224 = vmatprep.subr.bf16.mxu0 0
    %1225 = vmatpush1.bf16.msra.mxu0 0
    %1226 = vmatprep.subr.bf16.mxu0 0
    %1227 = vmatpush1.bf16.msra.mxu0 0
    %1228 = vmatprep.mubr.bf16.mxu0 0
    %1229 = vmatmul.mubr.bf16.gmra.mrb[0].mxu0 %v1195
    %v1230 = vpop.f32.mrb[0].mxu0
    %v1231 = vadd.f32 0.0, %v1230
    %v1232 = vpop.f32.mrb[0].mxu0
    %v1233 = vadd.f32 0.0, %v1232
    %v1234 = vpop.f32.mrb[0].mxu0
    %v1235 = vpop.f32.mrb[0].mxu0
    %1236 = vdwg.mxu0
    %1237 = vmatprep.subr.bf16.mxu0 0
    %1238 = vmatpush1.bf16.msra.mxu0 %v591
    %1239 = vmatprep.subr.bf16.mxu0 0
    %1240 = vmatpush1.bf16.msra.mxu0 %v594
    %1241 = vmatprep.subr.bf16.mxu0 0
    %1242 = vmatpush1.bf16.msra.mxu0 %v597
    %1243 = vmatprep.subr.bf16.mxu0 0
    %1244 = vmatpush1.bf16.msra.mxu0 %v600
    %1245 = vmatprep.subr.bf16.mxu0 0
    %1246 = vmatpush1.bf16.msra.mxu0 %v603
    %1247 = vmatprep.subr.bf16.mxu0 0
    %1248 = vmatpush1.bf16.msra.mxu0 %v606
    %1249 = vmatprep.subr.bf16.mxu0 0
    %1250 = vmatpush1.bf16.msra.mxu0 %v609
    %1251 = vmatprep.subr.bf16.mxu0 0
    %1252 = vmatpush1.bf16.msra.mxu0 %v612
    %1253 = vmatprep.subr.bf16.mxu0 0
    %1254 = vmatpush1.bf16.msra.mxu0 0
    %1255 = vmatprep.subr.bf16.mxu0 0
    %1256 = vmatpush1.bf16.msra.mxu0 0
    %1257 = vmatprep.subr.bf16.mxu0 0
    %1258 = vmatpush1.bf16.msra.mxu0 0
    %1259 = vmatprep.subr.bf16.mxu0 0
    %1260 = vmatpush1.bf16.msra.mxu0 0
    %1261 = vmatprep.subr.bf16.mxu0 0
    %1262 = vmatpush1.bf16.msra.mxu0 0
    %1263 = vmatprep.subr.bf16.mxu0 0
    %1264 = vmatpush1.bf16.msra.mxu0 0
    %1265 = vmatprep.subr.bf16.mxu0 0
    %1266 = vmatpush1.bf16.msra.mxu0 0
    %1267 = vmatprep.subr.bf16.mxu0 0
    %1268 = vmatpush1.bf16.msra.mxu0 0
    %1269 = vmatprep.mubr.bf16.mxu0 0
    %1270 = vmatmul.mubr.bf16.gmra.mrb[0].mxu0 %v1195
    %v1271 = vpop.f32.mrb[0].mxu0
    %v1272 = vadd.f32 0.0, %v1271
    %v1273 = vpop.f32.mrb[0].mxu0
    %v1274 = vpop.f32.mrb[0].mxu0
    %v1275 = vpop.f32.mrb[0].mxu0
    %1276 = vdwg.mxu0
    %v1277 = vadd.f32 %v1192, %v1231
    %v1278 = vxor.u32 %v1277, 2147483648
    %v1279 = vmul.f32 %v1278, 1.442695
    %v1280 = vpow.pop %v1279
    %v1281 = vadd.f32 %v1280, 1.0
    %v1282 = vrcp.pop %v1281
    %v1283 = vmul.f32 1.0, %v1282
    %v1284 = vadd.f32 %v1193, %v1233
    %v1285 = vxor.u32 %v1284, 2147483648
    %v1286 = vmul.f32 %v1285, 1.442695
    %v1287 = vpow.pop %v1286
    %v1288 = vadd.f32 %v1287, 1.0
    %v1289 = vrcp.pop %v1288
    %v1290 = vmul.f32 1.0, %v1289
    %v1291 = vadd.f32 %v1272, %v494
    %v1292 = vmul.f32 %v1283, %v1291
    %v1293 = vadd.f32 %v1194, %v1292
    %v1294 = vtanh.pop %v1293
    %v1295 = vsub.f32 1.0, %v1290
    %v1296 = vmul.f32 %v1295, %v1294
    %v1297 = vmul.f32 %v1290, %v1186
    %v1298 = vadd.f32 %v1296, %v1297
    %s1299 = scalar_lea.vmem [#allocation3], 40
    %1300 = vst [vmem:[%s1299] sm:$0xff] %v1298
    %s1301 = smul.u32 6, 3
    %s1302 = smul.addr %s1301, 8
    %s1303 = scalar_lea.vmem [#allocation2], %s1302
    %v1304 = vld [vmem:[%s1303] sm:$0xff]
    %v1305 = vld [vmem:[%s1303 + $0x8] sm:$0xff]
    %v1306 = vld [vmem:[%s1303 + $0x10] sm:$0xff]
    %v1307 = vpack.c.bf16 %v1298, %v1298
    %1308 = vmatprep.subr.bf16.mxu0 %v590
    %1309 = vmatpush1.bf16.msra.mxu0 %v589
    %1310 = vmatprep.subr.bf16.mxu0 %v593
    %1311 = vmatpush1.bf16.msra.mxu0 %v592
    %1312 = vmatprep.subr.bf16.mxu0 %v596
    %1313 = vmatpush1.bf16.msra.mxu0 %v595
    %1314 = vmatprep.subr.bf16.mxu0 %v599
    %1315 = vmatpush1.bf16.msra.mxu0 %v598
    %1316 = vmatprep.subr.bf16.mxu0 %v602
    %1317 = vmatpush1.bf16.msra.mxu0 %v601
    %1318 = vmatprep.subr.bf16.mxu0 %v605
    %1319 = vmatpush1.bf16.msra.mxu0 %v604
    %1320 = vmatprep.subr.bf16.mxu0 %v608
    %1321 = vmatpush1.bf16.msra.mxu0 %v607
    %1322 = vmatprep.subr.bf16.mxu0 %v611
    %1323 = vmatpush1.bf16.msra.mxu0 %v610
    %1324 = vmatprep.subr.bf16.mxu0 0
    %1325 = vmatpush1.bf16.msra.mxu0 0
    %1326 = vmatprep.subr.bf16.mxu0 0
    %1327 = vmatpush1.bf16.msra.mxu0 0
    %1328 = vmatprep.subr.bf16.mxu0 0
    %1329 = vmatpush1.bf16.msra.mxu0 0
    %1330 = vmatprep.subr.bf16.mxu0 0
    %1331 = vmatpush1.bf16.msra.mxu0 0
    %1332 = vmatprep.subr.bf16.mxu0 0
    %1333 = vmatpush1.bf16.msra.mxu0 0
    %1334 = vmatprep.subr.bf16.mxu0 0
    %1335 = vmatpush1.bf16.msra.mxu0 0
    %1336 = vmatprep.subr.bf16.mxu0 0
    %1337 = vmatpush1.bf16.msra.mxu0 0
    %1338 = vmatprep.subr.bf16.mxu0 0
    %1339 = vmatpush1.bf16.msra.mxu0 0
    %1340 = vmatprep.mubr.bf16.mxu0 0
    %1341 = vmatmul.mubr.bf16.gmra.mrb[0].mxu0 %v1307
    %v1342 = vpop.f32.mrb[0].mxu0
    %v1343 = vadd.f32 0.0, %v1342
    %v1344 = vpop.f32.mrb[0].mxu0
    %v1345 = vadd.f32 0.0, %v1344
    %v1346 = vpop.f32.mrb[0].mxu0
    %v1347 = vpop.f32.mrb[0].mxu0
    %1348 = vdwg.mxu0
    %1349 = vmatprep.subr.bf16.mxu0 0
    %1350 = vmatpush1.bf16.msra.mxu0 %v591
    %1351 = vmatprep.subr.bf16.mxu0 0
    %1352 = vmatpush1.bf16.msra.mxu0 %v594
    %1353 = vmatprep.subr.bf16.mxu0 0
    %1354 = vmatpush1.bf16.msra.mxu0 %v597
    %1355 = vmatprep.subr.bf16.mxu0 0
    %1356 = vmatpush1.bf16.msra.mxu0 %v600
    %1357 = vmatprep.subr.bf16.mxu0 0
    %1358 = vmatpush1.bf16.msra.mxu0 %v603
    %1359 = vmatprep.subr.bf16.mxu0 0
    %1360 = vmatpush1.bf16.msra.mxu0 %v606
    %1361 = vmatprep.subr.bf16.mxu0 0
    %1362 = vmatpush1.bf16.msra.mxu0 %v609
    %1363 = vmatprep.subr.bf16.mxu0 0
    %1364 = vmatpush1.bf16.msra.mxu0 %v612
    %1365 = vmatprep.subr.bf16.mxu0 0
    %1366 = vmatpush1.bf16.msra.mxu0 0
    %1367 = vmatprep.subr.bf16.mxu0 0
    %1368 = vmatpush1.bf16.msra.mxu0 0
    %1369 = vmatprep.subr.bf16.mxu0 0
    %1370 = vmatpush1.bf16.msra.mxu0 0
    %1371 = vmatprep.subr.bf16.mxu0 0
    %1372 = vmatpush1.bf16.msra.mxu0 0
    %1373 = vmatprep.subr.bf16.mxu0 0
    %1374 = vmatpush1.bf16.msra.mxu0 0
    %1375 = vmatprep.subr.bf16.mxu0 0
    %1376 = vmatpush1.bf16.msra.mxu0 0
    %1377 = vmatprep.subr.bf16.mxu0 0
    %1378 = vmatpush1.bf16.msra.mxu0 0
    %1379 = vmatprep.subr.bf16.mxu0 0
    %1380 = vmatpush1.bf16.msra.mxu0 0
    %1381 = vmatprep.mubr.bf16.mxu0 0
    %1382 = vmatmul.mubr.bf16.gmra.mrb[0].mxu0 %v1307
    %v1383 = vpop.f32.mrb[0].mxu0
    %v1384 = vadd.f32 0.0, %v1383
    %v1385 = vpop.f32.mrb[0].mxu0
    %v1386 = vpop.f32.mrb[0].mxu0
    %v1387 = vpop.f32.mrb[0].mxu0
    %1388 = vdwg.mxu0
    %v1389 = vadd.f32 %v1304, %v1343
    %v1390 = vxor.u32 %v1389, 2147483648
    %v1391 = vmul.f32 %v1390, 1.442695
    %v1392 = vpow.pop %v1391
    %v1393 = vadd.f32 %v1392, 1.0
    %v1394 = vrcp.pop %v1393
    %v1395 = vmul.f32 1.0, %v1394
    %v1396 = vadd.f32 %v1305, %v1345
    %v1397 = vxor.u32 %v1396, 2147483648
    %v1398 = vmul.f32 %v1397, 1.442695
    %v1399 = vpow.pop %v1398
    %v1400 = vadd.f32 %v1399, 1.0
    %v1401 = vrcp.pop %v1400
    %v1402 = vmul.f32 1.0, %v1401
    %v1403 = vadd.f32 %v1384, %v494
    %v1404 = vmul.f32 %v1395, %v1403
    %v1405 = vadd.f32 %v1306, %v1404
    %v1406 = vtanh.pop %v1405
    %v1407 = vsub.f32 1.0, %v1402
    %v1408 = vmul.f32 %v1407, %v1406
    %v1409 = vmul.f32 %v1402, %v1298
    %v1410 = vadd.f32 %v1408, %v1409
    %s1411 = scalar_lea.vmem [#allocation3], 48
    %1412 = vst [vmem:[%s1411] sm:$0xff] %v1410
    %s1413 = smul.u32 7, 3
    %s1414 = smul.addr %s1413, 8
    %s1415 = scalar_lea.vmem [#allocation2], %s1414
    %v1416 = vld [vmem:[%s1415] sm:$0xff]
    %v1417 = vld [vmem:[%s1415 + $0x8] sm:$0xff]
    %v1418 = vld [vmem:[%s1415 + $0x10] sm:$0xff]
    %v1419 = vpack.c.bf16 %v1410, %v1410
    %1420 = vmatprep.subr.bf16.mxu0 %v590
    %1421 = vmatpush1.bf16.msra.mxu0 %v589
    %1422 = vmatprep.subr.bf16.mxu0 %v593
    %1423 = vmatpush1.bf16.msra.mxu0 %v592
    %1424 = vmatprep.subr.bf16.mxu0 %v596
    %1425 = vmatpush1.bf16.msra.mxu0 %v595
    %1426 = vmatprep.subr.bf16.mxu0 %v599
    %1427 = vmatpush1.bf16.msra.mxu0 %v598
    %1428 = vmatprep.subr.bf16.mxu0 %v602
    %1429 = vmatpush1.bf16.msra.mxu0 %v601
    %1430 = vmatprep.subr.bf16.mxu0 %v605
    %1431 = vmatpush1.bf16.msra.mxu0 %v604
    %1432 = vmatprep.subr.bf16.mxu0 %v608
    %1433 = vmatpush1.bf16.msra.mxu0 %v607
    %1434 = vmatprep.subr.bf16.mxu0 %v611
    %1435 = vmatpush1.bf16.msra.mxu0 %v610
    %1436 = vmatprep.subr.bf16.mxu0 0
    %1437 = vmatpush1.bf16.msra.mxu0 0
    %1438 = vmatprep.subr.bf16.mxu0 0
    %1439 = vmatpush1.bf16.msra.mxu0 0
    %1440 = vmatprep.subr.bf16.mxu0 0
    %1441 = vmatpush1.bf16.msra.mxu0 0
    %1442 = vmatprep.subr.bf16.mxu0 0
    %1443 = vmatpush1.bf16.msra.mxu0 0
    %1444 = vmatprep.subr.bf16.mxu0 0
    %1445 = vmatpush1.bf16.msra.mxu0 0
    %1446 = vmatprep.subr.bf16.mxu0 0
    %1447 = vmatpush1.bf16.msra.mxu0 0
    %1448 = vmatprep.subr.bf16.mxu0 0
    %1449 = vmatpush1.bf16.msra.mxu0 0
    %1450 = vmatprep.subr.bf16.mxu0 0
    %1451 = vmatpush1.bf16.msra.mxu0 0
    %1452 = vmatprep.mubr.bf16.mxu0 0
    %1453 = vmatmul.mubr.bf16.gmra.mrb[0].mxu0 %v1419
    %v1454 = vpop.f32.mrb[0].mxu0
    %v1455 = vadd.f32 0.0, %v1454
    %v1456 = vpop.f32.mrb[0].mxu0
    %v1457 = vadd.f32 0.0, %v1456
    %v1458 = vpop.f32.mrb[0].mxu0
    %v1459 = vpop.f32.mrb[0].mxu0
    %1460 = vdwg.mxu0
    %1461 = vmatprep.subr.bf16.mxu0 0
    %1462 = vmatpush1.bf16.msra.mxu0 %v591
    %1463 = vmatprep.subr.bf16.mxu0 0
    %1464 = vmatpush1.bf16.msra.mxu0 %v594
    %1465 = vmatprep.subr.bf16.mxu0 0
    %1466 = vmatpush1.bf16.msra.mxu0 %v597
    %1467 = vmatprep.subr.bf16.mxu0 0
    %1468 = vmatpush1.bf16.msra.mxu0 %v600
    %1469 = vmatprep.subr.bf16.mxu0 0
    %1470 = vmatpush1.bf16.msra.mxu0 %v603
    %1471 = vmatprep.subr.bf16.mxu0 0
    %1472 = vmatpush1.bf16.msra.mxu0 %v606
    %1473 = vmatprep.subr.bf16.mxu0 0
    %1474 = vmatpush1.bf16.msra.mxu0 %v609
    %1475 = vmatprep.subr.bf16.mxu0 0
    %1476 = vmatpush1.bf16.msra.mxu0 %v612
    %1477 = vmatprep.subr.bf16.mxu0 0
    %1478 = vmatpush1.bf16.msra.mxu0 0
    %1479 = vmatprep.subr.bf16.mxu0 0
    %1480 = vmatpush1.bf16.msra.mxu0 0
    %1481 = vmatprep.subr.bf16.mxu0 0
    %1482 = vmatpush1.bf16.msra.mxu0 0
    %1483 = vmatprep.subr.bf16.mxu0 0
    %1484 = vmatpush1.bf16.msra.mxu0 0
    %1485 = vmatprep.subr.bf16.mxu0 0
    %1486 = vmatpush1.bf16.msra.mxu0 0
    %1487 = vmatprep.subr.bf16.mxu0 0
    %1488 = vmatpush1.bf16.msra.mxu0 0
    %1489 = vmatprep.subr.bf16.mxu0 0
    %1490 = vmatpush1.bf16.msra.mxu0 0
    %1491 = vmatprep.subr.bf16.mxu0 0
    %1492 = vmatpush1.bf16.msra.mxu0 0
    %1493 = vmatprep.mubr.bf16.mxu0 0
    %1494 = vmatmul.mubr.bf16.gmra.mrb[0].mxu0 %v1419
    %v1495 = vpop.f32.mrb[0].mxu0
    %v1496 = vadd.f32 0.0, %v1495
    %v1497 = vpop.f32.mrb[0].mxu0
    %v1498 = vpop.f32.mrb[0].mxu0
    %v1499 = vpop.f32.mrb[0].mxu0
    %1500 = vdwg.mxu0
    %v1501 = vadd.f32 %v1416, %v1455
    %v1502 = vxor.u32 %v1501, 2147483648
    %v1503 = vmul.f32 %v1502, 1.442695
    %v1504 = vpow.pop %v1503
    %v1505 = vadd.f32 %v1504, 1.0
    %v1506 = vrcp.pop %v1505
    %v1507 = vmul.f32 1.0, %v1506
    %v1508 = vadd.f32 %v1417, %v1457
    %v1509 = vxor.u32 %v1508, 2147483648
    %v1510 = vmul.f32 %v1509, 1.442695
    %v1511 = vpow.pop %v1510
    %v1512 = vadd.f32 %v1511, 1.0
    %v1513 = vrcp.pop %v1512
    %v1514 = vmul.f32 1.0, %v1513
    %v1515 = vadd.f32 %v1496, %v494
    %v1516 = vmul.f32 %v1507, %v1515
    %v1517 = vadd.f32 %v1418, %v1516
    %v1518 = vtanh.pop %v1517
    %v1519 = vsub.f32 1.0, %v1514
    %v1520 = vmul.f32 %v1519, %v1518
    %v1521 = vmul.f32 %v1514, %v1410
    %v1522 = vadd.f32 %v1520, %v1521
    %s1523 = scalar_lea.vmem [#allocation3], 56
    %1524 = vst [vmem:[%s1523] sm:$0xff] %v1522
    %v1525 = vld [vmem:[#allocation3] sm:$0xff]
    %v1526 = vld [vmem:[#allocation3 + $0x8] sm:$0xff]
    %v1527 = vld [vmem:[#allocation3 + $0x10] sm:$0xff]
    %v1528 = vld [vmem:[#allocation3 + $0x18] sm:$0xff]
    %v1529 = vld [vmem:[#allocation3 + $0x20] sm:$0xff]
    %v1530 = vld [vmem:[#allocation3 + $0x28] sm:$0xff]
    %v1531 = vld [vmem:[#allocation3 + $0x30] sm:$0xff]
    %v1532 = vld [vmem:[#allocation3 + $0x38] sm:$0xff]
    %v1533 = vld [vmem:[#allocation11] sm:$0xff]
    %v1534 = vld [vmem:[#allocation11 + $0x8] sm:$0xff]
    %v1535 = vld [vmem:[#allocation11 + $0x10] sm:$0xff]
    %v1536 = vld [vmem:[#allocation11 + $0x18] sm:$0xff]
    %v1537 = vld [vmem:[#allocation11 + $0x20] sm:$0xff]
    %v1538 = vld [vmem:[#allocation11 + $0x28] sm:$0xff]
    %v1539 = vld [vmem:[#allocation11 + $0x30] sm:$0xff]
    %v1540 = vld [vmem:[#allocation11 + $0x38] sm:$0xff]
    %v1541 = vld [vmem:[#allocation11 + $0x40] sm:$0xff]
    %v1542 = vld [vmem:[#allocation11 + $0x48] sm:$0xff]
    %v1543 = vld [vmem:[#allocation11 + $0x50] sm:$0xff]
    %v1544 = vld [vmem:[#allocation11 + $0x58] sm:$0xff]
    %v1545 = vld [vmem:[#allocation11 + $0x60] sm:$0xff]
    %v1546 = vld [vmem:[#allocation11 + $0x68] sm:$0xff]
    %v1547 = vld [vmem:[#allocation11 + $0x70] sm:$0xff]
    %v1548 = vld [vmem:[#allocation11 + $0x78] sm:$0xff]
    %v1549 = vld [vmem:[#allocation11 + $0x80] sm:$0xff]
    %v1550 = vld [vmem:[#allocation11 + $0x88] sm:$0xff]
    %v1551 = vld [vmem:[#allocation11 + $0x90] sm:$0xff]
    %v1552 = vld [vmem:[#allocation11 + $0x98] sm:$0xff]
    %v1553 = vld [vmem:[#allocation11 + $0xa0] sm:$0xff]
    %v1554 = vld [vmem:[#allocation11 + $0xa8] sm:$0xff]
    %v1555 = vld [vmem:[#allocation11 + $0xb0] sm:$0xff]
    %v1556 = vld [vmem:[#allocation11 + $0xb8] sm:$0xff]
    %v1557 = vld [vmem:[#allocation11 + $0xc0] sm:$0xff]
    %v1558 = vld [vmem:[#allocation11 + $0xc8] sm:$0xff]
    %v1559 = vld [vmem:[#allocation11 + $0xd0] sm:$0xff]
    %v1560 = vld [vmem:[#allocation11 + $0xd8] sm:$0xff]
    %v1561 = vld [vmem:[#allocation11 + $0xe0] sm:$0xff]
    %v1562 = vld [vmem:[#allocation11 + $0xe8] sm:$0xff]
    %v1563 = vld [vmem:[#allocation11 + $0xf0] sm:$0xff]
    %v1564 = vld [vmem:[#allocation11 + $0xf8] sm:$0xff]
    %v1565 = vld [vmem:[#allocation11 + $0x100] sm:$0xff]
    %v1566 = vld [vmem:[#allocation11 + $0x108] sm:$0xff]
    %v1567 = vld [vmem:[#allocation11 + $0x110] sm:$0xff]
    %v1568 = vld [vmem:[#allocation11 + $0x118] sm:$0xff]
    %v1569 = vld [vmem:[#allocation11 + $0x120] sm:$0xff]
    %v1570 = vld [vmem:[#allocation11 + $0x128] sm:$0xff]
    %v1571 = vld [vmem:[#allocation11 + $0x130] sm:$0xff]
    %v1572 = vld [vmem:[#allocation11 + $0x138] sm:$0xff]
    %v1573 = vld [vmem:[#allocation11 + $0x140] sm:$0xff]
    %v1574 = vld [vmem:[#allocation11 + $0x148] sm:$0xff]
    %v1575 = vld [vmem:[#allocation11 + $0x150] sm:$0xff]
    %v1576 = vld [vmem:[#allocation11 + $0x158] sm:$0xff]
    %v1577 = vld [vmem:[#allocation11 + $0x160] sm:$0xff]
    %v1578 = vld [vmem:[#allocation11 + $0x168] sm:$0xff]
    %v1579 = vld [vmem:[#allocation11 + $0x170] sm:$0xff]
    %v1580 = vld [vmem:[#allocation11 + $0x178] sm:$0xff]
    %v1581 = vld [vmem:[%s7] sm:$0x7]
    %v1583 = vlaneseq
    %v1584 = vshrl.u32 %v1583, 7
    %v1585 = vsub.s32 0, %v1584
    %v1586 = vrot.slane %v1581, %v1585
    %v1587 = vlaneseq
    %v1588 = vshrl.u32 %v1587, 7
    %v1589 = vsub.s32 1, %v1588
    %v1590 = vrot.slane %v1581, %v1589
    %v1591 = vlaneseq
    %v1592 = vshrl.u32 %v1591, 7
    %v1593 = vsub.s32 2, %v1592
    %v1594 = vrot.slane %v1581, %v1593
    %1598 = vmatprep.subr.mxu0 %v1534
    %1599 = vmatpush1.msra.mxu0 %v1533
    %1600 = vmatprep.subr.mxu0 %v1537
    %1601 = vmatpush1.msra.mxu0 %v1536
    %1602 = vmatprep.subr.mxu0 %v1540
    %1603 = vmatpush1.msra.mxu0 %v1539
    %1604 = vmatprep.subr.mxu0 %v1543
    %1605 = vmatpush1.msra.mxu0 %v1542
    %1606 = vmatprep.subr.mxu0 %v1546
    %1607 = vmatpush1.msra.mxu0 %v1545
    %1608 = vmatprep.subr.mxu0 %v1549
    %1609 = vmatpush1.msra.mxu0 %v1548
    %1610 = vmatprep.subr.mxu0 %v1552
    %1611 = vmatpush1.msra.mxu0 %v1551
    %1612 = vmatprep.subr.mxu0 %v1555
    %1613 = vmatpush1.msra.mxu0 %v1554
    %1614 = vmatprep.subr.mxu0 %v1558
    %1615 = vmatpush1.msra.mxu0 %v1557
    %1616 = vmatprep.subr.mxu0 %v1561
    %1617 = vmatpush1.msra.mxu0 %v1560
    %1618 = vmatprep.subr.mxu0 %v1564
    %1619 = vmatpush1.msra.mxu0 %v1563
    %1620 = vmatprep.subr.mxu0 %v1567
    %1621 = vmatpush1.msra.mxu0 %v1566
    %1622 = vmatprep.subr.mxu0 %v1570
    %1623 = vmatpush1.msra.mxu0 %v1569
    %1624 = vmatprep.subr.mxu0 %v1573
    %1625 = vmatpush1.msra.mxu0 %v1572
    %1626 = vmatprep.subr.mxu0 %v1576
    %1627 = vmatpush1.msra.mxu0 %v1575
    %1628 = vmatprep.subr.mxu0 %v1579
    %1629 = vmatpush1.msra.mxu0 %v1578
    %1630 = vmatprep.subr.mxu0 0.0
    %1631 = vmatpush1.msra.mxu0 0.0
    %1632 = vmatprep.subr.mxu0 0.0
    %1633 = vmatpush1.msra.mxu0 0.0
    %1634 = vmatprep.subr.mxu0 0.0
    %1635 = vmatpush1.msra.mxu0 0.0
    %1636 = vmatprep.subr.mxu0 0.0
    %1637 = vmatpush1.msra.mxu0 0.0
    %1638 = vmatprep.subr.mxu0 0.0
    %1639 = vmatpush1.msra.mxu0 0.0
    %1640 = vmatprep.subr.mxu0 0.0
    %1641 = vmatpush1.msra.mxu0 0.0
    %1642 = vmatprep.subr.mxu0 0.0
    %1643 = vmatpush1.msra.mxu0 0.0
    %1644 = vmatprep.subr.mxu0 0.0
    %1645 = vmatpush1.msra.mxu0 0.0
    %1646 = vmatprep.subr.mxu0 0.0
    %1647 = vmatpush1.msra.mxu0 0.0
    %1648 = vmatprep.subr.mxu0 0.0
    %1649 = vmatpush1.msra.mxu0 0.0
    %1650 = vmatprep.subr.mxu0 0.0
    %1651 = vmatpush1.msra.mxu0 0.0
    %1652 = vmatprep.subr.mxu0 0.0
    %1653 = vmatpush1.msra.mxu0 0.0
    %1654 = vmatprep.subr.mxu0 0.0
    %1655 = vmatpush1.msra.mxu0 0.0
    %1656 = vmatprep.subr.mxu0 0.0
    %1657 = vmatpush1.msra.mxu0 0.0
    %1658 = vmatprep.subr.mxu0 0.0
    %1659 = vmatpush1.msra.mxu0 0.0
    %1660 = vmatprep.subr.mxu0 0.0
    %1661 = vmatpush1.msra.mxu0 0.0
    %1662 = vmatprep.mubr.f32.mxu0 0.0
    %1663 = vmatmul.mubr.f32.gmra.mrb[0].mxu0 %v1525
    %v1664 = vpop.f32.mrb[0].mxu0
    %v1665 = vadd.f32 %v1586, %v1664
    %v1666 = vpop.f32.mrb[0].mxu0
    %v1667 = vadd.f32 %v1590, %v1666
    %1668 = vmatprep.mubr.f32.mxu0 0.0
    %1669 = vmatmul.mubr.f32.gmra.mrb[0].mxu0 %v1526
    %v1670 = vpop.f32.mrb[0].mxu0
    %v1671 = vadd.f32 %v1586, %v1670
    %v1672 = vpop.f32.mrb[0].mxu0
    %v1673 = vadd.f32 %v1590, %v1672
    %1674 = vmatprep.mubr.f32.mxu0 0.0
    %1675 = vmatmul.mubr.f32.gmra.mrb[0].mxu0 %v1527
    %v1676 = vpop.f32.mrb[0].mxu0
    %v1677 = vadd.f32 %v1586, %v1676
    %v1678 = vpop.f32.mrb[0].mxu0
    %v1679 = vadd.f32 %v1590, %v1678
    %1680 = vmatprep.mubr.f32.mxu0 0.0
    %1681 = vmatmul.mubr.f32.gmra.mrb[0].mxu0 %v1528
    %v1682 = vpop.f32.mrb[0].mxu0
    %v1683 = vadd.f32 %v1586, %v1682
    %v1684 = vpop.f32.mrb[0].mxu0
    %v1685 = vadd.f32 %v1590, %v1684
    %1686 = vmatprep.mubr.f32.mxu0 0.0
    %1687 = vmatmul.mubr.f32.gmra.mrb[0].mxu0 %v1529
    %v1688 = vpop.f32.mrb[0].mxu0
    %v1689 = vadd.f32 %v1586, %v1688
    %v1690 = vpop.f32.mrb[0].mxu0
    %v1691 = vadd.f32 %v1590, %v1690
    %1692 = vmatprep.mubr.f32.mxu0 0.0
    %1693 = vmatmul.mubr.f32.gmra.mrb[0].mxu0 %v1530
    %v1694 = vpop.f32.mrb[0].mxu0
    %v1695 = vadd.f32 %v1586, %v1694
    %v1696 = vpop.f32.mrb[0].mxu0
    %v1697 = vadd.f32 %v1590, %v1696
    %1698 = vmatprep.mubr.f32.mxu0 0.0
    %1699 = vmatmul.mubr.f32.gmra.mrb[0].mxu0 %v1531
    %v1700 = vpop.f32.mrb[0].mxu0
    %v1701 = vadd.f32 %v1586, %v1700
    %v1702 = vpop.f32.mrb[0].mxu0
    %v1703 = vadd.f32 %v1590, %v1702
    %1704 = vmatprep.mubr.f32.mxu0 0.0
    %1705 = vmatmul.mubr.f32.gmra.mrb[0].mxu0 %v1532
    %v1706 = vpop.f32.mrb[0].mxu0
    %v1707 = vadd.f32 %v1586, %v1706
    %v1708 = vpop.f32.mrb[0].mxu0
    %v1709 = vadd.f32 %v1590, %v1708
    %1710 = vdwg.mxu0
    %1711 = vmatprep.subr.mxu0 0.0
    %1712 = vmatpush1.msra.mxu0 %v1535
    %1713 = vmatprep.subr.mxu0 0.0
    %1714 = vmatpush1.msra.mxu0 %v1538
    %1715 = vmatprep.subr.mxu0 0.0
    %1716 = vmatpush1.msra.mxu0 %v1541
    %1717 = vmatprep.subr.mxu0 0.0
    %1718 = vmatpush1.msra.mxu0 %v1544
    %1719 = vmatprep.subr.mxu0 0.0
    %1720 = vmatpush1.msra.mxu0 %v1547
    %1721 = vmatprep.subr.mxu0 0.0
    %1722 = vmatpush1.msra.mxu0 %v1550
    %1723 = vmatprep.subr.mxu0 0.0
    %1724 = vmatpush1.msra.mxu0 %v1553
    %1725 = vmatprep.subr.mxu0 0.0
    %1726 = vmatpush1.msra.mxu0 %v1556
    %1727 = vmatprep.subr.mxu0 0.0
    %1728 = vmatpush1.msra.mxu0 %v1559
    %1729 = vmatprep.subr.mxu0 0.0
    %1730 = vmatpush1.msra.mxu0 %v1562
    %1731 = vmatprep.subr.mxu0 0.0
    %1732 = vmatpush1.msra.mxu0 %v1565
    %1733 = vmatprep.subr.mxu0 0.0
    %1734 = vmatpush1.msra.mxu0 %v1568
    %1735 = vmatprep.subr.mxu0 0.0
    %1736 = vmatpush1.msra.mxu0 %v1571
    %1737 = vmatprep.subr.mxu0 0.0
    %1738 = vmatpush1.msra.mxu0 %v1574
    %1739 = vmatprep.subr.mxu0 0.0
    %1740 = vmatpush1.msra.mxu0 %v1577
    %1741 = vmatprep.subr.mxu0 0.0
    %1742 = vmatpush1.msra.mxu0 %v1580
    %1743 = vmatprep.subr.mxu0 0.0
    %1744 = vmatpush1.msra.mxu0 0.0
    %1745 = vmatprep.subr.mxu0 0.0
    %1746 = vmatpush1.msra.mxu0 0.0
    %1747 = vmatprep.subr.mxu0 0.0
    %1748 = vmatpush1.msra.mxu0 0.0
    %1749 = vmatprep.subr.mxu0 0.0
    %1750 = vmatpush1.msra.mxu0 0.0
    %1751 = vmatprep.subr.mxu0 0.0
    %1752 = vmatpush1.msra.mxu0 0.0
    %1753 = vmatprep.subr.mxu0 0.0
    %1754 = vmatpush1.msra.mxu0 0.0
    %1755 = vmatprep.subr.mxu0 0.0
    %1756 = vmatpush1.msra.mxu0 0.0
    %1757 = vmatprep.subr.mxu0 0.0
    %1758 = vmatpush1.msra.mxu0 0.0
    %1759 = vmatprep.subr.mxu0 0.0
    %1760 = vmatpush1.msra.mxu0 0.0
    %1761 = vmatprep.subr.mxu0 0.0
    %1762 = vmatpush1.msra.mxu0 0.0
    %1763 = vmatprep.subr.mxu0 0.0
    %1764 = vmatpush1.msra.mxu0 0.0
    %1765 = vmatprep.subr.mxu0 0.0
    %1766 = vmatpush1.msra.mxu0 0.0
    %1767 = vmatprep.subr.mxu0 0.0
    %1768 = vmatpush1.msra.mxu0 0.0
    %1769 = vmatprep.subr.mxu0 0.0
    %1770 = vmatpush1.msra.mxu0 0.0
    %1771 = vmatprep.subr.mxu0 0.0
    %1772 = vmatpush1.msra.mxu0 0.0
    %1773 = vmatprep.subr.mxu0 0.0
    %1774 = vmatpush1.msra.mxu0 0.0
    %1775 = vmatprep.mubr.f32.mxu0 0.0
    %1776 = vmatmul.mubr.f32.gmra.mrb[0].mxu0 %v1525
    %v1777 = vpop.f32.mrb[0].mxu0
    %v1778 = vadd.f32 %v1594, %v1777
    %v1779 = vpop.f32.mrb[0].mxu0
    %1780 = vmatprep.mubr.f32.mxu0 0.0
    %1781 = vmatmul.mubr.f32.gmra.mrb[0].mxu0 %v1526
    %v1782 = vpop.f32.mrb[0].mxu0
    %v1783 = vadd.f32 %v1594, %v1782
    %v1784 = vpop.f32.mrb[0].mxu0
    %1785 = vmatprep.mubr.f32.mxu0 0.0
    %1786 = vmatmul.mubr.f32.gmra.mrb[0].mxu0 %v1527
    %v1787 = vpop.f32.mrb[0].mxu0
    %v1788 = vadd.f32 %v1594, %v1787
    %v1789 = vpop.f32.mrb[0].mxu0
    %1790 = vmatprep.mubr.f32.mxu0 0.0
    %1791 = vmatmul.mubr.f32.gmra.mrb[0].mxu0 %v1528
    %v1792 = vpop.f32.mrb[0].mxu0
    %v1793 = vadd.f32 %v1594, %v1792
    %v1794 = vpop.f32.mrb[0].mxu0
    %1795 = vmatprep.mubr.f32.mxu0 0.0
    %1796 = vmatmul.mubr.f32.gmra.mrb[0].mxu0 %v1529
    %v1797 = vpop.f32.mrb[0].mxu0
    %v1798 = vadd.f32 %v1594, %v1797
    %v1799 = vpop.f32.mrb[0].mxu0
    %1800 = vmatprep.mubr.f32.mxu0 0.0
    %1801 = vmatmul.mubr.f32.gmra.mrb[0].mxu0 %v1530
    %v1802 = vpop.f32.mrb[0].mxu0
    %v1803 = vadd.f32 %v1594, %v1802
    %v1804 = vpop.f32.mrb[0].mxu0
    %1805 = vmatprep.mubr.f32.mxu0 0.0
    %1806 = vmatmul.mubr.f32.gmra.mrb[0].mxu0 %v1531
    %v1807 = vpop.f32.mrb[0].mxu0
    %v1808 = vadd.f32 %v1594, %v1807
    %v1809 = vpop.f32.mrb[0].mxu0
    %1810 = vmatprep.mubr.f32.mxu0 0.0
    %1811 = vmatmul.mubr.f32.gmra.mrb[0].mxu0 %v1532
    %v1812 = vpop.f32.mrb[0].mxu0
    %v1813 = vadd.f32 %v1594, %v1812
    %v1814 = vpop.f32.mrb[0].mxu0
    %1815 = vdwg.mxu0
    %1816 = vst [vmem:[#allocation4] sm:$0xff] %v1665
    %1817 = vst [vmem:[#allocation4 + $0x8] sm:$0xff] %v1667
    %1818 = vst [vmem:[#allocation4 + $0x10] sm:$0xff] %v1778
    %1819 = vst [vmem:[#allocation4 + $0x18] sm:$0xff] %v1671
    %1820 = vst [vmem:[#allocation4 + $0x20] sm:$0xff] %v1673
    %1821 = vst [vmem:[#allocation4 + $0x28] sm:$0xff] %v1783
    %1822 = vst [vmem:[#allocation4 + $0x30] sm:$0xff] %v1677
    %1823 = vst [vmem:[#allocation4 + $0x38] sm:$0xff] %v1679
    %1824 = vst [vmem:[#allocation4 + $0x40] sm:$0xff] %v1788
    %1825 = vst [vmem:[#allocation4 + $0x48] sm:$0xff] %v1683
    %1826 = vst [vmem:[#allocation4 + $0x50] sm:$0xff] %v1685
    %1827 = vst [vmem:[#allocation4 + $0x58] sm:$0xff] %v1793
    %1828 = vst [vmem:[#allocation4 + $0x60] sm:$0xff] %v1689
    %1829 = vst [vmem:[#allocation4 + $0x68] sm:$0xff] %v1691
    %1830 = vst [vmem:[#allocation4 + $0x70] sm:$0xff] %v1798
    %1831 = vst [vmem:[#allocation4 + $0x78] sm:$0xff] %v1695
    %1832 = vst [vmem:[#allocation4 + $0x80] sm:$0xff] %v1697
    %1833 = vst [vmem:[#allocation4 + $0x88] sm:$0xff] %v1803
    %1834 = vst [vmem:[#allocation4 + $0x90] sm:$0xff] %v1701
    %1835 = vst [vmem:[#allocation4 + $0x98] sm:$0xff] %v1703
    %1836 = vst [vmem:[#allocation4 + $0xa0] sm:$0xff] %v1808
    %1837 = vst [vmem:[#allocation4 + $0xa8] sm:$0xff] %v1707
    %1838 = vst [vmem:[#allocation4 + $0xb0] sm:$0xff] %v1709
    %1839 = vst [vmem:[#allocation4 + $0xb8] sm:$0xff] %v1813
    %s1840 = smul.addr %s503, 8
    %s1841 = scalar_lea.vmem [#allocation4], %s1840
    %v1842 = vld [vmem:[%s1841] sm:$0xff]
    %v1843 = vld [vmem:[%s1841 + $0x8] sm:$0xff]
    %v1844 = vld [vmem:[%s1841 + $0x10] sm:$0xff]
    %v1877 = vunpack.c.l.b16 %v457
    %v1878 = vunpack.c.h.b16 %v457
    %v1879 = vunpack.c.l.b16 %v458
    %v1880 = vunpack.c.l.b16 %v459
    %v1881 = vunpack.c.h.b16 %v459
    %v1882 = vunpack.c.l.b16 %v460
    %v1883 = vunpack.c.l.b16 %v461
    %v1884 = vunpack.c.h.b16 %v461
    %v1885 = vunpack.c.l.b16 %v462
    %v1886 = vunpack.c.l.b16 %v463
    %v1887 = vunpack.c.h.b16 %v463
    %v1888 = vunpack.c.l.b16 %v464
    %v1889 = vunpack.c.l.b16 %v465
    %v1890 = vunpack.c.h.b16 %v465
    %v1891 = vunpack.c.l.b16 %v466
    %v1892 = vunpack.c.l.b16 %v467
    %v1893 = vunpack.c.h.b16 %v467
    %v1894 = vunpack.c.l.b16 %v468
    %v1895 = vunpack.c.l.b16 %v469
    %v1896 = vunpack.c.h.b16 %v469
    %v1897 = vunpack.c.l.b16 %v470
    %v1898 = vunpack.c.l.b16 %v471
    %v1899 = vunpack.c.h.b16 %v471
    %v1900 = vunpack.c.l.b16 %v472
    %v1901 = vunpack.c.l.b16 %v473
    %v1902 = vunpack.c.h.b16 %v473
    %v1903 = vunpack.c.l.b16 %v474
    %v1904 = vunpack.c.l.b16 %v475
    %v1905 = vunpack.c.h.b16 %v475
    %v1906 = vunpack.c.l.b16 %v476
    %v1907 = vunpack.c.l.b16 %v477
    %v1908 = vunpack.c.h.b16 %v477
    %v1909 = vunpack.c.l.b16 %v478
    %v1910 = vunpack.c.l.b16 %v479
    %v1911 = vunpack.c.h.b16 %v479
    %v1912 = vunpack.c.l.b16 %v480
    %v1913 = vunpack.c.l.b16 %v481
    %v1914 = vunpack.c.h.b16 %v481
    %v1915 = vunpack.c.l.b16 %v482
    %v1916 = vunpack.c.l.b16 %v483
    %v1917 = vunpack.c.h.b16 %v483
    %v1918 = vunpack.c.l.b16 %v484
    %v1919 = vunpack.c.l.b16 %v485
    %v1920 = vunpack.c.h.b16 %v485
    %v1921 = vunpack.c.l.b16 %v486
    %v1922 = vunpack.c.l.b16 %v487
    %v1923 = vunpack.c.h.b16 %v487
    %v1924 = vunpack.c.l.b16 %v488
    %v1925 = vpack.c.b16 %v1880, %v1877
    %v1926 = vpack.c.b16 %v1881, %v1878
    %v1927 = vpack.c.b16 %v1882, %v1879
    %v1928 = vpack.c.b16 %v1886, %v1883
    %v1929 = vpack.c.b16 %v1887, %v1884
    %v1930 = vpack.c.b16 %v1888, %v1885
    %v1931 = vpack.c.b16 %v1892, %v1889
    %v1932 = vpack.c.b16 %v1893, %v1890
    %v1933 = vpack.c.b16 %v1894, %v1891
    %v1934 = vpack.c.b16 %v1898, %v1895
    %v1935 = vpack.c.b16 %v1899, %v1896
    %v1936 = vpack.c.b16 %v1900, %v1897
    %v1937 = vpack.c.b16 %v1904, %v1901
    %v1938 = vpack.c.b16 %v1905, %v1902
    %v1939 = vpack.c.b16 %v1906, %v1903
    %v1940 = vpack.c.b16 %v1910, %v1907
    %v1941 = vpack.c.b16 %v1911, %v1908
    %v1942 = vpack.c.b16 %v1912, %v1909
    %v1943 = vpack.c.b16 %v1916, %v1913
    %v1944 = vpack.c.b16 %v1917, %v1914
    %v1945 = vpack.c.b16 %v1918, %v1915
    %v1946 = vpack.c.b16 %v1922, %v1919
    %v1947 = vpack.c.b16 %v1923, %v1920
    %v1948 = vpack.c.b16 %v1924, %v1921
    %1973 = vmatprep.subr.bf16.mxu0 %v1926
    %1974 = vmatpush1.bf16.msra.mxu0 %v1925
    %1975 = vmatprep.subr.bf16.mxu0 %v1929
    %1976 = vmatpush1.bf16.msra.mxu0 %v1928
    %1977 = vmatprep.subr.bf16.mxu0 %v1932
    %1978 = vmatpush1.bf16.msra.mxu0 %v1931
    %1979 = vmatprep.subr.bf16.mxu0 %v1935
    %1980 = vmatpush1.bf16.msra.mxu0 %v1934
    %1981 = vmatprep.subr.bf16.mxu0 %v1938
    %1982 = vmatpush1.bf16.msra.mxu0 %v1937
    %1983 = vmatprep.subr.bf16.mxu0 %v1941
    %1984 = vmatpush1.bf16.msra.mxu0 %v1940
    %1985 = vmatprep.subr.bf16.mxu0 %v1944
    %1986 = vmatpush1.bf16.msra.mxu0 %v1943
    %1987 = vmatprep.subr.bf16.mxu0 %v1947
    %1988 = vmatpush1.bf16.msra.mxu0 %v1946
    %1989 = vmatprep.subr.bf16.mxu0 0
    %1990 = vmatpush1.bf16.msra.mxu0 0
    %1991 = vmatprep.subr.bf16.mxu0 0
    %1992 = vmatpush1.bf16.msra.mxu0 0
    %1993 = vmatprep.subr.bf16.mxu0 0
    %1994 = vmatpush1.bf16.msra.mxu0 0
    %1995 = vmatprep.subr.bf16.mxu0 0
    %1996 = vmatpush1.bf16.msra.mxu0 0
    %1997 = vmatprep.subr.bf16.mxu0 0
    %1998 = vmatpush1.bf16.msra.mxu0 0
    %1999 = vmatprep.subr.bf16.mxu0 0
    %2000 = vmatpush1.bf16.msra.mxu0 0
    %2001 = vmatprep.subr.bf16.mxu0 0
    %2002 = vmatpush1.bf16.msra.mxu0 0
    %2003 = vmatprep.subr.bf16.mxu0 0
    %2004 = vmatpush1.bf16.msra.mxu0 0
    %2005 = vmatprep.mubr.bf16.mxu0 0
    %2006 = vmatmul.mubr.bf16.gmra.mrb[0].mxu0 0
    %v2007 = vpop.f32.mrb[0].mxu0
    %v2008 = vadd.f32 0.0, %v2007
    %v2009 = vpop.f32.mrb[0].mxu0
    %v2010 = vadd.f32 0.0, %v2009
    %v2011 = vpop.f32.mrb[0].mxu0
    %v2012 = vpop.f32.mrb[0].mxu0
    %2013 = vdwg.mxu0
    %2014 = vmatprep.subr.bf16.mxu0 0
    %2015 = vmatpush1.bf16.msra.mxu0 %v1927
    %2016 = vmatprep.subr.bf16.mxu0 0
    %2017 = vmatpush1.bf16.msra.mxu0 %v1930
    %2018 = vmatprep.subr.bf16.mxu0 0
    %2019 = vmatpush1.bf16.msra.mxu0 %v1933
    %2020 = vmatprep.subr.bf16.mxu0 0
    %2021 = vmatpush1.bf16.msra.mxu0 %v1936
    %2022 = vmatprep.subr.bf16.mxu0 0
    %2023 = vmatpush1.bf16.msra.mxu0 %v1939
    %2024 = vmatprep.subr.bf16.mxu0 0
    %2025 = vmatpush1.bf16.msra.mxu0 %v1942
    %2026 = vmatprep.subr.bf16.mxu0 0
    %2027 = vmatpush1.bf16.msra.mxu0 %v1945
    %2028 = vmatprep.subr.bf16.mxu0 0
    %2029 = vmatpush1.bf16.msra.mxu0 %v1948
    %2030 = vmatprep.subr.bf16.mxu0 0
    %2031 = vmatpush1.bf16.msra.mxu0 0
    %2032 = vmatprep.subr.bf16.mxu0 0
    %2033 = vmatpush1.bf16.msra.mxu0 0
    %2034 = vmatprep.subr.bf16.mxu0 0
    %2035 = vmatpush1.bf16.msra.mxu0 0
    %2036 = vmatprep.subr.bf16.mxu0 0
    %2037 = vmatpush1.bf16.msra.mxu0 0
    %2038 = vmatprep.subr.bf16.mxu0 0
    %2039 = vmatpush1.bf16.msra.mxu0 0
    %2040 = vmatprep.subr.bf16.mxu0 0
    %2041 = vmatpush1.bf16.msra.mxu0 0
    %2042 = vmatprep.subr.bf16.mxu0 0
    %2043 = vmatpush1.bf16.msra.mxu0 0
    %2044 = vmatprep.subr.bf16.mxu0 0
    %2045 = vmatpush1.bf16.msra.mxu0 0
    %2046 = vmatprep.mubr.bf16.mxu0 0
    %2047 = vmatmul.mubr.bf16.gmra.mrb[0].mxu0 0
    %v2048 = vpop.f32.mrb[0].mxu0
    %v2049 = vadd.f32 0.0, %v2048
    %v2050 = vpop.f32.mrb[0].mxu0
    %v2051 = vpop.f32.mrb[0].mxu0
    %v2052 = vpop.f32.mrb[0].mxu0
    %2053 = vdwg.mxu0
    %v2054 = vadd.f32 %v1842, %v2008
    %v2055 = vxor.u32 %v2054, 2147483648
    %v2056 = vmul.f32 %v2055, 1.442695
    %v2057 = vpow.pop %v2056
    %v2058 = vadd.f32 %v2057, 1.0
    %v2059 = vrcp.pop %v2058
    %v2060 = vmul.f32 1.0, %v2059
    %v2061 = vadd.f32 %v1843, %v2010
    %v2062 = vxor.u32 %v2061, 2147483648
    %v2063 = vmul.f32 %v2062, 1.442695
    %v2064 = vpow.pop %v2063
    %v2065 = vadd.f32 %v2064, 1.0
    %v2066 = vrcp.pop %v2065
    %v2067 = vmul.f32 1.0, %v2066
    %v2068 = vadd.f32 %v2049, %v501
    %v2069 = vmul.f32 %v2060, %v2068
    %v2070 = vadd.f32 %v1844, %v2069
    %v2071 = vtanh.pop %v2070
    %v2072 = vsub.f32 1.0, %v2067
    %v2073 = vmul.f32 %v2072, %v2071
    %v2074 = vmul.f32 %v2067, 0.0
    %v2075 = vadd.f32 %v2073, %v2074
    %2076 = vst [vmem:[#allocation5] sm:$0xff] %v2075
    %s2077 = smul.addr %s741, 8
    %s2078 = scalar_lea.vmem [#allocation4], %s2077
    %v2079 = vld [vmem:[%s2078] sm:$0xff]
    %v2080 = vld [vmem:[%s2078 + $0x8] sm:$0xff]
    %v2081 = vld [vmem:[%s2078 + $0x10] sm:$0xff]
    %v2082 = vpack.c.bf16 %v2075, %v2075
    %2083 = vmatprep.subr.bf16.mxu0 %v1926
    %2084 = vmatpush1.bf16.msra.mxu0 %v1925
    %2085 = vmatprep.subr.bf16.mxu0 %v1929
    %2086 = vmatpush1.bf16.msra.mxu0 %v1928
    %2087 = vmatprep.subr.bf16.mxu0 %v1932
    %2088 = vmatpush1.bf16.msra.mxu0 %v1931
    %2089 = vmatprep.subr.bf16.mxu0 %v1935
    %2090 = vmatpush1.bf16.msra.mxu0 %v1934
    %2091 = vmatprep.subr.bf16.mxu0 %v1938
    %2092 = vmatpush1.bf16.msra.mxu0 %v1937
    %2093 = vmatprep.subr.bf16.mxu0 %v1941
    %2094 = vmatpush1.bf16.msra.mxu0 %v1940
    %2095 = vmatprep.subr.bf16.mxu0 %v1944
    %2096 = vmatpush1.bf16.msra.mxu0 %v1943
    %2097 = vmatprep.subr.bf16.mxu0 %v1947
    %2098 = vmatpush1.bf16.msra.mxu0 %v1946
    %2099 = vmatprep.subr.bf16.mxu0 0
    %2100 = vmatpush1.bf16.msra.mxu0 0
    %2101 = vmatprep.subr.bf16.mxu0 0
    %2102 = vmatpush1.bf16.msra.mxu0 0
    %2103 = vmatprep.subr.bf16.mxu0 0
    %2104 = vmatpush1.bf16.msra.mxu0 0
    %2105 = vmatprep.subr.bf16.mxu0 0
    %2106 = vmatpush1.bf16.msra.mxu0 0
    %2107 = vmatprep.subr.bf16.mxu0 0
    %2108 = vmatpush1.bf16.msra.mxu0 0
    %2109 = vmatprep.subr.bf16.mxu0 0
    %2110 = vmatpush1.bf16.msra.mxu0 0
    %2111 = vmatprep.subr.bf16.mxu0 0
    %2112 = vmatpush1.bf16.msra.mxu0 0
    %2113 = vmatprep.subr.bf16.mxu0 0
    %2114 = vmatpush1.bf16.msra.mxu0 0
    %2115 = vmatprep.mubr.bf16.mxu0 0
    %2116 = vmatmul.mubr.bf16.gmra.mrb[0].mxu0 %v2082
    %v2117 = vpop.f32.mrb[0].mxu0
    %v2118 = vadd.f32 0.0, %v2117
    %v2119 = vpop.f32.mrb[0].mxu0
    %v2120 = vadd.f32 0.0, %v2119
    %v2121 = vpop.f32.mrb[0].mxu0
    %v2122 = vpop.f32.mrb[0].mxu0
    %2123 = vdwg.mxu0
    %2124 = vmatprep.subr.bf16.mxu0 0
    %2125 = vmatpush1.bf16.msra.mxu0 %v1927
    %2126 = vmatprep.subr.bf16.mxu0 0
    %2127 = vmatpush1.bf16.msra.mxu0 %v1930
    %2128 = vmatprep.subr.bf16.mxu0 0
    %2129 = vmatpush1.bf16.msra.mxu0 %v1933
    %2130 = vmatprep.subr.bf16.mxu0 0
    %2131 = vmatpush1.bf16.msra.mxu0 %v1936
    %2132 = vmatprep.subr.bf16.mxu0 0
    %2133 = vmatpush1.bf16.msra.mxu0 %v1939
    %2134 = vmatprep.subr.bf16.mxu0 0
    %2135 = vmatpush1.bf16.msra.mxu0 %v1942
    %2136 = vmatprep.subr.bf16.mxu0 0
    %2137 = vmatpush1.bf16.msra.mxu0 %v1945
    %2138 = vmatprep.subr.bf16.mxu0 0
    %2139 = vmatpush1.bf16.msra.mxu0 %v1948
    %2140 = vmatprep.subr.bf16.mxu0 0
    %2141 = vmatpush1.bf16.msra.mxu0 0
    %2142 = vmatprep.subr.bf16.mxu0 0
    %2143 = vmatpush1.bf16.msra.mxu0 0
    %2144 = vmatprep.subr.bf16.mxu0 0
    %2145 = vmatpush1.bf16.msra.mxu0 0
    %2146 = vmatprep.subr.bf16.mxu0 0
    %2147 = vmatpush1.bf16.msra.mxu0 0
    %2148 = vmatprep.subr.bf16.mxu0 0
    %2149 = vmatpush1.bf16.msra.mxu0 0
    %2150 = vmatprep.subr.bf16.mxu0 0
    %2151 = vmatpush1.bf16.msra.mxu0 0
    %2152 = vmatprep.subr.bf16.mxu0 0
    %2153 = vmatpush1.bf16.msra.mxu0 0
    %2154 = vmatprep.subr.bf16.mxu0 0
    %2155 = vmatpush1.bf16.msra.mxu0 0
    %2156 = vmatprep.mubr.bf16.mxu0 0
    %2157 = vmatmul.mubr.bf16.gmra.mrb[0].mxu0 %v2082
    %v2158 = vpop.f32.mrb[0].mxu0
    %v2159 = vadd.f32 0.0, %v2158
    %v2160 = vpop.f32.mrb[0].mxu0
    %v2161 = vpop.f32.mrb[0].mxu0
    %v2162 = vpop.f32.mrb[0].mxu0
    %2163 = vdwg.mxu0
    %v2164 = vadd.f32 %v2079, %v2118
    %v2165 = vxor.u32 %v2164, 2147483648
    %v2166 = vmul.f32 %v2165, 1.442695
    %v2167 = vpow.pop %v2166
    %v2168 = vadd.f32 %v2167, 1.0
    %v2169 = vrcp.pop %v2168
    %v2170 = vmul.f32 1.0, %v2169
    %v2171 = vadd.f32 %v2080, %v2120
    %v2172 = vxor.u32 %v2171, 2147483648
    %v2173 = vmul.f32 %v2172, 1.442695
    %v2174 = vpow.pop %v2173
    %v2175 = vadd.f32 %v2174, 1.0
    %v2176 = vrcp.pop %v2175
    %v2177 = vmul.f32 1.0, %v2176
    %v2178 = vadd.f32 %v2159, %v501
    %v2179 = vmul.f32 %v2170, %v2178
    %v2180 = vadd.f32 %v2081, %v2179
    %v2181 = vtanh.pop %v2180
    %v2182 = vsub.f32 1.0, %v2177
    %v2183 = vmul.f32 %v2182, %v2181
    %v2184 = vmul.f32 %v2177, %v2075
    %v2185 = vadd.f32 %v2183, %v2184
    %s2186 = scalar_lea.vmem [#allocation5], 8
    %2187 = vst [vmem:[%s2186] sm:$0xff] %v2185
    %s2188 = smul.addr %s853, 8
    %s2189 = scalar_lea.vmem [#allocation4], %s2188
    %v2190 = vld [vmem:[%s2189] sm:$0xff]
    %v2191 = vld [vmem:[%s2189 + $0x8] sm:$0xff]
    %v2192 = vld [vmem:[%s2189 + $0x10] sm:$0xff]
    %v2193 = vpack.c.bf16 %v2185, %v2185
    %2194 = vmatprep.subr.bf16.mxu0 %v1926
    %2195 = vmatpush1.bf16.msra.mxu0 %v1925
    %2196 = vmatprep.subr.bf16.mxu0 %v1929
    %2197 = vmatpush1.bf16.msra.mxu0 %v1928
    %2198 = vmatprep.subr.bf16.mxu0 %v1932
    %2199 = vmatpush1.bf16.msra.mxu0 %v1931
    %2200 = vmatprep.subr.bf16.mxu0 %v1935
    %2201 = vmatpush1.bf16.msra.mxu0 %v1934
    %2202 = vmatprep.subr.bf16.mxu0 %v1938
    %2203 = vmatpush1.bf16.msra.mxu0 %v1937
    %2204 = vmatprep.subr.bf16.mxu0 %v1941
    %2205 = vmatpush1.bf16.msra.mxu0 %v1940
    %2206 = vmatprep.subr.bf16.mxu0 %v1944
    %2207 = vmatpush1.bf16.msra.mxu0 %v1943
    %2208 = vmatprep.subr.bf16.mxu0 %v1947
    %2209 = vmatpush1.bf16.msra.mxu0 %v1946
    %2210 = vmatprep.subr.bf16.mxu0 0
    %2211 = vmatpush1.bf16.msra.mxu0 0
    %2212 = vmatprep.subr.bf16.mxu0 0
    %2213 = vmatpush1.bf16.msra.mxu0 0
    %2214 = vmatprep.subr.bf16.mxu0 0
    %2215 = vmatpush1.bf16.msra.mxu0 0
    %2216 = vmatprep.subr.bf16.mxu0 0
    %2217 = vmatpush1.bf16.msra.mxu0 0
    %2218 = vmatprep.subr.bf16.mxu0 0
    %2219 = vmatpush1.bf16.msra.mxu0 0
    %2220 = vmatprep.subr.bf16.mxu0 0
    %2221 = vmatpush1.bf16.msra.mxu0 0
    %2222 = vmatprep.subr.bf16.mxu0 0
    %2223 = vmatpush1.bf16.msra.mxu0 0
    %2224 = vmatprep.subr.bf16.mxu0 0
    %2225 = vmatpush1.bf16.msra.mxu0 0
    %2226 = vmatprep.mubr.bf16.mxu0 0
    %2227 = vmatmul.mubr.bf16.gmra.mrb[0].mxu0 %v2193
    %v2228 = vpop.f32.mrb[0].mxu0
    %v2229 = vadd.f32 0.0, %v2228
    %v2230 = vpop.f32.mrb[0].mxu0
    %v2231 = vadd.f32 0.0, %v2230
    %v2232 = vpop.f32.mrb[0].mxu0
    %v2233 = vpop.f32.mrb[0].mxu0
    %2234 = vdwg.mxu0
    %2235 = vmatprep.subr.bf16.mxu0 0
    %2236 = vmatpush1.bf16.msra.mxu0 %v1927
    %2237 = vmatprep.subr.bf16.mxu0 0
    %2238 = vmatpush1.bf16.msra.mxu0 %v1930
    %2239 = vmatprep.subr.bf16.mxu0 0
    %2240 = vmatpush1.bf16.msra.mxu0 %v1933
    %2241 = vmatprep.subr.bf16.mxu0 0
    %2242 = vmatpush1.bf16.msra.mxu0 %v1936
    %2243 = vmatprep.subr.bf16.mxu0 0
    %2244 = vmatpush1.bf16.msra.mxu0 %v1939
    %2245 = vmatprep.subr.bf16.mxu0 0
    %2246 = vmatpush1.bf16.msra.mxu0 %v1942
    %2247 = vmatprep.subr.bf16.mxu0 0
    %2248 = vmatpush1.bf16.msra.mxu0 %v1945
    %2249 = vmatprep.subr.bf16.mxu0 0
    %2250 = vmatpush1.bf16.msra.mxu0 %v1948
    %2251 = vmatprep.subr.bf16.mxu0 0
    %2252 = vmatpush1.bf16.msra.mxu0 0
    %2253 = vmatprep.subr.bf16.mxu0 0
    %2254 = vmatpush1.bf16.msra.mxu0 0
    %2255 = vmatprep.subr.bf16.mxu0 0
    %2256 = vmatpush1.bf16.msra.mxu0 0
    %2257 = vmatprep.subr.bf16.mxu0 0
    %2258 = vmatpush1.bf16.msra.mxu0 0
    %2259 = vmatprep.subr.bf16.mxu0 0
    %2260 = vmatpush1.bf16.msra.mxu0 0
    %2261 = vmatprep.subr.bf16.mxu0 0
    %2262 = vmatpush1.bf16.msra.mxu0 0
    %2263 = vmatprep.subr.bf16.mxu0 0
    %2264 = vmatpush1.bf16.msra.mxu0 0
    %2265 = vmatprep.subr.bf16.mxu0 0
    %2266 = vmatpush1.bf16.msra.mxu0 0
    %2267 = vmatprep.mubr.bf16.mxu0 0
    %2268 = vmatmul.mubr.bf16.gmra.mrb[0].mxu0 %v2193
    %v2269 = vpop.f32.mrb[0].mxu0
    %v2270 = vadd.f32 0.0, %v2269
    %v2271 = vpop.f32.mrb[0].mxu0
    %v2272 = vpop.f32.mrb[0].mxu0
    %v2273 = vpop.f32.mrb[0].mxu0
    %2274 = vdwg.mxu0
    %v2275 = vadd.f32 %v2190, %v2229
    %v2276 = vxor.u32 %v2275, 2147483648
    %v2277 = vmul.f32 %v2276, 1.442695
    %v2278 = vpow.pop %v2277
    %v2279 = vadd.f32 %v2278, 1.0
    %v2280 = vrcp.pop %v2279
    %v2281 = vmul.f32 1.0, %v2280
    %v2282 = vadd.f32 %v2191, %v2231
    %v2283 = vxor.u32 %v2282, 2147483648
    %v2284 = vmul.f32 %v2283, 1.442695
    %v2285 = vpow.pop %v2284
    %v2286 = vadd.f32 %v2285, 1.0
    %v2287 = vrcp.pop %v2286
    %v2288 = vmul.f32 1.0, %v2287
    %v2289 = vadd.f32 %v2270, %v501
    %v2290 = vmul.f32 %v2281, %v2289
    %v2291 = vadd.f32 %v2192, %v2290
    %v2292 = vtanh.pop %v2291
    %v2293 = vsub.f32 1.0, %v2288
    %v2294 = vmul.f32 %v2293, %v2292
    %v2295 = vmul.f32 %v2288, %v2185
    %v2296 = vadd.f32 %v2294, %v2295
    %s2297 = scalar_lea.vmem [#allocation5], 16
    %2298 = vst [vmem:[%s2297] sm:$0xff] %v2296
    %s2299 = smul.addr %s965, 8
    %s2300 = scalar_lea.vmem [#allocation4], %s2299
    %v2301 = vld [vmem:[%s2300] sm:$0xff]
    %v2302 = vld [vmem:[%s2300 + $0x8] sm:$0xff]
    %v2303 = vld [vmem:[%s2300 + $0x10] sm:$0xff]
    %v2304 = vpack.c.bf16 %v2296, %v2296
    %2305 = vmatprep.subr.bf16.mxu0 %v1926
    %2306 = vmatpush1.bf16.msra.mxu0 %v1925
    %2307 = vmatprep.subr.bf16.mxu0 %v1929
    %2308 = vmatpush1.bf16.msra.mxu0 %v1928
    %2309 = vmatprep.subr.bf16.mxu0 %v1932
    %2310 = vmatpush1.bf16.msra.mxu0 %v1931
    %2311 = vmatprep.subr.bf16.mxu0 %v1935
    %2312 = vmatpush1.bf16.msra.mxu0 %v1934
    %2313 = vmatprep.subr.bf16.mxu0 %v1938
    %2314 = vmatpush1.bf16.msra.mxu0 %v1937
    %2315 = vmatprep.subr.bf16.mxu0 %v1941
    %2316 = vmatpush1.bf16.msra.mxu0 %v1940
    %2317 = vmatprep.subr.bf16.mxu0 %v1944
    %2318 = vmatpush1.bf16.msra.mxu0 %v1943
    %2319 = vmatprep.subr.bf16.mxu0 %v1947
    %2320 = vmatpush1.bf16.msra.mxu0 %v1946
    %2321 = vmatprep.subr.bf16.mxu0 0
    %2322 = vmatpush1.bf16.msra.mxu0 0
    %2323 = vmatprep.subr.bf16.mxu0 0
    %2324 = vmatpush1.bf16.msra.mxu0 0
    %2325 = vmatprep.subr.bf16.mxu0 0
    %2326 = vmatpush1.bf16.msra.mxu0 0
    %2327 = vmatprep.subr.bf16.mxu0 0
    %2328 = vmatpush1.bf16.msra.mxu0 0
    %2329 = vmatprep.subr.bf16.mxu0 0
    %2330 = vmatpush1.bf16.msra.mxu0 0
    %2331 = vmatprep.subr.bf16.mxu0 0
    %2332 = vmatpush1.bf16.msra.mxu0 0
    %2333 = vmatprep.subr.bf16.mxu0 0
    %2334 = vmatpush1.bf16.msra.mxu0 0
    %2335 = vmatprep.subr.bf16.mxu0 0
    %2336 = vmatpush1.bf16.msra.mxu0 0
    %2337 = vmatprep.mubr.bf16.mxu0 0
    %2338 = vmatmul.mubr.bf16.gmra.mrb[0].mxu0 %v2304
    %v2339 = vpop.f32.mrb[0].mxu0
    %v2340 = vadd.f32 0.0, %v2339
    %v2341 = vpop.f32.mrb[0].mxu0
    %v2342 = vadd.f32 0.0, %v2341
    %v2343 = vpop.f32.mrb[0].mxu0
    %v2344 = vpop.f32.mrb[0].mxu0
    %2345 = vdwg.mxu0
    %2346 = vmatprep.subr.bf16.mxu0 0
    %2347 = vmatpush1.bf16.msra.mxu0 %v1927
    %2348 = vmatprep.subr.bf16.mxu0 0
    %2349 = vmatpush1.bf16.msra.mxu0 %v1930
    %2350 = vmatprep.subr.bf16.mxu0 0
    %2351 = vmatpush1.bf16.msra.mxu0 %v1933
    %2352 = vmatprep.subr.bf16.mxu0 0
    %2353 = vmatpush1.bf16.msra.mxu0 %v1936
    %2354 = vmatprep.subr.bf16.mxu0 0
    %2355 = vmatpush1.bf16.msra.mxu0 %v1939
    %2356 = vmatprep.subr.bf16.mxu0 0
    %2357 = vmatpush1.bf16.msra.mxu0 %v1942
    %2358 = vmatprep.subr.bf16.mxu0 0
    %2359 = vmatpush1.bf16.msra.mxu0 %v1945
    %2360 = vmatprep.subr.bf16.mxu0 0
    %2361 = vmatpush1.bf16.msra.mxu0 %v1948
    %2362 = vmatprep.subr.bf16.mxu0 0
    %2363 = vmatpush1.bf16.msra.mxu0 0
    %2364 = vmatprep.subr.bf16.mxu0 0
    %2365 = vmatpush1.bf16.msra.mxu0 0
    %2366 = vmatprep.subr.bf16.mxu0 0
    %2367 = vmatpush1.bf16.msra.mxu0 0
    %2368 = vmatprep.subr.bf16.mxu0 0
    %2369 = vmatpush1.bf16.msra.mxu0 0
    %2370 = vmatprep.subr.bf16.mxu0 0
    %2371 = vmatpush1.bf16.msra.mxu0 0
    %2372 = vmatprep.subr.bf16.mxu0 0
    %2373 = vmatpush1.bf16.msra.mxu0 0
    %2374 = vmatprep.subr.bf16.mxu0 0
    %2375 = vmatpush1.bf16.msra.mxu0 0
    %2376 = vmatprep.subr.bf16.mxu0 0
    %2377 = vmatpush1.bf16.msra.mxu0 0
    %2378 = vmatprep.mubr.bf16.mxu0 0
    %2379 = vmatmul.mubr.bf16.gmra.mrb[0].mxu0 %v2304
    %v2380 = vpop.f32.mrb[0].mxu0
    %v2381 = vadd.f32 0.0, %v2380
    %v2382 = vpop.f32.mrb[0].mxu0
    %v2383 = vpop.f32.mrb[0].mxu0
    %v2384 = vpop.f32.mrb[0].mxu0
    %2385 = vdwg.mxu0
    %v2386 = vadd.f32 %v2301, %v2340
    %v2387 = vxor.u32 %v2386, 2147483648
    %v2388 = vmul.f32 %v2387, 1.442695
    %v2389 = vpow.pop %v2388
    %v2390 = vadd.f32 %v2389, 1.0
    %v2391 = vrcp.pop %v2390
    %v2392 = vmul.f32 1.0, %v2391
    %v2393 = vadd.f32 %v2302, %v2342
    %v2394 = vxor.u32 %v2393, 2147483648
    %v2395 = vmul.f32 %v2394, 1.442695
    %v2396 = vpow.pop %v2395
    %v2397 = vadd.f32 %v2396, 1.0
    %v2398 = vrcp.pop %v2397
    %v2399 = vmul.f32 1.0, %v2398
    %v2400 = vadd.f32 %v2381, %v501
    %v2401 = vmul.f32 %v2392, %v2400
    %v2402 = vadd.f32 %v2303, %v2401
    %v2403 = vtanh.pop %v2402
    %v2404 = vsub.f32 1.0, %v2399
    %v2405 = vmul.f32 %v2404, %v2403
    %v2406 = vmul.f32 %v2399, %v2296
    %v2407 = vadd.f32 %v2405, %v2406
    %s2408 = scalar_lea.vmem [#allocation5], 24
    %2409 = vst [vmem:[%s2408] sm:$0xff] %v2407
    %s2410 = smul.addr %s1077, 8
    %s2411 = scalar_lea.vmem [#allocation4], %s2410
    %v2412 = vld [vmem:[%s2411] sm:$0xff]
    %v2413 = vld [vmem:[%s2411 + $0x8] sm:$0xff]
    %v2414 = vld [vmem:[%s2411 + $0x10] sm:$0xff]
    %v2415 = vpack.c.bf16 %v2407, %v2407
    %2416 = vmatprep.subr.bf16.mxu0 %v1926
    %2417 = vmatpush1.bf16.msra.mxu0 %v1925
    %2418 = vmatprep.subr.bf16.mxu0 %v1929
    %2419 = vmatpush1.bf16.msra.mxu0 %v1928
    %2420 = vmatprep.subr.bf16.mxu0 %v1932
    %2421 = vmatpush1.bf16.msra.mxu0 %v1931
    %2422 = vmatprep.subr.bf16.mxu0 %v1935
    %2423 = vmatpush1.bf16.msra.mxu0 %v1934
    %2424 = vmatprep.subr.bf16.mxu0 %v1938
    %2425 = vmatpush1.bf16.msra.mxu0 %v1937
    %2426 = vmatprep.subr.bf16.mxu0 %v1941
    %2427 = vmatpush1.bf16.msra.mxu0 %v1940
    %2428 = vmatprep.subr.bf16.mxu0 %v1944
    %2429 = vmatpush1.bf16.msra.mxu0 %v1943
    %2430 = vmatprep.subr.bf16.mxu0 %v1947
    %2431 = vmatpush1.bf16.msra.mxu0 %v1946
    %2432 = vmatprep.subr.bf16.mxu0 0
    %2433 = vmatpush1.bf16.msra.mxu0 0
    %2434 = vmatprep.subr.bf16.mxu0 0
    %2435 = vmatpush1.bf16.msra.mxu0 0
    %2436 = vmatprep.subr.bf16.mxu0 0
    %2437 = vmatpush1.bf16.msra.mxu0 0
    %2438 = vmatprep.subr.bf16.mxu0 0
    %2439 = vmatpush1.bf16.msra.mxu0 0
    %2440 = vmatprep.subr.bf16.mxu0 0
    %2441 = vmatpush1.bf16.msra.mxu0 0
    %2442 = vmatprep.subr.bf16.mxu0 0
    %2443 = vmatpush1.bf16.msra.mxu0 0
    %2444 = vmatprep.subr.bf16.mxu0 0
    %2445 = vmatpush1.bf16.msra.mxu0 0
    %2446 = vmatprep.subr.bf16.mxu0 0
    %2447 = vmatpush1.bf16.msra.mxu0 0
    %2448 = vmatprep.mubr.bf16.mxu0 0
    %2449 = vmatmul.mubr.bf16.gmra.mrb[0].mxu0 %v2415
    %v2450 = vpop.f32.mrb[0].mxu0
    %v2451 = vadd.f32 0.0, %v2450
    %v2452 = vpop.f32.mrb[0].mxu0
    %v2453 = vadd.f32 0.0, %v2452
    %v2454 = vpop.f32.mrb[0].mxu0
    %v2455 = vpop.f32.mrb[0].mxu0
    %2456 = vdwg.mxu0
    %2457 = vmatprep.subr.bf16.mxu0 0
    %2458 = vmatpush1.bf16.msra.mxu0 %v1927
    %2459 = vmatprep.subr.bf16.mxu0 0
    %2460 = vmatpush1.bf16.msra.mxu0 %v1930
    %2461 = vmatprep.subr.bf16.mxu0 0
    %2462 = vmatpush1.bf16.msra.mxu0 %v1933
    %2463 = vmatprep.subr.bf16.mxu0 0
    %2464 = vmatpush1.bf16.msra.mxu0 %v1936
    %2465 = vmatprep.subr.bf16.mxu0 0
    %2466 = vmatpush1.bf16.msra.mxu0 %v1939
    %2467 = vmatprep.subr.bf16.mxu0 0
    %2468 = vmatpush1.bf16.msra.mxu0 %v1942
    %2469 = vmatprep.subr.bf16.mxu0 0
    %2470 = vmatpush1.bf16.msra.mxu0 %v1945
    %2471 = vmatprep.subr.bf16.mxu0 0
    %2472 = vmatpush1.bf16.msra.mxu0 %v1948
    %2473 = vmatprep.subr.bf16.mxu0 0
    %2474 = vmatpush1.bf16.msra.mxu0 0
    %2475 = vmatprep.subr.bf16.mxu0 0
    %2476 = vmatpush1.bf16.msra.mxu0 0
    %2477 = vmatprep.subr.bf16.mxu0 0
    %2478 = vmatpush1.bf16.msra.mxu0 0
    %2479 = vmatprep.subr.bf16.mxu0 0
    %2480 = vmatpush1.bf16.msra.mxu0 0
    %2481 = vmatprep.subr.bf16.mxu0 0
    %2482 = vmatpush1.bf16.msra.mxu0 0
    %2483 = vmatprep.subr.bf16.mxu0 0
    %2484 = vmatpush1.bf16.msra.mxu0 0
    %2485 = vmatprep.subr.bf16.mxu0 0
    %2486 = vmatpush1.bf16.msra.mxu0 0
    %2487 = vmatprep.subr.bf16.mxu0 0
    %2488 = vmatpush1.bf16.msra.mxu0 0
    %2489 = vmatprep.mubr.bf16.mxu0 0
    %2490 = vmatmul.mubr.bf16.gmra.mrb[0].mxu0 %v2415
    %v2491 = vpop.f32.mrb[0].mxu0
    %v2492 = vadd.f32 0.0, %v2491
    %v2493 = vpop.f32.mrb[0].mxu0
    %v2494 = vpop.f32.mrb[0].mxu0
    %v2495 = vpop.f32.mrb[0].mxu0
    %2496 = vdwg.mxu0
    %v2497 = vadd.f32 %v2412, %v2451
    %v2498 = vxor.u32 %v2497, 2147483648
    %v2499 = vmul.f32 %v2498, 1.442695
    %v2500 = vpow.pop %v2499
    %v2501 = vadd.f32 %v2500, 1.0
    %v2502 = vrcp.pop %v2501
    %v2503 = vmul.f32 1.0, %v2502
    %v2504 = vadd.f32 %v2413, %v2453
    %v2505 = vxor.u32 %v2504, 2147483648
    %v2506 = vmul.f32 %v2505, 1.442695
    %v2507 = vpow.pop %v2506
    %v2508 = vadd.f32 %v2507, 1.0
    %v2509 = vrcp.pop %v2508
    %v2510 = vmul.f32 1.0, %v2509
    %v2511 = vadd.f32 %v2492, %v501
    %v2512 = vmul.f32 %v2503, %v2511
    %v2513 = vadd.f32 %v2414, %v2512
    %v2514 = vtanh.pop %v2513
    %v2515 = vsub.f32 1.0, %v2510
    %v2516 = vmul.f32 %v2515, %v2514
    %v2517 = vmul.f32 %v2510, %v2407
    %v2518 = vadd.f32 %v2516, %v2517
    %s2519 = scalar_lea.vmem [#allocation5], 32
    %2520 = vst [vmem:[%s2519] sm:$0xff] %v2518
    %s2521 = smul.addr %s1189, 8
    %s2522 = scalar_lea.vmem [#allocation4], %s2521
    %v2523 = vld [vmem:[%s2522] sm:$0xff]
    %v2524 = vld [vmem:[%s2522 + $0x8] sm:$0xff]
    %v2525 = vld [vmem:[%s2522 + $0x10] sm:$0xff]
    %v2526 = vpack.c.bf16 %v2518, %v2518
    %2527 = vmatprep.subr.bf16.mxu0 %v1926
    %2528 = vmatpush1.bf16.msra.mxu0 %v1925
    %2529 = vmatprep.subr.bf16.mxu0 %v1929
    %2530 = vmatpush1.bf16.msra.mxu0 %v1928
    %2531 = vmatprep.subr.bf16.mxu0 %v1932
    %2532 = vmatpush1.bf16.msra.mxu0 %v1931
    %2533 = vmatprep.subr.bf16.mxu0 %v1935
    %2534 = vmatpush1.bf16.msra.mxu0 %v1934
    %2535 = vmatprep.subr.bf16.mxu0 %v1938
    %2536 = vmatpush1.bf16.msra.mxu0 %v1937
    %2537 = vmatprep.subr.bf16.mxu0 %v1941
    %2538 = vmatpush1.bf16.msra.mxu0 %v1940
    %2539 = vmatprep.subr.bf16.mxu0 %v1944
    %2540 = vmatpush1.bf16.msra.mxu0 %v1943
    %2541 = vmatprep.subr.bf16.mxu0 %v1947
    %2542 = vmatpush1.bf16.msra.mxu0 %v1946
    %2543 = vmatprep.subr.bf16.mxu0 0
    %2544 = vmatpush1.bf16.msra.mxu0 0
    %2545 = vmatprep.subr.bf16.mxu0 0
    %2546 = vmatpush1.bf16.msra.mxu0 0
    %2547 = vmatprep.subr.bf16.mxu0 0
    %2548 = vmatpush1.bf16.msra.mxu0 0
    %2549 = vmatprep.subr.bf16.mxu0 0
    %2550 = vmatpush1.bf16.msra.mxu0 0
    %2551 = vmatprep.subr.bf16.mxu0 0
    %2552 = vmatpush1.bf16.msra.mxu0 0
    %2553 = vmatprep.subr.bf16.mxu0 0
    %2554 = vmatpush1.bf16.msra.mxu0 0
    %2555 = vmatprep.subr.bf16.mxu0 0
    %2556 = vmatpush1.bf16.msra.mxu0 0
    %2557 = vmatprep.subr.bf16.mxu0 0
    %2558 = vmatpush1.bf16.msra.mxu0 0
    %2559 = vmatprep.mubr.bf16.mxu0 0
    %2560 = vmatmul.mubr.bf16.gmra.mrb[0].mxu0 %v2526
    %v2561 = vpop.f32.mrb[0].mxu0
    %v2562 = vadd.f32 0.0, %v2561
    %v2563 = vpop.f32.mrb[0].mxu0
    %v2564 = vadd.f32 0.0, %v2563
    %v2565 = vpop.f32.mrb[0].mxu0
    %v2566 = vpop.f32.mrb[0].mxu0
    %2567 = vdwg.mxu0
    %2568 = vmatprep.subr.bf16.mxu0 0
    %2569 = vmatpush1.bf16.msra.mxu0 %v1927
    %2570 = vmatprep.subr.bf16.mxu0 0
    %2571 = vmatpush1.bf16.msra.mxu0 %v1930
    %2572 = vmatprep.subr.bf16.mxu0 0
    %2573 = vmatpush1.bf16.msra.mxu0 %v1933
    %2574 = vmatprep.subr.bf16.mxu0 0
    %2575 = vmatpush1.bf16.msra.mxu0 %v1936
    %2576 = vmatprep.subr.bf16.mxu0 0
    %2577 = vmatpush1.bf16.msra.mxu0 %v1939
    %2578 = vmatprep.subr.bf16.mxu0 0
    %2579 = vmatpush1.bf16.msra.mxu0 %v1942
    %2580 = vmatprep.subr.bf16.mxu0 0
    %2581 = vmatpush1.bf16.msra.mxu0 %v1945
    %2582 = vmatprep.subr.bf16.mxu0 0
    %2583 = vmatpush1.bf16.msra.mxu0 %v1948
    %2584 = vmatprep.subr.bf16.mxu0 0
    %2585 = vmatpush1.bf16.msra.mxu0 0
    %2586 = vmatprep.subr.bf16.mxu0 0
    %2587 = vmatpush1.bf16.msra.mxu0 0
    %2588 = vmatprep.subr.bf16.mxu0 0
    %2589 = vmatpush1.bf16.msra.mxu0 0
    %2590 = vmatprep.subr.bf16.mxu0 0
    %2591 = vmatpush1.bf16.msra.mxu0 0
    %2592 = vmatprep.subr.bf16.mxu0 0
    %2593 = vmatpush1.bf16.msra.mxu0 0
    %2594 = vmatprep.subr.bf16.mxu0 0
    %2595 = vmatpush1.bf16.msra.mxu0 0
    %2596 = vmatprep.subr.bf16.mxu0 0
    %2597 = vmatpush1.bf16.msra.mxu0 0
    %2598 = vmatprep.subr.bf16.mxu0 0
    %2599 = vmatpush1.bf16.msra.mxu0 0
    %2600 = vmatprep.mubr.bf16.mxu0 0
    %2601 = vmatmul.mubr.bf16.gmra.mrb[0].mxu0 %v2526
    %v2602 = vpop.f32.mrb[0].mxu0
    %v2603 = vadd.f32 0.0, %v2602
    %v2604 = vpop.f32.mrb[0].mxu0
    %v2605 = vpop.f32.mrb[0].mxu0
    %v2606 = vpop.f32.mrb[0].mxu0
    %2607 = vdwg.mxu0
    %v2608 = vadd.f32 %v2523, %v2562
    %v2609 = vxor.u32 %v2608, 2147483648
    %v2610 = vmul.f32 %v2609, 1.442695
    %v2611 = vpow.pop %v2610
    %v2612 = vadd.f32 %v2611, 1.0
    %v2613 = vrcp.pop %v2612
    %v2614 = vmul.f32 1.0, %v2613
    %v2615 = vadd.f32 %v2524, %v2564
    %v2616 = vxor.u32 %v2615, 2147483648
    %v2617 = vmul.f32 %v2616, 1.442695
    %v2618 = vpow.pop %v2617
    %v2619 = vadd.f32 %v2618, 1.0
    %v2620 = vrcp.pop %v2619
    %v2621 = vmul.f32 1.0, %v2620
    %v2622 = vadd.f32 %v2603, %v501
    %v2623 = vmul.f32 %v2614, %v2622
    %v2624 = vadd.f32 %v2525, %v2623
    %v2625 = vtanh.pop %v2624
    %v2626 = vsub.f32 1.0, %v2621
    %v2627 = vmul.f32 %v2626, %v2625
    %v2628 = vmul.f32 %v2621, %v2518
    %v2629 = vadd.f32 %v2627, %v2628
    %s2630 = scalar_lea.vmem [#allocation5], 40
    %2631 = vst [vmem:[%s2630] sm:$0xff] %v2629
    %s2632 = smul.addr %s1301, 8
    %s2633 = scalar_lea.vmem [#allocation4], %s2632
    %v2634 = vld [vmem:[%s2633] sm:$0xff]
    %v2635 = vld [vmem:[%s2633 + $0x8] sm:$0xff]
    %v2636 = vld [vmem:[%s2633 + $0x10] sm:$0xff]
    %v2637 = vpack.c.bf16 %v2629, %v2629
    %2638 = vmatprep.subr.bf16.mxu0 %v1926
    %2639 = vmatpush1.bf16.msra.mxu0 %v1925
    %2640 = vmatprep.subr.bf16.mxu0 %v1929
    %2641 = vmatpush1.bf16.msra.mxu0 %v1928
    %2642 = vmatprep.subr.bf16.mxu0 %v1932
    %2643 = vmatpush1.bf16.msra.mxu0 %v1931
    %2644 = vmatprep.subr.bf16.mxu0 %v1935
    %2645 = vmatpush1.bf16.msra.mxu0 %v1934
    %2646 = vmatprep.subr.bf16.mxu0 %v1938
    %2647 = vmatpush1.bf16.msra.mxu0 %v1937
    %2648 = vmatprep.subr.bf16.mxu0 %v1941
    %2649 = vmatpush1.bf16.msra.mxu0 %v1940
    %2650 = vmatprep.subr.bf16.mxu0 %v1944
    %2651 = vmatpush1.bf16.msra.mxu0 %v1943
    %2652 = vmatprep.subr.bf16.mxu0 %v1947
    %2653 = vmatpush1.bf16.msra.mxu0 %v1946
    %2654 = vmatprep.subr.bf16.mxu0 0
    %2655 = vmatpush1.bf16.msra.mxu0 0
    %2656 = vmatprep.subr.bf16.mxu0 0
    %2657 = vmatpush1.bf16.msra.mxu0 0
    %2658 = vmatprep.subr.bf16.mxu0 0
    %2659 = vmatpush1.bf16.msra.mxu0 0
    %2660 = vmatprep.subr.bf16.mxu0 0
    %2661 = vmatpush1.bf16.msra.mxu0 0
    %2662 = vmatprep.subr.bf16.mxu0 0
    %2663 = vmatpush1.bf16.msra.mxu0 0
    %2664 = vmatprep.subr.bf16.mxu0 0
    %2665 = vmatpush1.bf16.msra.mxu0 0
    %2666 = vmatprep.subr.bf16.mxu0 0
    %2667 = vmatpush1.bf16.msra.mxu0 0
    %2668 = vmatprep.subr.bf16.mxu0 0
    %2669 = vmatpush1.bf16.msra.mxu0 0
    %2670 = vmatprep.mubr.bf16.mxu0 0
    %2671 = vmatmul.mubr.bf16.gmra.mrb[0].mxu0 %v2637
    %v2672 = vpop.f32.mrb[0].mxu0
    %v2673 = vadd.f32 0.0, %v2672
    %v2674 = vpop.f32.mrb[0].mxu0
    %v2675 = vadd.f32 0.0, %v2674
    %v2676 = vpop.f32.mrb[0].mxu0
    %v2677 = vpop.f32.mrb[0].mxu0
    %2678 = vdwg.mxu0
    %2679 = vmatprep.subr.bf16.mxu0 0
    %2680 = vmatpush1.bf16.msra.mxu0 %v1927
    %2681 = vmatprep.subr.bf16.mxu0 0
    %2682 = vmatpush1.bf16.msra.mxu0 %v1930
    %2683 = vmatprep.subr.bf16.mxu0 0
    %2684 = vmatpush1.bf16.msra.mxu0 %v1933
    %2685 = vmatprep.subr.bf16.mxu0 0
    %2686 = vmatpush1.bf16.msra.mxu0 %v1936
    %2687 = vmatprep.subr.bf16.mxu0 0
    %2688 = vmatpush1.bf16.msra.mxu0 %v1939
    %2689 = vmatprep.subr.bf16.mxu0 0
    %2690 = vmatpush1.bf16.msra.mxu0 %v1942
    %2691 = vmatprep.subr.bf16.mxu0 0
    %2692 = vmatpush1.bf16.msra.mxu0 %v1945
    %2693 = vmatprep.subr.bf16.mxu0 0
    %2694 = vmatpush1.bf16.msra.mxu0 %v1948
    %2695 = vmatprep.subr.bf16.mxu0 0
    %2696 = vmatpush1.bf16.msra.mxu0 0
    %2697 = vmatprep.subr.bf16.mxu0 0
    %2698 = vmatpush1.bf16.msra.mxu0 0
    %2699 = vmatprep.subr.bf16.mxu0 0
    %2700 = vmatpush1.bf16.msra.mxu0 0
    %2701 = vmatprep.subr.bf16.mxu0 0
    %2702 = vmatpush1.bf16.msra.mxu0 0
    %2703 = vmatprep.subr.bf16.mxu0 0
    %2704 = vmatpush1.bf16.msra.mxu0 0
    %2705 = vmatprep.subr.bf16.mxu0 0
    %2706 = vmatpush1.bf16.msra.mxu0 0
    %2707 = vmatprep.subr.bf16.mxu0 0
    %2708 = vmatpush1.bf16.msra.mxu0 0
    %2709 = vmatprep.subr.bf16.mxu0 0
    %2710 = vmatpush1.bf16.msra.mxu0 0
    %2711 = vmatprep.mubr.bf16.mxu0 0
    %2712 = vmatmul.mubr.bf16.gmra.mrb[0].mxu0 %v2637
    %v2713 = vpop.f32.mrb[0].mxu0
    %v2714 = vadd.f32 0.0, %v2713
    %v2715 = vpop.f32.mrb[0].mxu0
    %v2716 = vpop.f32.mrb[0].mxu0
    %v2717 = vpop.f32.mrb[0].mxu0
    %2718 = vdwg.mxu0
    %v2719 = vadd.f32 %v2634, %v2673
    %v2720 = vxor.u32 %v2719, 2147483648
    %v2721 = vmul.f32 %v2720, 1.442695
    %v2722 = vpow.pop %v2721
    %v2723 = vadd.f32 %v2722, 1.0
    %v2724 = vrcp.pop %v2723
    %v2725 = vmul.f32 1.0, %v2724
    %v2726 = vadd.f32 %v2635, %v2675
    %v2727 = vxor.u32 %v2726, 2147483648
    %v2728 = vmul.f32 %v2727, 1.442695
    %v2729 = vpow.pop %v2728
    %v2730 = vadd.f32 %v2729, 1.0
    %v2731 = vrcp.pop %v2730
    %v2732 = vmul.f32 1.0, %v2731
    %v2733 = vadd.f32 %v2714, %v501
    %v2734 = vmul.f32 %v2725, %v2733
    %v2735 = vadd.f32 %v2636, %v2734
    %v2736 = vtanh.pop %v2735
    %v2737 = vsub.f32 1.0, %v2732
    %v2738 = vmul.f32 %v2737, %v2736
    %v2739 = vmul.f32 %v2732, %v2629
    %v2740 = vadd.f32 %v2738, %v2739
    %s2741 = scalar_lea.vmem [#allocation5], 48
    %2742 = vst [vmem:[%s2741] sm:$0xff] %v2740
    %s2743 = smul.addr %s1413, 8
    %s2744 = scalar_lea.vmem [#allocation4], %s2743
    %v2745 = vld [vmem:[%s2744] sm:$0xff]
    %v2746 = vld [vmem:[%s2744 + $0x8] sm:$0xff]
    %v2747 = vld [vmem:[%s2744 + $0x10] sm:$0xff]
    %v2748 = vpack.c.bf16 %v2740, %v2740
    %2749 = vmatprep.subr.bf16.mxu0 %v1926
    %2750 = vmatpush1.bf16.msra.mxu0 %v1925
    %2751 = vmatprep.subr.bf16.mxu0 %v1929
    %2752 = vmatpush1.bf16.msra.mxu0 %v1928
    %2753 = vmatprep.subr.bf16.mxu0 %v1932
    %2754 = vmatpush1.bf16.msra.mxu0 %v1931
    %2755 = vmatprep.subr.bf16.mxu0 %v1935
    %2756 = vmatpush1.bf16.msra.mxu0 %v1934
    %2757 = vmatprep.subr.bf16.mxu0 %v1938
    %2758 = vmatpush1.bf16.msra.mxu0 %v1937
    %2759 = vmatprep.subr.bf16.mxu0 %v1941
    %2760 = vmatpush1.bf16.msra.mxu0 %v1940
    %2761 = vmatprep.subr.bf16.mxu0 %v1944
    %2762 = vmatpush1.bf16.msra.mxu0 %v1943
    %2763 = vmatprep.subr.bf16.mxu0 %v1947
    %2764 = vmatpush1.bf16.msra.mxu0 %v1946
    %2765 = vmatprep.subr.bf16.mxu0 0
    %2766 = vmatpush1.bf16.msra.mxu0 0
    %2767 = vmatprep.subr.bf16.mxu0 0
    %2768 = vmatpush1.bf16.msra.mxu0 0
    %2769 = vmatprep.subr.bf16.mxu0 0
    %2770 = vmatpush1.bf16.msra.mxu0 0
    %2771 = vmatprep.subr.bf16.mxu0 0
    %2772 = vmatpush1.bf16.msra.mxu0 0
    %2773 = vmatprep.subr.bf16.mxu0 0
    %2774 = vmatpush1.bf16.msra.mxu0 0
    %2775 = vmatprep.subr.bf16.mxu0 0
    %2776 = vmatpush1.bf16.msra.mxu0 0
    %2777 = vmatprep.subr.bf16.mxu0 0
    %2778 = vmatpush1.bf16.msra.mxu0 0
    %2779 = vmatprep.subr.bf16.mxu0 0
    %2780 = vmatpush1.bf16.msra.mxu0 0
    %2781 = vmatprep.mubr.bf16.mxu0 0
    %2782 = vmatmul.mubr.bf16.gmra.mrb[0].mxu0 %v2748
    %v2783 = vpop.f32.mrb[0].mxu0
    %v2784 = vadd.f32 0.0, %v2783
    %v2785 = vpop.f32.mrb[0].mxu0
    %v2786 = vadd.f32 0.0, %v2785
    %v2787 = vpop.f32.mrb[0].mxu0
    %v2788 = vpop.f32.mrb[0].mxu0
    %2789 = vdwg.mxu0
    %2790 = vmatprep.subr.bf16.mxu0 0
    %2791 = vmatpush1.bf16.msra.mxu0 %v1927
    %2792 = vmatprep.subr.bf16.mxu0 0
    %2793 = vmatpush1.bf16.msra.mxu0 %v1930
    %2794 = vmatprep.subr.bf16.mxu0 0
    %2795 = vmatpush1.bf16.msra.mxu0 %v1933
    %2796 = vmatprep.subr.bf16.mxu0 0
    %2797 = vmatpush1.bf16.msra.mxu0 %v1936
    %2798 = vmatprep.subr.bf16.mxu0 0
    %2799 = vmatpush1.bf16.msra.mxu0 %v1939
    %2800 = vmatprep.subr.bf16.mxu0 0
    %2801 = vmatpush1.bf16.msra.mxu0 %v1942
    %2802 = vmatprep.subr.bf16.mxu0 0
    %2803 = vmatpush1.bf16.msra.mxu0 %v1945
    %2804 = vmatprep.subr.bf16.mxu0 0
    %2805 = vmatpush1.bf16.msra.mxu0 %v1948
    %2806 = vmatprep.subr.bf16.mxu0 0
    %2807 = vmatpush1.bf16.msra.mxu0 0
    %2808 = vmatprep.subr.bf16.mxu0 0
    %2809 = vmatpush1.bf16.msra.mxu0 0
    %2810 = vmatprep.subr.bf16.mxu0 0
    %2811 = vmatpush1.bf16.msra.mxu0 0
    %2812 = vmatprep.subr.bf16.mxu0 0
    %2813 = vmatpush1.bf16.msra.mxu0 0
    %2814 = vmatprep.subr.bf16.mxu0 0
    %2815 = vmatpush1.bf16.msra.mxu0 0
    %2816 = vmatprep.subr.bf16.mxu0 0
    %2817 = vmatpush1.bf16.msra.mxu0 0
    %2818 = vmatprep.subr.bf16.mxu0 0
    %2819 = vmatpush1.bf16.msra.mxu0 0
    %2820 = vmatprep.subr.bf16.mxu0 0
    %2821 = vmatpush1.bf16.msra.mxu0 0
    %2822 = vmatprep.mubr.bf16.mxu0 0
    %2823 = vmatmul.mubr.bf16.gmra.mrb[0].mxu0 %v2748
    %v2824 = vpop.f32.mrb[0].mxu0
    %v2825 = vadd.f32 0.0, %v2824
    %v2826 = vpop.f32.mrb[0].mxu0
    %v2827 = vpop.f32.mrb[0].mxu0
    %v2828 = vpop.f32.mrb[0].mxu0
    %2829 = vdwg.mxu0
    %v2830 = vadd.f32 %v2745, %v2784
    %v2831 = vxor.u32 %v2830, 2147483648
    %v2832 = vmul.f32 %v2831, 1.442695
    %v2833 = vpow.pop %v2832
    %v2834 = vadd.f32 %v2833, 1.0
    %v2835 = vrcp.pop %v2834
    %v2836 = vmul.f32 1.0, %v2835
    %v2837 = vadd.f32 %v2746, %v2786
    %v2838 = vxor.u32 %v2837, 2147483648
    %v2839 = vmul.f32 %v2838, 1.442695
    %v2840 = vpow.pop %v2839
    %v2841 = vadd.f32 %v2840, 1.0
    %v2842 = vrcp.pop %v2841
    %v2843 = vmul.f32 1.0, %v2842
    %v2844 = vadd.f32 %v2825, %v501
    %v2845 = vmul.f32 %v2836, %v2844
    %v2846 = vadd.f32 %v2747, %v2845
    %v2847 = vtanh.pop %v2846
    %v2848 = vsub.f32 1.0, %v2843
    %v2849 = vmul.f32 %v2848, %v2847
    %v2850 = vmul.f32 %v2843, %v2740
    %v2851 = vadd.f32 %v2849, %v2850
    %s2852 = scalar_lea.vmem [#allocation5], 56
    %2853 = vst [vmem:[%s2852] sm:$0xff] %v2851
    %v2854 = vld [vmem:[#allocation5] sm:$0xff]
    %v2855 = vld [vmem:[#allocation5 + $0x8] sm:$0xff]
    %v2856 = vld [vmem:[#allocation5 + $0x10] sm:$0xff]
    %v2857 = vld [vmem:[#allocation5 + $0x18] sm:$0xff]
    %v2858 = vld [vmem:[#allocation5 + $0x20] sm:$0xff]
    %v2859 = vld [vmem:[#allocation5 + $0x28] sm:$0xff]
    %v2860 = vld [vmem:[#allocation5 + $0x30] sm:$0xff]
    %v2861 = vld [vmem:[#allocation5 + $0x38] sm:$0xff]
    %v2862 = vld [vmem:[#allocation14] sm:$0xff]
    %v2863 = vld [vmem:[#allocation14 + $0x8] sm:$0xff]
    %v2864 = vld [vmem:[#allocation14 + $0x10] sm:$0xff]
    %v2865 = vld [vmem:[#allocation14 + $0x18] sm:$0xff]
    %v2866 = vld [vmem:[#allocation14 + $0x20] sm:$0xff]
    %v2867 = vld [vmem:[#allocation14 + $0x28] sm:$0xff]
    %v2868 = vld [vmem:[#allocation14 + $0x30] sm:$0xff]
    %v2869 = vld [vmem:[#allocation14 + $0x38] sm:$0xff]
    %v2870 = vld [vmem:[#allocation14 + $0x40] sm:$0xff]
    %v2871 = vld [vmem:[#allocation14 + $0x48] sm:$0xff]
    %v2872 = vld [vmem:[#allocation14 + $0x50] sm:$0xff]
    %v2873 = vld [vmem:[#allocation14 + $0x58] sm:$0xff]
    %v2874 = vld [vmem:[#allocation14 + $0x60] sm:$0xff]
    %v2875 = vld [vmem:[#allocation14 + $0x68] sm:$0xff]
    %v2876 = vld [vmem:[#allocation14 + $0x70] sm:$0xff]
    %v2877 = vld [vmem:[#allocation14 + $0x78] sm:$0xff]
    %v2878 = vld [vmem:[%s10] sm:$0x1]
    %v2880 = vlaneseq
    %v2881 = vshrl.u32 %v2880, 7
    %v2882 = vsub.s32 0, %v2881
    %v2883 = vrot.slane %v2878, %v2882
    %2885 = vmatprep.subr.mxu0 0.0
    %2886 = vmatpush1.msra.mxu0 %v2862
    %2887 = vmatprep.subr.mxu0 0.0
    %2888 = vmatpush1.msra.mxu0 %v2863
    %2889 = vmatprep.subr.mxu0 0.0
    %2890 = vmatpush1.msra.mxu0 %v2864
    %2891 = vmatprep.subr.mxu0 0.0
    %2892 = vmatpush1.msra.mxu0 %v2865
    %2893 = vmatprep.subr.mxu0 0.0
    %2894 = vmatpush1.msra.mxu0 %v2866
    %2895 = vmatprep.subr.mxu0 0.0
    %2896 = vmatpush1.msra.mxu0 %v2867
    %2897 = vmatprep.subr.mxu0 0.0
    %2898 = vmatpush1.msra.mxu0 %v2868
    %2899 = vmatprep.subr.mxu0 0.0
    %2900 = vmatpush1.msra.mxu0 %v2869
    %2901 = vmatprep.subr.mxu0 0.0
    %2902 = vmatpush1.msra.mxu0 %v2870
    %2903 = vmatprep.subr.mxu0 0.0
    %2904 = vmatpush1.msra.mxu0 %v2871
    %2905 = vmatprep.subr.mxu0 0.0
    %2906 = vmatpush1.msra.mxu0 %v2872
    %2907 = vmatprep.subr.mxu0 0.0
    %2908 = vmatpush1.msra.mxu0 %v2873
    %2909 = vmatprep.subr.mxu0 0.0
    %2910 = vmatpush1.msra.mxu0 %v2874
    %2911 = vmatprep.subr.mxu0 0.0
    %2912 = vmatpush1.msra.mxu0 %v2875
    %2913 = vmatprep.subr.mxu0 0.0
    %2914 = vmatpush1.msra.mxu0 %v2876
    %2915 = vmatprep.subr.mxu0 0.0
    %2916 = vmatpush1.msra.mxu0 %v2877
    %2917 = vmatprep.subr.mxu0 0.0
    %2918 = vmatpush1.msra.mxu0 0.0
    %2919 = vmatprep.subr.mxu0 0.0
    %2920 = vmatpush1.msra.mxu0 0.0
    %2921 = vmatprep.subr.mxu0 0.0
    %2922 = vmatpush1.msra.mxu0 0.0
    %2923 = vmatprep.subr.mxu0 0.0
    %2924 = vmatpush1.msra.mxu0 0.0
    %2925 = vmatprep.subr.mxu0 0.0
    %2926 = vmatpush1.msra.mxu0 0.0
    %2927 = vmatprep.subr.mxu0 0.0
    %2928 = vmatpush1.msra.mxu0 0.0
    %2929 = vmatprep.subr.mxu0 0.0
    %2930 = vmatpush1.msra.mxu0 0.0
    %2931 = vmatprep.subr.mxu0 0.0
    %2932 = vmatpush1.msra.mxu0 0.0
    %2933 = vmatprep.subr.mxu0 0.0
    %2934 = vmatpush1.msra.mxu0 0.0
    %2935 = vmatprep.subr.mxu0 0.0
    %2936 = vmatpush1.msra.mxu0 0.0
    %2937 = vmatprep.subr.mxu0 0.0
    %2938 = vmatpush1.msra.mxu0 0.0
    %2939 = vmatprep.subr.mxu0 0.0
    %2940 = vmatpush1.msra.mxu0 0.0
    %2941 = vmatprep.subr.mxu0 0.0
    %2942 = vmatpush1.msra.mxu0 0.0
    %2943 = vmatprep.subr.mxu0 0.0
    %2944 = vmatpush1.msra.mxu0 0.0
    %2945 = vmatprep.subr.mxu0 0.0
    %2946 = vmatpush1.msra.mxu0 0.0
    %2947 = vmatprep.subr.mxu0 0.0
    %2948 = vmatpush1.msra.mxu0 0.0
    %2949 = vmatprep.mubr.f32.mxu0 0.0
    %2950 = vmatmul.mubr.f32.gmra.mrb[0].mxu0 %v2854
    %v2951 = vpop.f32.mrb[0].mxu0
    %v2952 = vadd.f32 %v2883, %v2951
    %v2953 = vpop.f32.mrb[0].mxu0
    %2954 = vmatprep.mubr.f32.mxu0 0.0
    %2955 = vmatmul.mubr.f32.gmra.mrb[0].mxu0 %v2855
    %v2956 = vpop.f32.mrb[0].mxu0
    %v2957 = vadd.f32 %v2883, %v2956
    %v2958 = vpop.f32.mrb[0].mxu0
    %2959 = vmatprep.mubr.f32.mxu0 0.0
    %2960 = vmatmul.mubr.f32.gmra.mrb[0].mxu0 %v2856
    %v2961 = vpop.f32.mrb[0].mxu0
    %v2962 = vadd.f32 %v2883, %v2961
    %v2963 = vpop.f32.mrb[0].mxu0
    %2964 = vmatprep.mubr.f32.mxu0 0.0
    %2965 = vmatmul.mubr.f32.gmra.mrb[0].mxu0 %v2857
    %v2966 = vpop.f32.mrb[0].mxu0
    %v2967 = vadd.f32 %v2883, %v2966
    %v2968 = vpop.f32.mrb[0].mxu0
    %2969 = vmatprep.mubr.f32.mxu0 0.0
    %2970 = vmatmul.mubr.f32.gmra.mrb[0].mxu0 %v2858
    %v2971 = vpop.f32.mrb[0].mxu0
    %v2972 = vadd.f32 %v2883, %v2971
    %v2973 = vpop.f32.mrb[0].mxu0
    %2974 = vmatprep.mubr.f32.mxu0 0.0
    %2975 = vmatmul.mubr.f32.gmra.mrb[0].mxu0 %v2859
    %v2976 = vpop.f32.mrb[0].mxu0
    %v2977 = vadd.f32 %v2883, %v2976
    %v2978 = vpop.f32.mrb[0].mxu0
    %2979 = vmatprep.mubr.f32.mxu0 0.0
    %2980 = vmatmul.mubr.f32.gmra.mrb[0].mxu0 %v2860
    %v2981 = vpop.f32.mrb[0].mxu0
    %v2982 = vadd.f32 %v2883, %v2981
    %v2983 = vpop.f32.mrb[0].mxu0
    %2984 = vmatprep.mubr.f32.mxu0 0.0
    %2985 = vmatmul.mubr.f32.gmra.mrb[0].mxu0 %v2861
    %v2986 = vpop.f32.mrb[0].mxu0
    %v2987 = vadd.f32 %v2883, %v2986
    %v2988 = vpop.f32.mrb[0].mxu0
    %2989 = vdwg.mxu0
    %2990 = vst [vmem:[%s11] sm:$0xff] %v2952
    %2991 = vst [vmem:[%s11 + $0x8] sm:$0xff] %v2957
    %2992 = vst [vmem:[%s11 + $0x10] sm:$0xff] %v2962
    %2993 = vst [vmem:[%s11 + $0x18] sm:$0xff] %v2967
    %2994 = vst [vmem:[%s11 + $0x20] sm:$0xff] %v2972
    %2995 = vst [vmem:[%s11 + $0x28] sm:$0xff] %v2977
    %2996 = vst [vmem:[%s11 + $0x30] sm:$0xff] %v2982
    %2997 = vst [vmem:[%s11 + $0x38] sm:$0xff] %v2987
    // Predicated region
    $region70: #{gru_model_forward.1} parent=1 // pred_check
      _
    $region71: #{gru_model_forward.1} parent=1 // pred_check_branch
      %2999 = sbr.rel (0) target = $region73
    $region72: #{gru_model_forward.1} parent=1 // pred_region
      _
    $region73: #{gru_model_forward.1} parent=1 // pred_fallthru
      _
    // Predicated region
    $region74: #{gru_model_forward.1} parent=1 // pred_check
      _
    $region75: #{gru_model_forward.1} parent=1 // pred_check_branch
      %3001 = sbr.rel (0) target = $region77
    $region76: #{gru_model_forward.1} parent=1 // pred_region
      _
    $region77: #{gru_model_forward.1} parent=1 // pred_fallthru
      _
    %3002 = vsyncpa [#allocation7], 1
    %3003 = vsyncpa [#allocation9], 1
    %3004 = vsyncpa [#allocation12], 1
    %3005 = vsyncpa [#allocation15], 1

</llo_original>
